<compile_context>
chip_gen: v6e
topology: v6e:2x2x1
jax: 0.10.0
libtpu: 0.0.40
codegen_flags: <defaults>
</compile_context>

<pallas_src>
import math
from functools import partial

import jax
import jax.numpy as jnp
from jax.experimental import pallas as pl
from jax.experimental.pallas import tpu as pltpu


# ---------------------------------------------------------------------------
# Static model configuration (small, lane-aligned shapes)
# ---------------------------------------------------------------------------
VOCAB_SIZE = 128     # multiple of 128 -> lane-dense LM head
D_MODEL = 128        # multiple of 128 -> lane-dense hidden dim
NUM_HEAD = 4
NUM_LAYERS = 2
D_INTERNAL = 256
CHUNK_SIZE = 16      # num_positions / max sequence length
SEQ_LEN = 16
LN_EPS = 1e-5

_VMEM = pl.BlockSpec(memory_space=pltpu.MemorySpace.VMEM)


# ---------------------------------------------------------------------------
# Kernels (each runs as one full-array VMEM block; no grid)
# ---------------------------------------------------------------------------
def _embed_scale_pos_kernel(ids_ref, tok_ref, pos_ref, o_ref, *, scale):
    # ids_ref: [S, 1] int32, tok_ref: [V, D], pos_ref: [P, D], o_ref: [S, D]
    ids = ids_ref[...]                                         # [S, 1]
    s = ids.shape[0]
    v = tok_ref.shape[0]
    col = jax.lax.broadcasted_iota(jnp.int32, (s, v), 1)       # [S, V]
    onehot = (col == ids).astype(tok_ref.dtype)                # gather-as-matmul
    emb = jnp.dot(onehot, tok_ref[...], preferred_element_type=jnp.float32)
    o_ref[...] = emb * scale + pos_ref[0:s, :]                 # + positional enc


def _layer_norm(y, g, b, eps):
    mu = jnp.mean(y, axis=-1, keepdims=True)
    var = jnp.mean(jnp.square(y - mu), axis=-1, keepdims=True)
    return (y - mu) * jax.lax.rsqrt(var + eps) * g + b


def _attn_block_kernel(x_ref, wqkv_ref, bqkv_ref, wo_ref, bo_ref, mask_ref,
                       g_ref, b_ref, o_ref, *, num_heads, eps):
    # Post-norm self-attention block: o = LN(x + MHA(x; mask))
    x = x_ref[...]                                             # [S, D]
    s, d = x.shape
    hd = d // num_heads
    inv_sqrt_hd = 1.0 / math.sqrt(hd)

    qkv = jnp.dot(x, wqkv_ref[...], preferred_element_type=jnp.float32) + bqkv_ref[...]
    q = qkv[:, 0:d]
    k = qkv[:, d:2 * d]
    v = qkv[:, 2 * d:3 * d]
    mask = mask_ref[...]                                       # [S, S] additive

    attn_out = jnp.zeros((s, d), jnp.float32)
    for h in range(num_heads):                                 # static loop, tiny H
        lo, hi = h * hd, (h + 1) * hd
        qh, kh, vh = q[:, lo:hi], k[:, lo:hi], v[:, lo:hi]
        # q @ k^T without an explicit transpose
        scores = jax.lax.dot_general(
            qh, kh, (((1,), (1,)), ((), ())),
            preferred_element_type=jnp.float32) * inv_sqrt_hd + mask
        scores = scores - jnp.max(scores, axis=-1, keepdims=True)
        p = jnp.exp(scores)
        p = p / jnp.sum(p, axis=-1, keepdims=True)
        oh = jnp.dot(p, vh, preferred_element_type=jnp.float32)        # [S, hd]
        # apply the matching slice of the output projection and accumulate
        attn_out = attn_out + jnp.dot(oh, wo_ref[lo:hi, :],
                                      preferred_element_type=jnp.float32)
    attn_out = attn_out + bo_ref[...]

    o_ref[...] = _layer_norm(x + attn_out, g_ref[...], b_ref[...], eps)


def _ffn_block_kernel(x_ref, w1_ref, b1_ref, w2_ref, b2_ref,
                      g_ref, b_ref, o_ref, *, eps):
    # Post-norm FFN block: o = LN(x + W2 @ relu(W1 @ x))
    x = x_ref[...]                                             # [S, D]
    h = jnp.dot(x, w1_ref[...], preferred_element_type=jnp.float32) + b1_ref[...]
    h = jnp.maximum(h, 0.0)
    f = jnp.dot(h, w2_ref[...], preferred_element_type=jnp.float32) + b2_ref[...]
    o_ref[...] = _layer_norm(x + f, g_ref[...], b_ref[...], eps)


def _lm_head_kernel(x_ref, w_ref, b_ref, o_ref):
    # logits -> log_softmax over the (lane-dense) vocab dim
    x = x_ref[...]
    logits = jnp.dot(x, w_ref[...], preferred_element_type=jnp.float32) + b_ref[...]
    z = logits - jnp.max(logits, axis=-1, keepdims=True)
    lse = jnp.log(jnp.sum(jnp.exp(z), axis=-1, keepdims=True))
    o_ref[...] = z - lse


# ---------------------------------------------------------------------------
# Forward pass (composition of single-block pallas_calls)
# ---------------------------------------------------------------------------
def transformer_lm_forward(params, input_ids, src_mask):
    s = input_ids.shape[0]
    d = params["tok_emb"].shape[1]
    v = params["out_w"].shape[1]
    ids2d = input_ids.reshape(s, 1).astype(jnp.int32)

    x = pl.pallas_call(
        partial(_embed_scale_pos_kernel, scale=math.sqrt(d)),
        out_shape=jax.ShapeDtypeStruct((s, d), jnp.float32),
        in_specs=[_VMEM, _VMEM, _VMEM],
        out_specs=_VMEM,
    )(ids2d, params["tok_emb"], params["pos_emb"])

    for layer in params["layers"]:
        x = pl.pallas_call(
            partial(_attn_block_kernel, num_heads=NUM_HEAD, eps=LN_EPS),
            out_shape=jax.ShapeDtypeStruct((s, d), jnp.float32),
            in_specs=[_VMEM] * 8,
            out_specs=_VMEM,
            input_output_aliases={0: 0},          # x is dead after this block
        )(x, layer["wqkv"], layer["bqkv"], layer["wo"], layer["bo"],
          src_mask, layer["ln1_g"], layer["ln1_b"])

        x = pl.pallas_call(
            partial(_ffn_block_kernel, eps=LN_EPS),
            out_shape=jax.ShapeDtypeStruct((s, d), jnp.float32),
            in_specs=[_VMEM] * 7,
            out_specs=_VMEM,
            input_output_aliases={0: 0},
        )(x, layer["w1"], layer["b1"], layer["w2"], layer["b2"],
          layer["ln2_g"], layer["ln2_b"])

    return pl.pallas_call(
        _lm_head_kernel,
        out_shape=jax.ShapeDtypeStruct((s, v), jnp.float32),
        in_specs=[_VMEM] * 3,
        out_specs=_VMEM,
    )(x, params["out_w"], params["out_b"])


# ---------------------------------------------------------------------------
# Deterministic parameter init (weights stored in "x @ W" layout)
# ---------------------------------------------------------------------------
def init_params(key):
    keys = jax.random.split(key, 3 + 4 * NUM_LAYERS)
    wscale = 0.05

    params = {
        "tok_emb": jax.random.normal(keys[0], (VOCAB_SIZE, D_MODEL), jnp.float32),
        "pos_emb": jax.random.normal(keys[1], (CHUNK_SIZE, D_MODEL), jnp.float32),
        "out_w": wscale * jax.random.normal(keys[2], (D_MODEL, VOCAB_SIZE), jnp.float32),
        "out_b": jnp.zeros((1, VOCAB_SIZE), jnp.float32),
        "layers": [],
    }
    for l in range(NUM_LAYERS):
        k0, k1, k2, k3 = keys[3 + 4 * l: 3 + 4 * l + 4]
        params["layers"].append({
            "wqkv": wscale * jax.random.normal(k0, (D_MODEL, 3 * D_MODEL), jnp.float32),
            "bqkv": jnp.zeros((1, 3 * D_MODEL), jnp.float32),
            "wo": wscale * jax.random.normal(k1, (D_MODEL, D_MODEL), jnp.float32),
            "bo": jnp.zeros((1, D_MODEL), jnp.float32),
            "w1": wscale * jax.random.normal(k2, (D_MODEL, D_INTERNAL), jnp.float32),
            "b1": jnp.zeros((1, D_INTERNAL), jnp.float32),
            "w2": wscale * jax.random.normal(k3, (D_INTERNAL, D_MODEL), jnp.float32),
            "b2": jnp.zeros((1, D_MODEL), jnp.float32),
            "ln1_g": jnp.ones((1, D_MODEL), jnp.float32),
            "ln1_b": jnp.zeros((1, D_MODEL), jnp.float32),
            "ln2_g": jnp.ones((1, D_MODEL), jnp.float32),
            "ln2_b": jnp.zeros((1, D_MODEL), jnp.float32),
        })
    return params


# ---------------------------------------------------------------------------
# Plain-JAX reference (same math as the PyTorch module in eval mode)
# ---------------------------------------------------------------------------
def _ln_ref(y, g, b, eps=LN_EPS):
    mu = jnp.mean(y, axis=-1, keepdims=True)
    var = jnp.mean(jnp.square(y - mu), axis=-1, keepdims=True)
    return (y - mu) / jnp.sqrt(var + eps) * g + b


def reference_forward(params, input_ids, src_mask):
    d = params["tok_emb"].shape[1]
    s = input_ids.shape[0]
    hd = d // NUM_HEAD
    x = params["tok_emb"][input_ids] * math.sqrt(d) + params["pos_emb"][:s]
    for layer in params["layers"]:
        qkv = x @ layer["wqkv"] + layer["bqkv"]
        q, k, v = qkv[:, :d], qkv[:, d:2 * d], qkv[:, 2 * d:]
        heads = []
        for h in range(NUM_HEAD):
            lo, hi = h * hd, (h + 1) * hd
            scores = q[:, lo:hi] @ k[:, lo:hi].T / math.sqrt(hd) + src_mask
            heads.append(jax.nn.softmax(scores, axis=-1) @ v[:, lo:hi])
        a = jnp.concatenate(heads, axis=-1) @ layer["wo"] + layer["bo"]
        x = _ln_ref(x + a, layer["ln1_g"], layer["ln1_b"])
        f = jnp.maximum(x @ layer["w1"] + layer["b1"], 0.0) @ layer["w2"] + layer["b2"]
        x = _ln_ref(x + f, layer["ln2_g"], layer["ln2_b"])
    logits = x @ params["out_w"] + params["out_b"]
    return jax.nn.log_softmax(logits, axis=-1)


if __name__ == "__main__":
    key = jax.random.PRNGKey(0)
    k_param, k_ids = jax.random.split(key)
    params = init_params(k_param)

    input_ids = jax.random.randint(k_ids, (SEQ_LEN,), 0, VOCAB_SIZE, dtype=jnp.int32)

    # causal additive attention mask (matches a torch -inf float src_mask)
    row = jnp.arange(SEQ_LEN)[:, None]
    col = jnp.arange(SEQ_LEN)[None, :]
    src_mask = jnp.where(row >= col, 0.0, -1e9).astype(jnp.float32)

    fwd = jax.jit(transformer_lm_forward)
    out = jax.block_until_ready(fwd(params, input_ids, src_mask))

    ref = reference_forward(params, input_ids, src_mask)
    assert out.shape == (SEQ_LEN, VOCAB_SIZE)
    max_diff = float(jnp.max(jnp.abs(out - ref)))
    # typical diff ~1e-5; generous tolerance covers f32-matmul pass differences
    assert max_diff < 2e-2, f"mismatch vs reference, max abs diff = {max_diff}"
    assert bool(jnp.all(jnp.isfinite(out)))

    print("KERNEL_OK")
</pallas_src>

<mosaic_0001>
module attributes {stable_mosaic.version = 11 : i64} {
  func.func @_ffn_block_kernel(%arg0: memref<16x128xf32, #tpu.memory_space<vmem>>, %arg1: memref<128x256xf32, #tpu.memory_space<vmem>>, %arg2: memref<1x256xf32, #tpu.memory_space<vmem>>, %arg3: memref<256x128xf32, #tpu.memory_space<vmem>>, %arg4: memref<1x128xf32, #tpu.memory_space<vmem>>, %arg5: memref<1x128xf32, #tpu.memory_space<vmem>>, %arg6: memref<1x128xf32, #tpu.memory_space<vmem>>, %arg7: memref<16x128xf32, #tpu.memory_space<vmem>>) attributes {dimension_semantics = [], scalar_prefetch = 0 : i64, scratch_operands = 0 : i64, tpu.core_type = #tpu.core_type<tc>} {
    %c0 = arith.constant 0 : index
    %c0_0 = arith.constant 0 : index
    %0 = vector.load %arg0[%c0, %c0_0] : memref<16x128xf32, #tpu.memory_space<vmem>>, vector<16x128xf32>
    %c0_1 = arith.constant 0 : index
    %c0_2 = arith.constant 0 : index
    %1 = vector.load %arg1[%c0_1, %c0_2] : memref<128x256xf32, #tpu.memory_space<vmem>>, vector<128x256xf32>
    %cst = arith.constant dense<0.000000e+00> : vector<16x256xf32>
    %2 = tpu.matmul %0, %1, %cst {dimension_numbers = #tpu.dot_dimension_numbers<[1], [0], [0], [1], [0, 0, 1, 1], [], []>} : vector<16x128xf32>, vector<128x256xf32>, vector<16x256xf32> -> vector<16x256xf32>
    %c0_3 = arith.constant 0 : index
    %c0_4 = arith.constant 0 : index
    %3 = vector.load %arg2[%c0_3, %c0_4] : memref<1x256xf32, #tpu.memory_space<vmem>>, vector<1x256xf32>
    %4 = vector.broadcast %3 : vector<1x256xf32> to vector<16x256xf32>
    %5 = arith.addf %2, %4 : vector<16x256xf32>
    %cst_5 = arith.constant 0.000000e+00 : f32
    %6 = vector.broadcast %cst_5 : f32 to vector<16x256xf32>
    %7 = arith.maximumf %5, %6 : vector<16x256xf32>
    %c0_6 = arith.constant 0 : index
    %c0_7 = arith.constant 0 : index
    %8 = vector.load %arg3[%c0_6, %c0_7] : memref<256x128xf32, #tpu.memory_space<vmem>>, vector<256x128xf32>
    %cst_8 = arith.constant dense<0.000000e+00> : vector<16x128xf32>
    %9 = tpu.matmul %7, %8, %cst_8 {dimension_numbers = #tpu.dot_dimension_numbers<[1], [0], [0], [1], [0, 0, 1, 1], [], []>} : vector<16x256xf32>, vector<256x128xf32>, vector<16x128xf32> -> vector<16x128xf32>
    %c0_9 = arith.constant 0 : index
    %c0_10 = arith.constant 0 : index
    %10 = vector.load %arg4[%c0_9, %c0_10] : memref<1x128xf32, #tpu.memory_space<vmem>>, vector<1x128xf32>
    %11 = vector.broadcast %10 : vector<1x128xf32> to vector<16x128xf32>
    %12 = arith.addf %9, %11 : vector<16x128xf32>
    %13 = arith.addf %0, %12 : vector<16x128xf32>
    %c0_11 = arith.constant 0 : index
    %c0_12 = arith.constant 0 : index
    %14 = vector.load %arg5[%c0_11, %c0_12] : memref<1x128xf32, #tpu.memory_space<vmem>>, vector<1x128xf32>
    %c0_13 = arith.constant 0 : index
    %c0_14 = arith.constant 0 : index
    %15 = vector.load %arg6[%c0_13, %c0_14] : memref<1x128xf32, #tpu.memory_space<vmem>>, vector<1x128xf32>
    %cst_15 = arith.constant dense<0.000000e+00> : vector<16xf32>
    %16 = vector.multi_reduction <add>, %13, %cst_15 [1] : vector<16x128xf32> to vector<16xf32>
    %17 = vector.shape_cast %16 : vector<16xf32> to vector<16x1xf32>
    %cst_16 = arith.constant 1.280000e+02 : f32
    %18 = vector.broadcast %cst_16 : f32 to vector<16x1xf32>
    %19 = arith.divf %17, %18 : vector<16x1xf32>
    %20 = vector.broadcast %19 : vector<16x1xf32> to vector<16x128xf32>
    %21 = arith.subf %13, %20 : vector<16x128xf32>
    %22 = arith.mulf %21, %21 : vector<16x128xf32>
    %cst_17 = arith.constant dense<0.000000e+00> : vector<16xf32>
    %23 = vector.multi_reduction <add>, %22, %cst_17 [1] : vector<16x128xf32> to vector<16xf32>
    %24 = vector.shape_cast %23 : vector<16xf32> to vector<16x1xf32>
    %cst_18 = arith.constant 1.280000e+02 : f32
    %25 = vector.broadcast %cst_18 : f32 to vector<16x1xf32>
    %26 = arith.divf %24, %25 : vector<16x1xf32>
    %27 = vector.broadcast %19 : vector<16x1xf32> to vector<16x128xf32>
    %28 = arith.subf %13, %27 : vector<16x128xf32>
    %cst_19 = arith.constant 9.99999974E-6 : f32
    %29 = vector.broadcast %cst_19 : f32 to vector<16x1xf32>
    %30 = arith.addf %26, %29 : vector<16x1xf32>
    %31 = math.rsqrt %30 : vector<16x1xf32>
    %32 = vector.broadcast %31 : vector<16x1xf32> to vector<16x128xf32>
    %33 = arith.mulf %28, %32 : vector<16x128xf32>
    %34 = vector.broadcast %14 : vector<1x128xf32> to vector<16x128xf32>
    %35 = arith.mulf %33, %34 : vector<16x128xf32>
    %36 = vector.broadcast %15 : vector<1x128xf32> to vector<16x128xf32>
    %37 = arith.addf %35, %36 : vector<16x128xf32>
    %c0_20 = arith.constant 0 : index
    %c0_21 = arith.constant 0 : index
    %38 = vector.load %arg7[%c0_20, %c0_21] : memref<16x128xf32, #tpu.memory_space<vmem>>, vector<16x128xf32>
    tpu.vector_store %arg7[%c0_20, %c0_21], %37 {strides = array<i32>} : memref<16x128xf32, #tpu.memory_space<vmem>>, vector<16x128xf32>,
    return
  }
}

module attributes {stable_mosaic.version = 11 : i64} {
  func.func @_embed_scale_pos_kernel(%arg0: memref<16x1xi32, #tpu.memory_space<vmem>>, %arg1: memref<128x128xf32, #tpu.memory_space<vmem>>, %arg2: memref<16x128xf32, #tpu.memory_space<vmem>>, %arg3: memref<16x128xf32, #tpu.memory_space<vmem>>) attributes {dimension_semantics = [], scalar_prefetch = 0 : i64, scratch_operands = 0 : i64, tpu.core_type = #tpu.core_type<tc>} {
    %c0 = arith.constant 0 : index
    %c0_0 = arith.constant 0 : index
    %0 = vector.load %arg0[%c0, %c0_0] : memref<16x1xi32, #tpu.memory_space<vmem>>, vector<16x1xi32>
    %1 = tpu.iota {dimensions = array<i32: 1>} : vector<16x128xi32>
    %2 = vector.broadcast %0 : vector<16x1xi32> to vector<16x128xi32>
    %3 = arith.cmpi eq, %1, %2 : vector<16x128xi32>
    %4 = arith.extui %3 : vector<16x128xi1> to vector<16x128xi32>
    %5 = arith.sitofp %4 : vector<16x128xi32> to vector<16x128xf32>
    %c0_1 = arith.constant 0 : index
    %c0_2 = arith.constant 0 : index
    %6 = vector.load %arg1[%c0_1, %c0_2] : memref<128x128xf32, #tpu.memory_space<vmem>>, vector<128x128xf32>
    %cst = arith.constant dense<0.000000e+00> : vector<16x128xf32>
    %7 = tpu.matmul %5, %6, %cst {dimension_numbers = #tpu.dot_dimension_numbers<[1], [0], [0], [1], [0, 0, 1, 1], [], []>} : vector<16x128xf32>, vector<128x128xf32>, vector<16x128xf32> -> vector<16x128xf32>
    %cst_3 = arith.constant 11.3137083 : f32
    %8 = vector.broadcast %cst_3 : f32 to vector<16x128xf32>
    %9 = arith.mulf %7, %8 : vector<16x128xf32>
    %c0_4 = arith.constant 0 : index
    %c0_5 = arith.constant 0 : index
    %10 = vector.load %arg2[%c0_4, %c0_5] : memref<16x128xf32, #tpu.memory_space<vmem>>, vector<16x128xf32>
    %11 = arith.addf %9, %10 : vector<16x128xf32>
    %c0_6 = arith.constant 0 : index
    %c0_7 = arith.constant 0 : index
    %12 = vector.load %arg3[%c0_6, %c0_7] : memref<16x128xf32, #tpu.memory_space<vmem>>, vector<16x128xf32>
    tpu.vector_store %arg3[%c0_6, %c0_7], %11 {strides = array<i32>} : memref<16x128xf32, #tpu.memory_space<vmem>>, vector<16x128xf32>,
    return
  }
}

module attributes {stable_mosaic.version = 11 : i64} {
  func.func @_attn_block_kernel(%arg0: memref<16x128xf32, #tpu.memory_space<vmem>>, %arg1: memref<128x384xf32, #tpu.memory_space<vmem>>, %arg2: memref<1x384xf32, #tpu.memory_space<vmem>>, %arg3: memref<128x128xf32, #tpu.memory_space<vmem>>, %arg4: memref<1x128xf32, #tpu.memory_space<vmem>>, %arg5: memref<16x16xf32, #tpu.memory_space<vmem>>, %arg6: memref<1x128xf32, #tpu.memory_space<vmem>>, %arg7: memref<1x128xf32, #tpu.memory_space<vmem>>, %arg8: memref<16x128xf32, #tpu.memory_space<vmem>>) attributes {dimension_semantics = [], scalar_prefetch = 0 : i64, scratch_operands = 0 : i64, tpu.core_type = #tpu.core_type<tc>} {
    %c0 = arith.constant 0 : index
    %c0_0 = arith.constant 0 : index
    %0 = vector.load %arg0[%c0, %c0_0] : memref<16x128xf32, #tpu.memory_space<vmem>>, vector<16x128xf32>
    %c0_1 = arith.constant 0 : index
    %c0_2 = arith.constant 0 : index
    %1 = vector.load %arg1[%c0_1, %c0_2] : memref<128x384xf32, #tpu.memory_space<vmem>>, vector<128x384xf32>
    %cst = arith.constant dense<0.000000e+00> : vector<16x384xf32>
    %2 = tpu.matmul %0, %1, %cst {dimension_numbers = #tpu.dot_dimension_numbers<[1], [0], [0], [1], [0, 0, 1, 1], [], []>} : vector<16x128xf32>, vector<128x384xf32>, vector<16x384xf32> -> vector<16x384xf32>
    %c0_3 = arith.constant 0 : index
    %c0_4 = arith.constant 0 : index
    %3 = vector.load %arg2[%c0_3, %c0_4] : memref<1x384xf32, #tpu.memory_space<vmem>>, vector<1x384xf32>
    %4 = vector.broadcast %3 : vector<1x384xf32> to vector<16x384xf32>
    %5 = arith.addf %2, %4 : vector<16x384xf32>
    %6 = vector.extract_strided_slice %5 {offsets = [0, 0], sizes = [16, 128], strides = [1, 1]} : vector<16x384xf32> to vector<16x128xf32>
    %7 = vector.extract_strided_slice %5 {offsets = [0, 128], sizes = [16, 128], strides = [1, 1]} : vector<16x384xf32> to vector<16x128xf32>
    %8 = vector.extract_strided_slice %5 {offsets = [0, 256], sizes = [16, 128], strides = [1, 1]} : vector<16x384xf32> to vector<16x128xf32>
    %c0_5 = arith.constant 0 : index
    %c0_6 = arith.constant 0 : index
    %9 = vector.load %arg5[%c0_5, %c0_6] : memref<16x16xf32, #tpu.memory_space<vmem>>, vector<16x16xf32>
    %cst_7 = arith.constant 0.000000e+00 : f32
    %10 = vector.broadcast %cst_7 : f32 to vector<16x128xf32>
    %11 = vector.extract_strided_slice %6 {offsets = [0, 0], sizes = [16, 32], strides = [1, 1]} : vector<16x128xf32> to vector<16x32xf32>
    %12 = vector.extract_strided_slice %7 {offsets = [0, 0], sizes = [16, 32], strides = [1, 1]} : vector<16x128xf32> to vector<16x32xf32>
    %13 = vector.extract_strided_slice %8 {offsets = [0, 0], sizes = [16, 32], strides = [1, 1]} : vector<16x128xf32> to vector<16x32xf32>
    %cst_8 = arith.constant dense<0.000000e+00> : vector<16x16xf32>
    %14 = tpu.matmul %11, %12, %cst_8 {dimension_numbers = #tpu.dot_dimension_numbers<[1], [1], [0], [0], [0, 0, 1, 0], [], []>} : vector<16x32xf32>, vector<16x32xf32>, vector<16x16xf32> -> vector<16x16xf32>
    %cst_9 = arith.constant 0.176776692 : f32
    %15 = vector.broadcast %cst_9 : f32 to vector<16x16xf32>
    %16 = arith.mulf %14, %15 : vector<16x16xf32>
    %17 = arith.addf %16, %9 : vector<16x16xf32>
    %cst_10 = arith.constant dense<0xFF800000> : vector<16xf32>
    %18 = vector.multi_reduction <maximumf>, %17, %cst_10 [1] : vector<16x16xf32> to vector<16xf32>
    %19 = vector.shape_cast %18 : vector<16xf32> to vector<16x1xf32>
    %20 = vector.broadcast %19 : vector<16x1xf32> to vector<16x16xf32>
    %21 = arith.subf %17, %20 : vector<16x16xf32>
    %22 = math.exp %21 : vector<16x16xf32>
    %cst_11 = arith.constant dense<0.000000e+00> : vector<16xf32>
    %23 = vector.multi_reduction <add>, %22, %cst_11 [1] : vector<16x16xf32> to vector<16xf32>
    %24 = vector.shape_cast %23 : vector<16xf32> to vector<16x1xf32>
    %25 = vector.broadcast %24 : vector<16x1xf32> to vector<16x16xf32>
    %26 = arith.divf %22, %25 : vector<16x16xf32>
    %cst_12 = arith.constant dense<0.000000e+00> : vector<16x32xf32>
    %27 = tpu.matmul %26, %13, %cst_12 {dimension_numbers = #tpu.dot_dimension_numbers<[1], [0], [0], [1], [0, 0, 1, 1], [], []>} : vector<16x16xf32>, vector<16x32xf32>, vector<16x32xf32> -> vector<16x32xf32>
    %c0_13 = arith.constant 0 : index
    %c0_14 = arith.constant 0 : index
    %28 = vector.load %arg3[%c0_13, %c0_14] : memref<128x128xf32, #tpu.memory_space<vmem>>, vector<32x128xf32>
    %cst_15 = arith.constant dense<0.000000e+00> : vector<16x128xf32>
    %29 = tpu.matmul %27, %28, %cst_15 {dimension_numbers = #tpu.dot_dimension_numbers<[1], [0], [0], [1], [0, 0, 1, 1], [], []>} : vector<16x32xf32>, vector<32x128xf32>, vector<16x128xf32> -> vector<16x128xf32>
    %30 = arith.addf %10, %29 : vector<16x128xf32>
    %31 = vector.extract_strided_slice %6 {offsets = [0, 32], sizes = [16, 32], strides = [1, 1]} : vector<16x128xf32> to vector<16x32xf32>
    %32 = vector.extract_strided_slice %7 {offsets = [0, 32], sizes = [16, 32], strides = [1, 1]} : vector<16x128xf32> to vector<16x32xf32>
    %33 = vector.extract_strided_slice %8 {offsets = [0, 32], sizes = [16, 32], strides = [1, 1]} : vector<16x128xf32> to vector<16x32xf32>
    %cst_16 = arith.constant dense<0.000000e+00> : vector<16x16xf32>
    %34 = tpu.matmul %31, %32, %cst_16 {dimension_numbers = #tpu.dot_dimension_numbers<[1], [1], [0], [0], [0, 0, 1, 0], [], []>} : vector<16x32xf32>, vector<16x32xf32>, vector<16x16xf32> -> vector<16x16xf32>
    %cst_17 = arith.constant 0.176776692 : f32
    %35 = vector.broadcast %cst_17 : f32 to vector<16x16xf32>
    %36 = arith.mulf %34, %35 : vector<16x16xf32>
    %37 = arith.addf %36, %9 : vector<16x16xf32>
    %cst_18 = arith.constant dense<0xFF800000> : vector<16xf32>
    %38 = vector.multi_reduction <maximumf>, %37, %cst_18 [1] : vector<16x16xf32> to vector<16xf32>
    %39 = vector.shape_cast %38 : vector<16xf32> to vector<16x1xf32>
    %40 = vector.broadcast %39 : vector<16x1xf32> to vector<16x16xf32>
    %41 = arith.subf %37, %40 : vector<16x16xf32>
    %42 = math.exp %41 : vector<16x16xf32>
    %cst_19 = arith.constant dense<0.000000e+00> : vector<16xf32>
    %43 = vector.multi_reduction <add>, %42, %cst_19 [1] : vector<16x16xf32> to vector<16xf32>
    %44 = vector.shape_cast %43 : vector<16xf32> to vector<16x1xf32>
    %45 = vector.broadcast %44 : vector<16x1xf32> to vector<16x16xf32>
    %46 = arith.divf %42, %45 : vector<16x16xf32>
    %cst_20 = arith.constant dense<0.000000e+00> : vector<16x32xf32>
    %47 = tpu.matmul %46, %33, %cst_20 {dimension_numbers = #tpu.dot_dimension_numbers<[1], [0], [0], [1], [0, 0, 1, 1], [], []>} : vector<16x16xf32>, vector<16x32xf32>, vector<16x32xf32> -> vector<16x32xf32>
    %c32 = arith.constant 32 : index
    %c0_21 = arith.constant 0 : index
    %48 = vector.load %arg3[%c32, %c0_21] : memref<128x128xf32, #tpu.memory_space<vmem>>, vector<32x128xf32>
    %cst_22 = arith.constant dense<0.000000e+00> : vector<16x128xf32>
    %49 = tpu.matmul %47, %48, %cst_22 {dimension_numbers = #tpu.dot_dimension_numbers<[1], [0], [0], [1], [0, 0, 1, 1], [], []>} : vector<16x32xf32>, vector<32x128xf32>, vector<16x128xf32> -> vector<16x128xf32>
    %50 = arith.addf %30, %49 : vector<16x128xf32>
    %51 = vector.extract_strided_slice %6 {offsets = [0, 64], sizes = [16, 32], strides = [1, 1]} : vector<16x128xf32> to vector<16x32xf32>
    %52 = vector.extract_strided_slice %7 {offsets = [0, 64], sizes = [16, 32], strides = [1, 1]} : vector<16x128xf32> to vector<16x32xf32>
    %53 = vector.extract_strided_slice %8 {offsets = [0, 64], sizes = [16, 32], strides = [1, 1]} : vector<16x128xf32> to vector<16x32xf32>
    %cst_23 = arith.constant dense<0.000000e+00> : vector<16x16xf32>
    %54 = tpu.matmul %51, %52, %cst_23 {dimension_numbers = #tpu.dot_dimension_numbers<[1], [1], [0], [0], [0, 0, 1, 0], [], []>} : vector<16x32xf32>, vector<16x32xf32>, vector<16x16xf32> -> vector<16x16xf32>
    %cst_24 = arith.constant 0.176776692 : f32
    %55 = vector.broadcast %cst_24 : f32 to vector<16x16xf32>
    %56 = arith.mulf %54, %55 : vector<16x16xf32>
    %57 = arith.addf %56, %9 : vector<16x16xf32>
    %cst_25 = arith.constant dense<0xFF800000> : vector<16xf32>
    %58 = vector.multi_reduction <maximumf>, %57, %cst_25 [1] : vector<16x16xf32> to vector<16xf32>
    %59 = vector.shape_cast %58 : vector<16xf32> to vector<16x1xf32>
    %60 = vector.broadcast %59 : vector<16x1xf32> to vector<16x16xf32>
    %61 = arith.subf %57, %60 : vector<16x16xf32>
    %62 = math.exp %61 : vector<16x16xf32>
    %cst_26 = arith.constant dense<0.000000e+00> : vector<16xf32>
    %63 = vector.multi_reduction <add>, %62, %cst_26 [1] : vector<16x16xf32> to vector<16xf32>
    %64 = vector.shape_cast %63 : vector<16xf32> to vector<16x1xf32>
    %65 = vector.broadcast %64 : vector<16x1xf32> to vector<16x16xf32>
    %66 = arith.divf %62, %65 : vector<16x16xf32>
    %cst_27 = arith.constant dense<0.000000e+00> : vector<16x32xf32>
    %67 = tpu.matmul %66, %53, %cst_27 {dimension_numbers = #tpu.dot_dimension_numbers<[1], [0], [0], [1], [0, 0, 1, 1], [], []>} : vector<16x16xf32>, vector<16x32xf32>, vector<16x32xf32> -> vector<16x32xf32>
    %c64 = arith.constant 64 : index
    %c0_28 = arith.constant 0 : index
    %68 = vector.load %arg3[%c64, %c0_28] : memref<128x128xf32, #tpu.memory_space<vmem>>, vector<32x128xf32>
    %cst_29 = arith.constant dense<0.000000e+00> : vector<16x128xf32>
    %69 = tpu.matmul %67, %68, %cst_29 {dimension_numbers = #tpu.dot_dimension_numbers<[1], [0], [0], [1], [0, 0, 1, 1], [], []>} : vector<16x32xf32>, vector<32x128xf32>, vector<16x128xf32> -> vector<16x128xf32>
    %70 = arith.addf %50, %69 : vector<16x128xf32>
    %71 = vector.extract_strided_slice %6 {offsets = [0, 96], sizes = [16, 32], strides = [1, 1]} : vector<16x128xf32> to vector<16x32xf32>
    %72 = vector.extract_strided_slice %7 {offsets = [0, 96], sizes = [16, 32], strides = [1, 1]} : vector<16x128xf32> to vector<16x32xf32>
    %73 = vector.extract_strided_slice %8 {offsets = [0, 96], sizes = [16, 32], strides = [1, 1]} : vector<16x128xf32> to vector<16x32xf32>
    %cst_30 = arith.constant dense<0.000000e+00> : vector<16x16xf32>
    %74 = tpu.matmul %71, %72, %cst_30 {dimension_numbers = #tpu.dot_dimension_numbers<[1], [1], [0], [0], [0, 0, 1, 0], [], []>} : vector<16x32xf32>, vector<16x32xf32>, vector<16x16xf32> -> vector<16x16xf32>
    %cst_31 = arith.constant 0.176776692 : f32
    %75 = vector.broadcast %cst_31 : f32 to vector<16x16xf32>
    %76 = arith.mulf %74, %75 : vector<16x16xf32>
    %77 = arith.addf %76, %9 : vector<16x16xf32>
    %cst_32 = arith.constant dense<0xFF800000> : vector<16xf32>
    %78 = vector.multi_reduction <maximumf>, %77, %cst_32 [1] : vector<16x16xf32> to vector<16xf32>
    %79 = vector.shape_cast %78 : vector<16xf32> to vector<16x1xf32>
    %80 = vector.broadcast %79 : vector<16x1xf32> to vector<16x16xf32>
    %81 = arith.subf %77, %80 : vector<16x16xf32>
    %82 = math.exp %81 : vector<16x16xf32>
    %cst_33 = arith.constant dense<0.000000e+00> : vector<16xf32>
    %83 = vector.multi_reduction <add>, %82, %cst_33 [1] : vector<16x16xf32> to vector<16xf32>
    %84 = vector.shape_cast %83 : vector<16xf32> to vector<16x1xf32>
    %85 = vector.broadcast %84 : vector<16x1xf32> to vector<16x16xf32>
    %86 = arith.divf %82, %85 : vector<16x16xf32>
    %cst_34 = arith.constant dense<0.000000e+00> : vector<16x32xf32>
    %87 = tpu.matmul %86, %73, %cst_34 {dimension_numbers = #tpu.dot_dimension_numbers<[1], [0], [0], [1], [0, 0, 1, 1], [], []>} : vector<16x16xf32>, vector<16x32xf32>, vector<16x32xf32> -> vector<16x32xf32>
    %c96 = arith.constant 96 : index
    %c0_35 = arith.constant 0 : index
    %88 = vector.load %arg3[%c96, %c0_35] : memref<128x128xf32, #tpu.memory_space<vmem>>, vector<32x128xf32>
    %cst_36 = arith.constant dense<0.000000e+00> : vector<16x128xf32>
    %89 = tpu.matmul %87, %88, %cst_36 {dimension_numbers = #tpu.dot_dimension_numbers<[1], [0], [0], [1], [0, 0, 1, 1], [], []>} : vector<16x32xf32>, vector<32x128xf32>, vector<16x128xf32> -> vector<16x128xf32>
    %90 = arith.addf %70, %89 : vector<16x128xf32>
    %c0_37 = arith.constant 0 : index
    %c0_38 = arith.constant 0 : index
    %91 = vector.load %arg4[%c0_37, %c0_38] : memref<1x128xf32, #tpu.memory_space<vmem>>, vector<1x128xf32>
    %92 = vector.broadcast %91 : vector<1x128xf32> to vector<16x128xf32>
    %93 = arith.addf %90, %92 : vector<16x128xf32>
    %94 = arith.addf %0, %93 : vector<16x128xf32>
    %c0_39 = arith.constant 0 : index
    %c0_40 = arith.constant 0 : index
    %95 = vector.load %arg6[%c0_39, %c0_40] : memref<1x128xf32, #tpu.memory_space<vmem>>, vector<1x128xf32>
    %c0_41 = arith.constant 0 : index
    %c0_42 = arith.constant 0 : index
    %96 = vector.load %arg7[%c0_41, %c0_42] : memref<1x128xf32, #tpu.memory_space<vmem>>, vector<1x128xf32>
    %cst_43 = arith.constant dense<0.000000e+00> : vector<16xf32>
    %97 = vector.multi_reduction <add>, %94, %cst_43 [1] : vector<16x128xf32> to vector<16xf32>
    %98 = vector.shape_cast %97 : vector<16xf32> to vector<16x1xf32>
    %cst_44 = arith.constant 1.280000e+02 : f32
    %99 = vector.broadcast %cst_44 : f32 to vector<16x1xf32>
    %100 = arith.divf %98, %99 : vector<16x1xf32>
    %101 = vector.broadcast %100 : vector<16x1xf32> to vector<16x128xf32>
    %102 = arith.subf %94, %101 : vector<16x128xf32>
    %103 = arith.mulf %102, %102 : vector<16x128xf32>
    %cst_45 = arith.constant dense<0.000000e+00> : vector<16xf32>
    %104 = vector.multi_reduction <add>, %103, %cst_45 [1] : vector<16x128xf32> to vector<16xf32>
    %105 = vector.shape_cast %104 : vector<16xf32> to vector<16x1xf32>
    %cst_46 = arith.constant 1.280000e+02 : f32
    %106 = vector.broadcast %cst_46 : f32 to vector<16x1xf32>
    %107 = arith.divf %105, %106 : vector<16x1xf32>
    %108 = vector.broadcast %100 : vector<16x1xf32> to vector<16x128xf32>
    %109 = arith.subf %94, %108 : vector<16x128xf32>
    %cst_47 = arith.constant 9.99999974E-6 : f32
    %110 = vector.broadcast %cst_47 : f32 to vector<16x1xf32>
    %111 = arith.addf %107, %110 : vector<16x1xf32>
    %112 = math.rsqrt %111 : vector<16x1xf32>
    %113 = vector.broadcast %112 : vector<16x1xf32> to vector<16x128xf32>
    %114 = arith.mulf %109, %113 : vector<16x128xf32>
    %115 = vector.broadcast %95 : vector<1x128xf32> to vector<16x128xf32>
    %116 = arith.mulf %114, %115 : vector<16x128xf32>
    %117 = vector.broadcast %96 : vector<1x128xf32> to vector<16x128xf32>
    %118 = arith.addf %116, %117 : vector<16x128xf32>
    %c0_48 = arith.constant 0 : index
    %c0_49 = arith.constant 0 : index
    %119 = vector.load %arg8[%c0_48, %c0_49] : memref<16x128xf32, #tpu.memory_space<vmem>>, vector<16x128xf32>
    tpu.vector_store %arg8[%c0_48, %c0_49], %118 {strides = array<i32>} : memref<16x128xf32, #tpu.memory_space<vmem>>, vector<16x128xf32>,
    return
  }
}

module attributes {stable_mosaic.version = 11 : i64} {
  func.func @_attn_block_kernel(%arg0: memref<16x128xf32, #tpu.memory_space<vmem>>, %arg1: memref<128x384xf32, #tpu.memory_space<vmem>>, %arg2: memref<1x384xf32, #tpu.memory_space<vmem>>, %arg3: memref<128x128xf32, #tpu.memory_space<vmem>>, %arg4: memref<1x128xf32, #tpu.memory_space<vmem>>, %arg5: memref<16x16xf32, #tpu.memory_space<vmem>>, %arg6: memref<1x128xf32, #tpu.memory_space<vmem>>, %arg7: memref<1x128xf32, #tpu.memory_space<vmem>>, %arg8: memref<16x128xf32, #tpu.memory_space<vmem>>) attributes {dimension_semantics = [], scalar_prefetch = 0 : i64, scratch_operands = 0 : i64, tpu.core_type = #tpu.core_type<tc>} {
    %c0 = arith.constant 0 : index
    %c0_0 = arith.constant 0 : index
    %0 = vector.load %arg0[%c0, %c0_0] : memref<16x128xf32, #tpu.memory_space<vmem>>, vector<16x128xf32>
    %c0_1 = arith.constant 0 : index
    %c0_2 = arith.constant 0 : index
    %1 = vector.load %arg1[%c0_1, %c0_2] : memref<128x384xf32, #tpu.memory_space<vmem>>, vector<128x384xf32>
    %cst = arith.constant dense<0.000000e+00> : vector<16x384xf32>
    %2 = tpu.matmul %0, %1, %cst {dimension_numbers = #tpu.dot_dimension_numbers<[1], [0], [0], [1], [0, 0, 1, 1], [], []>} : vector<16x128xf32>, vector<128x384xf32>, vector<16x384xf32> -> vector<16x384xf32>
    %c0_3 = arith.constant 0 : index
    %c0_4 = arith.constant 0 : index
    %3 = vector.load %arg2[%c0_3, %c0_4] : memref<1x384xf32, #tpu.memory_space<vmem>>, vector<1x384xf32>
    %4 = vector.broadcast %3 : vector<1x384xf32> to vector<16x384xf32>
    %5 = arith.addf %2, %4 : vector<16x384xf32>
    %6 = vector.extract_strided_slice %5 {offsets = [0, 0], sizes = [16, 128], strides = [1, 1]} : vector<16x384xf32> to vector<16x128xf32>
    %7 = vector.extract_strided_slice %5 {offsets = [0, 128], sizes = [16, 128], strides = [1, 1]} : vector<16x384xf32> to vector<16x128xf32>
    %8 = vector.extract_strided_slice %5 {offsets = [0, 256], sizes = [16, 128], strides = [1, 1]} : vector<16x384xf32> to vector<16x128xf32>
    %c0_5 = arith.constant 0 : index
    %c0_6 = arith.constant 0 : index
    %9 = vector.load %arg5[%c0_5, %c0_6] : memref<16x16xf32, #tpu.memory_space<vmem>>, vector<16x16xf32>
    %cst_7 = arith.constant 0.000000e+00 : f32
    %10 = vector.broadcast %cst_7 : f32 to vector<16x128xf32>
    %11 = vector.extract_strided_slice %6 {offsets = [0, 0], sizes = [16, 32], strides = [1, 1]} : vector<16x128xf32> to vector<16x32xf32>
    %12 = vector.extract_strided_slice %7 {offsets = [0, 0], sizes = [16, 32], strides = [1, 1]} : vector<16x128xf32> to vector<16x32xf32>
    %13 = vector.extract_strided_slice %8 {offsets = [0, 0], sizes = [16, 32], strides = [1, 1]} : vector<16x128xf32> to vector<16x32xf32>
    %cst_8 = arith.constant dense<0.000000e+00> : vector<16x16xf32>
    %14 = tpu.matmul %11, %12, %cst_8 {dimension_numbers = #tpu.dot_dimension_numbers<[1], [1], [0], [0], [0, 0, 1, 0], [], []>} : vector<16x32xf32>, vector<16x32xf32>, vector<16x16xf32> -> vector<16x16xf32>
    %cst_9 = arith.constant 0.176776692 : f32
    %15 = vector.broadcast %cst_9 : f32 to vector<16x16xf32>
    %16 = arith.mulf %14, %15 : vector<16x16xf32>
    %17 = arith.addf %16, %9 : vector<16x16xf32>
    %cst_10 = arith.constant dense<0xFF800000> : vector<16xf32>
    %18 = vector.multi_reduction <maximumf>, %17, %cst_10 [1] : vector<16x16xf32> to vector<16xf32>
    %19 = vector.shape_cast %18 : vector<16xf32> to vector<16x1xf32>
    %20 = vector.broadcast %19 : vector<16x1xf32> to vector<16x16xf32>
    %21 = arith.subf %17, %20 : vector<16x16xf32>
    %22 = math.exp %21 : vector<16x16xf32>
    %cst_11 = arith.constant dense<0.000000e+00> : vector<16xf32>
    %23 = vector.multi_reduction <add>, %22, %cst_11 [1] : vector<16x16xf32> to vector<16xf32>
    %24 = vector.shape_cast %23 : vector<16xf32> to vector<16x1xf32>
    %25 = vector.broadcast %24 : vector<16x1xf32> to vector<16x16xf32>
    %26 = arith.divf %22, %25 : vector<16x16xf32>
    %cst_12 = arith.constant dense<0.000000e+00> : vector<16x32xf32>
    %27 = tpu.matmul %26, %13, %cst_12 {dimension_numbers = #tpu.dot_dimension_numbers<[1], [0], [0], [1], [0, 0, 1, 1], [], []>} : vector<16x16xf32>, vector<16x32xf32>, vector<16x32xf32> -> vector<16x32xf32>
    %c0_13 = arith.constant 0 : index
    %c0_14 = arith.constant 0 : index
    %28 = vector.load %arg3[%c0_13, %c0_14] : memref<128x128xf32, #tpu.memory_space<vmem>>, vector<32x128xf32>
    %cst_15 = arith.constant dense<0.000000e+00> : vector<16x128xf32>
    %29 = tpu.matmul %27, %28, %cst_15 {dimension_numbers = #tpu.dot_dimension_numbers<[1], [0], [0], [1], [0, 0, 1, 1], [], []>} : vector<16x32xf32>, vector<32x128xf32>, vector<16x128xf32> -> vector<16x128xf32>
    %30 = arith.addf %10, %29 : vector<16x128xf32>
    %31 = vector.extract_strided_slice %6 {offsets = [0, 32], sizes = [16, 32], strides = [1, 1]} : vector<16x128xf32> to vector<16x32xf32>
    %32 = vector.extract_strided_slice %7 {offsets = [0, 32], sizes = [16, 32], strides = [1, 1]} : vector<16x128xf32> to vector<16x32xf32>
    %33 = vector.extract_strided_slice %8 {offsets = [0, 32], sizes = [16, 32], strides = [1, 1]} : vector<16x128xf32> to vector<16x32xf32>
    %cst_16 = arith.constant dense<0.000000e+00> : vector<16x16xf32>
    %34 = tpu.matmul %31, %32, %cst_16 {dimension_numbers = #tpu.dot_dimension_numbers<[1], [1], [0], [0], [0, 0, 1, 0], [], []>} : vector<16x32xf32>, vector<16x32xf32>, vector<16x16xf32> -> vector<16x16xf32>
    %cst_17 = arith.constant 0.176776692 : f32
    %35 = vector.broadcast %cst_17 : f32 to vector<16x16xf32>
    %36 = arith.mulf %34, %35 : vector<16x16xf32>
    %37 = arith.addf %36, %9 : vector<16x16xf32>
    %cst_18 = arith.constant dense<0xFF800000> : vector<16xf32>
    %38 = vector.multi_reduction <maximumf>, %37, %cst_18 [1] : vector<16x16xf32> to vector<16xf32>
    %39 = vector.shape_cast %38 : vector<16xf32> to vector<16x1xf32>
    %40 = vector.broadcast %39 : vector<16x1xf32> to vector<16x16xf32>
    %41 = arith.subf %37, %40 : vector<16x16xf32>
    %42 = math.exp %41 : vector<16x16xf32>
    %cst_19 = arith.constant dense<0.000000e+00> : vector<16xf32>
    %43 = vector.multi_reduction <add>, %42, %cst_19 [1] : vector<16x16xf32> to vector<16xf32>
    %44 = vector.shape_cast %43 : vector<16xf32> to vector<16x1xf32>
    %45 = vector.broadcast %44 : vector<16x1xf32> to vector<16x16xf32>
    %46 = arith.divf %42, %45 : vector<16x16xf32>
    %cst_20 = arith.constant dense<0.000000e+00> : vector<16x32xf32>
    %47 = tpu.matmul %46, %33, %cst_20 {dimension_numbers = #tpu.dot_dimension_numbers<[1], [0], [0], [1], [0, 0, 1, 1], [], []>} : vector<16x16xf32>, vector<16x32xf32>, vector<16x32xf32> -> vector<16x32xf32>
    %c32 = arith.constant 32 : index
    %c0_21 = arith.constant 0 : index
    %48 = vector.load %arg3[%c32, %c0_21] : memref<128x128xf32, #tpu.memory_space<vmem>>, vector<32x128xf32>
    %cst_22 = arith.constant dense<0.000000e+00> : vector<16x128xf32>
    %49 = tpu.matmul %47, %48, %cst_22 {dimension_numbers = #tpu.dot_dimension_numbers<[1], [0], [0], [1], [0, 0, 1, 1], [], []>} : vector<16x32xf32>, vector<32x128xf32>, vector<16x128xf32> -> vector<16x128xf32>
    %50 = arith.addf %30, %49 : vector<16x128xf32>
    %51 = vector.extract_strided_slice %6 {offsets = [0, 64], sizes = [16, 32], strides = [1, 1]} : vector<16x128xf32> to vector<16x32xf32>
    %52 = vector.extract_strided_slice %7 {offsets = [0, 64], sizes = [16, 32], strides = [1, 1]} : vector<16x128xf32> to vector<16x32xf32>
    %53 = vector.extract_strided_slice %8 {offsets = [0, 64], sizes = [16, 32], strides = [1, 1]} : vector<16x128xf32> to vector<16x32xf32>
    %cst_23 = arith.constant dense<0.000000e+00> : vector<16x16xf32>
    %54 = tpu.matmul %51, %52, %cst_23 {dimension_numbers = #tpu.dot_dimension_numbers<[1], [1], [0], [0], [0, 0, 1, 0], [], []>} : vector<16x32xf32>, vector<16x32xf32>, vector<16x16xf32> -> vector<16x16xf32>
    %cst_24 = arith.constant 0.176776692 : f32
    %55 = vector.broadcast %cst_24 : f32 to vector<16x16xf32>
    %56 = arith.mulf %54, %55 : vector<16x16xf32>
    %57 = arith.addf %56, %9 : vector<16x16xf32>
    %cst_25 = arith.constant dense<0xFF800000> : vector<16xf32>
    %58 = vector.multi_reduction <maximumf>, %57, %cst_25 [1] : vector<16x16xf32> to vector<16xf32>
    %59 = vector.shape_cast %58 : vector<16xf32> to vector<16x1xf32>
    %60 = vector.broadcast %59 : vector<16x1xf32> to vector<16x16xf32>
    %61 = arith.subf %57, %60 : vector<16x16xf32>
    %62 = math.exp %61 : vector<16x16xf32>
    %cst_26 = arith.constant dense<0.000000e+00> : vector<16xf32>
    %63 = vector.multi_reduction <add>, %62, %cst_26 [1] : vector<16x16xf32> to vector<16xf32>
    %64 = vector.shape_cast %63 : vector<16xf32> to vector<16x1xf32>
    %65 = vector.broadcast %64 : vector<16x1xf32> to vector<16x16xf32>
    %66 = arith.divf %62, %65 : vector<16x16xf32>
    %cst_27 = arith.constant dense<0.000000e+00> : vector<16x32xf32>
    %67 = tpu.matmul %66, %53, %cst_27 {dimension_numbers = #tpu.dot_dimension_numbers<[1], [0], [0], [1], [0, 0, 1, 1], [], []>} : vector<16x16xf32>, vector<16x32xf32>, vector<16x32xf32> -> vector<16x32xf32>
    %c64 = arith.constant 64 : index
    %c0_28 = arith.constant 0 : index
    %68 = vector.load %arg3[%c64, %c0_28] : memref<128x128xf32, #tpu.memory_space<vmem>>, vector<32x128xf32>
    %cst_29 = arith.constant dense<0.000000e+00> : vector<16x128xf32>
    %69 = tpu.matmul %67, %68, %cst_29 {dimension_numbers = #tpu.dot_dimension_numbers<[1], [0], [0], [1], [0, 0, 1, 1], [], []>} : vector<16x32xf32>, vector<32x128xf32>, vector<16x128xf32> -> vector<16x128xf32>
    %70 = arith.addf %50, %69 : vector<16x128xf32>
    %71 = vector.extract_strided_slice %6 {offsets = [0, 96], sizes = [16, 32], strides = [1, 1]} : vector<16x128xf32> to vector<16x32xf32>
    %72 = vector.extract_strided_slice %7 {offsets = [0, 96], sizes = [16, 32], strides = [1, 1]} : vector<16x128xf32> to vector<16x32xf32>
    %73 = vector.extract_strided_slice %8 {offsets = [0, 96], sizes = [16, 32], strides = [1, 1]} : vector<16x128xf32> to vector<16x32xf32>
    %cst_30 = arith.constant dense<0.000000e+00> : vector<16x16xf32>
    %74 = tpu.matmul %71, %72, %cst_30 {dimension_numbers = #tpu.dot_dimension_numbers<[1], [1], [0], [0], [0, 0, 1, 0], [], []>} : vector<16x32xf32>, vector<16x32xf32>, vector<16x16xf32> -> vector<16x16xf32>
    %cst_31 = arith.constant 0.176776692 : f32
    %75 = vector.broadcast %cst_31 : f32 to vector<16x16xf32>
    %76 = arith.mulf %74, %75 : vector<16x16xf32>
    %77 = arith.addf %76, %9 : vector<16x16xf32>
    %cst_32 = arith.constant dense<0xFF800000> : vector<16xf32>
    %78 = vector.multi_reduction <maximumf>, %77, %cst_32 [1] : vector<16x16xf32> to vector<16xf32>
    %79 = vector.shape_cast %78 : vector<16xf32> to vector<16x1xf32>
    %80 = vector.broadcast %79 : vector<16x1xf32> to vector<16x16xf32>
    %81 = arith.subf %77, %80 : vector<16x16xf32>
    %82 = math.exp %81 : vector<16x16xf32>
    %cst_33 = arith.constant dense<0.000000e+00> : vector<16xf32>
    %83 = vector.multi_reduction <add>, %82, %cst_33 [1] : vector<16x16xf32> to vector<16xf32>
    %84 = vector.shape_cast %83 : vector<16xf32> to vector<16x1xf32>
    %85 = vector.broadcast %84 : vector<16x1xf32> to vector<16x16xf32>
    %86 = arith.divf %82, %85 : vector<16x16xf32>
    %cst_34 = arith.constant dense<0.000000e+00> : vector<16x32xf32>
    %87 = tpu.matmul %86, %73, %cst_34 {dimension_numbers = #tpu.dot_dimension_numbers<[1], [0], [0], [1], [0, 0, 1, 1], [], []>} : vector<16x16xf32>, vector<16x32xf32>, vector<16x32xf32> -> vector<16x32xf32>
    %c96 = arith.constant 96 : index
    %c0_35 = arith.constant 0 : index
    %88 = vector.load %arg3[%c96, %c0_35] : memref<128x128xf32, #tpu.memory_space<vmem>>, vector<32x128xf32>
    %cst_36 = arith.constant dense<0.000000e+00> : vector<16x128xf32>
    %89 = tpu.matmul %87, %88, %cst_36 {dimension_numbers = #tpu.dot_dimension_numbers<[1], [0], [0], [1], [0, 0, 1, 1], [], []>} : vector<16x32xf32>, vector<32x128xf32>, vector<16x128xf32> -> vector<16x128xf32>
    %90 = arith.addf %70, %89 : vector<16x128xf32>
    %c0_37 = arith.constant 0 : index
    %c0_38 = arith.constant 0 : index
    %91 = vector.load %arg4[%c0_37, %c0_38] : memref<1x128xf32, #tpu.memory_space<vmem>>, vector<1x128xf32>
    %92 = vector.broadcast %91 : vector<1x128xf32> to vector<16x128xf32>
    %93 = arith.addf %90, %92 : vector<16x128xf32>
    %94 = arith.addf %0, %93 : vector<16x128xf32>
    %c0_39 = arith.constant 0 : index
    %c0_40 = arith.constant 0 : index
    %95 = vector.load %arg6[%c0_39, %c0_40] : memref<1x128xf32, #tpu.memory_space<vmem>>, vector<1x128xf32>
    %c0_41 = arith.constant 0 : index
    %c0_42 = arith.constant 0 : index
    %96 = vector.load %arg7[%c0_41, %c0_42] : memref<1x128xf32, #tpu.memory_space<vmem>>, vector<1x128xf32>
    %cst_43 = arith.constant dense<0.000000e+00> : vector<16xf32>
    %97 = vector.multi_reduction <add>, %94, %cst_43 [1] : vector<16x128xf32> to vector<16xf32>
    %98 = vector.shape_cast %97 : vector<16xf32> to vector<16x1xf32>
    %cst_44 = arith.constant 1.280000e+02 : f32
    %99 = vector.broadcast %cst_44 : f32 to vector<16x1xf32>
    %100 = arith.divf %98, %99 : vector<16x1xf32>
    %101 = vector.broadcast %100 : vector<16x1xf32> to vector<16x128xf32>
    %102 = arith.subf %94, %101 : vector<16x128xf32>
    %103 = arith.mulf %102, %102 : vector<16x128xf32>
    %cst_45 = arith.constant dense<0.000000e+00> : vector<16xf32>
    %104 = vector.multi_reduction <add>, %103, %cst_45 [1] : vector<16x128xf32> to vector<16xf32>
    %105 = vector.shape_cast %104 : vector<16xf32> to vector<16x1xf32>
    %cst_46 = arith.constant 1.280000e+02 : f32
    %106 = vector.broadcast %cst_46 : f32 to vector<16x1xf32>
    %107 = arith.divf %105, %106 : vector<16x1xf32>
    %108 = vector.broadcast %100 : vector<16x1xf32> to vector<16x128xf32>
    %109 = arith.subf %94, %108 : vector<16x128xf32>
    %cst_47 = arith.constant 9.99999974E-6 : f32
    %110 = vector.broadcast %cst_47 : f32 to vector<16x1xf32>
    %111 = arith.addf %107, %110 : vector<16x1xf32>
    %112 = math.rsqrt %111 : vector<16x1xf32>
    %113 = vector.broadcast %112 : vector<16x1xf32> to vector<16x128xf32>
    %114 = arith.mulf %109, %113 : vector<16x128xf32>
    %115 = vector.broadcast %95 : vector<1x128xf32> to vector<16x128xf32>
    %116 = arith.mulf %114, %115 : vector<16x128xf32>
    %117 = vector.broadcast %96 : vector<1x128xf32> to vector<16x128xf32>
    %118 = arith.addf %116, %117 : vector<16x128xf32>
    %c0_48 = arith.constant 0 : index
    %c0_49 = arith.constant 0 : index
    %119 = vector.load %arg8[%c0_48, %c0_49] : memref<16x128xf32, #tpu.memory_space<vmem>>, vector<16x128xf32>
    tpu.vector_store %arg8[%c0_48, %c0_49], %118 {strides = array<i32>} : memref<16x128xf32, #tpu.memory_space<vmem>>, vector<16x128xf32>,
    return
  }
}

module attributes {stable_mosaic.version = 11 : i64} {
  func.func @_lm_head_kernel(%arg0: memref<16x128xf32, #tpu.memory_space<vmem>>, %arg1: memref<128x128xf32, #tpu.memory_space<vmem>>, %arg2: memref<1x128xf32, #tpu.memory_space<vmem>>, %arg3: memref<16x128xf32, #tpu.memory_space<vmem>>) attributes {dimension_semantics = [], scalar_prefetch = 0 : i64, scratch_operands = 0 : i64, tpu.core_type = #tpu.core_type<tc>} {
    %c0 = arith.constant 0 : index
    %c0_0 = arith.constant 0 : index
    %0 = vector.load %arg0[%c0, %c0_0] : memref<16x128xf32, #tpu.memory_space<vmem>>, vector<16x128xf32>
    %c0_1 = arith.constant 0 : index
    %c0_2 = arith.constant 0 : index
    %1 = vector.load %arg1[%c0_1, %c0_2] : memref<128x128xf32, #tpu.memory_space<vmem>>, vector<128x128xf32>
    %cst = arith.constant dense<0.000000e+00> : vector<16x128xf32>
    %2 = tpu.matmul %0, %1, %cst {dimension_numbers = #tpu.dot_dimension_numbers<[1], [0], [0], [1], [0, 0, 1, 1], [], []>} : vector<16x128xf32>, vector<128x128xf32>, vector<16x128xf32> -> vector<16x128xf32>
    %c0_3 = arith.constant 0 : index
    %c0_4 = arith.constant 0 : index
    %3 = vector.load %arg2[%c0_3, %c0_4] : memref<1x128xf32, #tpu.memory_space<vmem>>, vector<1x128xf32>
    %4 = vector.broadcast %3 : vector<1x128xf32> to vector<16x128xf32>
    %5 = arith.addf %2, %4 : vector<16x128xf32>
    %cst_5 = arith.constant dense<0xFF800000> : vector<16xf32>
    %6 = vector.multi_reduction <maximumf>, %5, %cst_5 [1] : vector<16x128xf32> to vector<16xf32>
    %7 = vector.shape_cast %6 : vector<16xf32> to vector<16x1xf32>
    %8 = vector.broadcast %7 : vector<16x1xf32> to vector<16x128xf32>
    %9 = arith.subf %5, %8 : vector<16x128xf32>
    %10 = math.exp %9 : vector<16x128xf32>
    %cst_6 = arith.constant dense<0.000000e+00> : vector<16xf32>
    %11 = vector.multi_reduction <add>, %10, %cst_6 [1] : vector<16x128xf32> to vector<16xf32>
    %12 = vector.shape_cast %11 : vector<16xf32> to vector<16x1xf32>
    %13 = math.log %12 : vector<16x1xf32>
    %14 = vector.broadcast %13 : vector<16x1xf32> to vector<16x128xf32>
    %15 = arith.subf %9, %14 : vector<16x128xf32>
    %c0_7 = arith.constant 0 : index
    %c0_8 = arith.constant 0 : index
    %16 = vector.load %arg3[%c0_7, %c0_8] : memref<16x128xf32, #tpu.memory_space<vmem>>, vector<16x128xf32>
    tpu.vector_store %arg3[%c0_7, %c0_8], %15 {strides = array<i32>} : memref<16x128xf32, #tpu.memory_space<vmem>>, vector<16x128xf32>,
    return
  }
}

</mosaic_0001>

<llo_original>
// kernel: transformer_lm_forward.8
$region0: #{transformer_lm_forward.8}
  #allocation0 [shape = 'u32[]', space=smem, size = 0x4, offset = 0x4, fixed_abs, tag = 'smem constant byte address 0x4 - core index']
  #allocation1 [shape = 'u32[144,128]{1,0:T(1,128)}', space=vmem, size = 0x12000, scoped, tag = 'internal scratch']
  %s0 = inlined_call_operand.vmem [shape: f32[16,128], index: 0, kind: input, shape index: {}, may-alias: {0,7}]
  %s1 = inlined_call_operand.vmem [shape: f32[128,256], index: 1, kind: input, shape index: {}]
  %s2 = inlined_call_operand.vmem [shape: f32[1,256], index: 2, kind: input, shape index: {}]
  %s3 = inlined_call_operand.vmem [shape: f32[256,128], index: 3, kind: input, shape index: {}]
  %s4 = inlined_call_operand.vmem [shape: f32[1,128], index: 4, kind: input, shape index: {}]
  %s5 = inlined_call_operand.vmem [shape: f32[1,128], index: 5, kind: input, shape index: {}]
  %s6 = inlined_call_operand.vmem [shape: f32[1,128], index: 6, kind: input, shape index: {}]
  %s7 = inlined_call_operand.vmem [shape: f32[16,128], index: 7, kind: output, shape index: {}, may-alias: {0,7}]
  %s8 = sld [smem:[#allocation0]]
  $region38: #{transformer_lm_forward.8} parent=0
    _
  %s10 = ssub.s32 1, %s8
  %s11 = scalar_select 0, %s10, %s8
  // Predicated region
  $region2: #{transformer_lm_forward.8} parent=0 // pred_check
    _
  $region3: #{transformer_lm_forward.8} parent=0 // pred_check_branch
    %13 = sbr.rel (0) target = $region5
  $region4: #{transformer_lm_forward.8} parent=0 // pred_region
    _
  $region5: #{transformer_lm_forward.8} parent=0 // pred_fallthru
    _
  // Predicated region
  $region6: #{transformer_lm_forward.8} parent=0 // pred_check
    _
  $region7: #{transformer_lm_forward.8} parent=0 // pred_check_branch
    %15 = sbr.rel (0) target = $region9
  $region8: #{transformer_lm_forward.8} parent=0 // pred_region
    _
  $region9: #{transformer_lm_forward.8} parent=0 // pred_fallthru
    _
  // Predicated region
  $region10: #{transformer_lm_forward.8} parent=0 // pred_check
    _
  $region11: #{transformer_lm_forward.8} parent=0 // pred_check_branch
    %17 = sbr.rel (0) target = $region13
  $region12: #{transformer_lm_forward.8} parent=0 // pred_region
    _
  $region13: #{transformer_lm_forward.8} parent=0 // pred_fallthru
    _
  // Predicated region
  $region14: #{transformer_lm_forward.8} parent=0 // pred_check
    _
  $region15: #{transformer_lm_forward.8} parent=0 // pred_check_branch
    %19 = sbr.rel (0) target = $region17
  $region16: #{transformer_lm_forward.8} parent=0 // pred_region
    _
  $region17: #{transformer_lm_forward.8} parent=0 // pred_fallthru
    _
  // Predicated region
  $region18: #{transformer_lm_forward.8} parent=0 // pred_check
    _
  $region19: #{transformer_lm_forward.8} parent=0 // pred_check_branch
    %21 = sbr.rel (0) target = $region21
  $region20: #{transformer_lm_forward.8} parent=0 // pred_region
    _
  $region21: #{transformer_lm_forward.8} parent=0 // pred_fallthru
    _
  // Predicated region
  $region22: #{transformer_lm_forward.8} parent=0 // pred_check
    _
  $region23: #{transformer_lm_forward.8} parent=0 // pred_check_branch
    %23 = sbr.rel (0) target = $region25
  $region24: #{transformer_lm_forward.8} parent=0 // pred_region
    _
  $region25: #{transformer_lm_forward.8} parent=0 // pred_fallthru
    _
  // Predicated region
  $region26: #{transformer_lm_forward.8} parent=0 // pred_check
    _
  $region27: #{transformer_lm_forward.8} parent=0 // pred_check_branch
    %25 = sbr.rel (0) target = $region29
  $region28: #{transformer_lm_forward.8} parent=0 // pred_region
    _
  $region29: #{transformer_lm_forward.8} parent=0 // pred_fallthru
    _
  %v26 = vld [vmem:[%s0] sm:$0xff]
  %v27 = vld [vmem:[%s0 + $0x8] sm:$0xff]
  %v28 = vld [vmem:[%s1] sm:$0xff]
  %v29 = vld [vmem:[%s1 + $0x8] sm:$0xff]
  %v30 = vld [vmem:[%s1 + $0x10] sm:$0xff]
  %v31 = vld [vmem:[%s1 + $0x18] sm:$0xff]
  %v32 = vld [vmem:[%s1 + $0x20] sm:$0xff]
  %v33 = vld [vmem:[%s1 + $0x28] sm:$0xff]
  %v34 = vld [vmem:[%s1 + $0x30] sm:$0xff]
  %v35 = vld [vmem:[%s1 + $0x38] sm:$0xff]
  %v36 = vld [vmem:[%s1 + $0x40] sm:$0xff]
  %v37 = vld [vmem:[%s1 + $0x48] sm:$0xff]
  %v38 = vld [vmem:[%s1 + $0x50] sm:$0xff]
  %v39 = vld [vmem:[%s1 + $0x58] sm:$0xff]
  %v40 = vld [vmem:[%s1 + $0x60] sm:$0xff]
  %v41 = vld [vmem:[%s1 + $0x68] sm:$0xff]
  %v42 = vld [vmem:[%s1 + $0x70] sm:$0xff]
  %v43 = vld [vmem:[%s1 + $0x78] sm:$0xff]
  %v44 = vld [vmem:[%s1 + $0x80] sm:$0xff]
  %v45 = vld [vmem:[%s1 + $0x88] sm:$0xff]
  %v46 = vld [vmem:[%s1 + $0x90] sm:$0xff]
  %v47 = vld [vmem:[%s1 + $0x98] sm:$0xff]
  %v48 = vld [vmem:[%s1 + $0xa0] sm:$0xff]
  %v49 = vld [vmem:[%s1 + $0xa8] sm:$0xff]
  %v50 = vld [vmem:[%s1 + $0xb0] sm:$0xff]
  %v51 = vld [vmem:[%s1 + $0xb8] sm:$0xff]
  %v52 = vld [vmem:[%s1 + $0xc0] sm:$0xff]
  %v53 = vld [vmem:[%s1 + $0xc8] sm:$0xff]
  %v54 = vld [vmem:[%s1 + $0xd0] sm:$0xff]
  %v55 = vld [vmem:[%s1 + $0xd8] sm:$0xff]
  %v56 = vld [vmem:[%s1 + $0xe0] sm:$0xff]
  %v57 = vld [vmem:[%s1 + $0xe8] sm:$0xff]
  %v58 = vld [vmem:[%s1 + $0xf0] sm:$0xff]
  %v59 = vld [vmem:[%s1 + $0xf8] sm:$0xff]
  %v60 = vld [vmem:[%s2] sm:$0x3]
  %v62 = vlaneseq
  %v63 = vshrl.u32 %v62, 7
  %v64 = vsub.s32 0, %v63
  %v65 = vrot.slane %v60, %v64
  %v66 = vlaneseq
  %v67 = vshrl.u32 %v66, 7
  %v68 = vsub.s32 1, %v67
  %v69 = vrot.slane %v60, %v68
  %72 = vmatprep.subr.mxu0 %v59
  %73 = vmatpush1.msra.mxu0 %v58
  %74 = vmatprep.subr.mxu0 %v57
  %75 = vmatpush1.msra.mxu0 %v56
  %76 = vmatprep.subr.mxu0 %v55
  %77 = vmatpush1.msra.mxu0 %v54
  %78 = vmatprep.subr.mxu0 %v53
  %79 = vmatpush1.msra.mxu0 %v52
  %80 = vmatprep.subr.mxu0 %v51
  %81 = vmatpush1.msra.mxu0 %v50
  %82 = vmatprep.subr.mxu0 %v49
  %83 = vmatpush1.msra.mxu0 %v48
  %84 = vmatprep.subr.mxu0 %v47
  %85 = vmatpush1.msra.mxu0 %v46
  %86 = vmatprep.subr.mxu0 %v45
  %87 = vmatpush1.msra.mxu0 %v44
  %88 = vmatprep.subr.mxu0 %v43
  %89 = vmatpush1.msra.mxu0 %v42
  %90 = vmatprep.subr.mxu0 %v41
  %91 = vmatpush1.msra.mxu0 %v40
  %92 = vmatprep.subr.mxu0 %v39
  %93 = vmatpush1.msra.mxu0 %v38
  %94 = vmatprep.subr.mxu0 %v37
  %95 = vmatpush1.msra.mxu0 %v36
  %96 = vmatprep.subr.mxu0 %v35
  %97 = vmatpush1.msra.mxu0 %v34
  %98 = vmatprep.subr.mxu0 %v33
  %99 = vmatpush1.msra.mxu0 %v32
  %100 = vmatprep.subr.mxu0 %v31
  %101 = vmatpush1.msra.mxu0 %v30
  %102 = vmatprep.subr.mxu0 %v29
  %103 = vmatpush1.msra.mxu0 %v28
  %104 = vmatprep.subr.mxu0 0.0
  %105 = vmatpush2.msra.mxu0 0.0
  %106 = vmatprep.subr.mxu0 0.0
  %107 = vmatpush2.msra.mxu0 0.0
  %108 = vmatprep.subr.mxu0 0.0
  %109 = vmatpush2.msra.mxu0 0.0
  %110 = vmatprep.subr.mxu0 0.0
  %111 = vmatpush2.msra.mxu0 0.0
  %112 = vmatprep.subr.mxu0 0.0
  %113 = vmatpush2.msra.mxu0 0.0
  %114 = vmatprep.subr.mxu0 0.0
  %115 = vmatpush2.msra.mxu0 0.0
  %116 = vmatprep.subr.mxu0 0.0
  %117 = vmatpush2.msra.mxu0 0.0
  %118 = vmatprep.subr.mxu0 0.0
  %119 = vmatpush2.msra.mxu0 0.0
  %120 = vmatprep.subr.mxu0 0.0
  %121 = vmatpush2.msra.mxu0 0.0
  %122 = vmatprep.subr.mxu0 0.0
  %123 = vmatpush2.msra.mxu0 0.0
  %124 = vmatprep.subr.mxu0 0.0
  %125 = vmatpush2.msra.mxu0 0.0
  %126 = vmatprep.subr.mxu0 0.0
  %127 = vmatpush2.msra.mxu0 0.0
  %128 = vmatprep.subr.mxu0 0.0
  %129 = vmatpush2.msra.mxu0 0.0
  %130 = vmatprep.subr.mxu0 0.0
  %131 = vmatpush2.msra.mxu0 0.0
  %132 = vmatprep.subr.mxu0 0.0
  %133 = vmatpush2.msra.mxu0 0.0
  %134 = vmatprep.subr.mxu0 0.0
  %135 = vmatpush2.msra.mxu0 0.0
  %136 = vmatprep.mubr.f32.mxu0 0.0
  %137 = vmatmul.mubr.f32.gmra.mxu0 %v26
  %v138 = vpop.f32.mrf.mxu0
  %v139 = vadd.f32 %v65, %v138
  %v140 = vpop.f32.mrf.mxu0
  %v141 = vadd.f32 %v69, %v140
  %142 = vmatprep.mubr.f32.mxu0 0.0
  %143 = vmatmul.mubr.f32.gmra.mxu0 %v27
  %v144 = vpop.f32.mrf.mxu0
  %v145 = vadd.f32 %v65, %v144
  %v146 = vpop.f32.mrf.mxu0
  %v147 = vadd.f32 %v69, %v146
  %148 = vdwg.mxu0
  %v149 = vmax.f32 %v139, 0.0
  %v150 = vmax.f32 %v141, 0.0
  %v151 = vmax.f32 %v145, 0.0
  %v152 = vmax.f32 %v147, 0.0
  %v153 = vld [vmem:[%s3] sm:$0xff]
  %v154 = vld [vmem:[%s3 + $0x8] sm:$0xff]
  %v155 = vld [vmem:[%s3 + $0x10] sm:$0xff]
  %v156 = vld [vmem:[%s3 + $0x18] sm:$0xff]
  %v157 = vld [vmem:[%s3 + $0x20] sm:$0xff]
  %v158 = vld [vmem:[%s3 + $0x28] sm:$0xff]
  %v159 = vld [vmem:[%s3 + $0x30] sm:$0xff]
  %v160 = vld [vmem:[%s3 + $0x38] sm:$0xff]
  %v161 = vld [vmem:[%s3 + $0x40] sm:$0xff]
  %v162 = vld [vmem:[%s3 + $0x48] sm:$0xff]
  %v163 = vld [vmem:[%s3 + $0x50] sm:$0xff]
  %v164 = vld [vmem:[%s3 + $0x58] sm:$0xff]
  %v165 = vld [vmem:[%s3 + $0x60] sm:$0xff]
  %v166 = vld [vmem:[%s3 + $0x68] sm:$0xff]
  %v167 = vld [vmem:[%s3 + $0x70] sm:$0xff]
  %v168 = vld [vmem:[%s3 + $0x78] sm:$0xff]
  %v169 = vld [vmem:[%s3 + $0x80] sm:$0xff]
  %v170 = vld [vmem:[%s3 + $0x88] sm:$0xff]
  %v171 = vld [vmem:[%s3 + $0x90] sm:$0xff]
  %v172 = vld [vmem:[%s3 + $0x98] sm:$0xff]
  %v173 = vld [vmem:[%s3 + $0xa0] sm:$0xff]
  %v174 = vld [vmem:[%s3 + $0xa8] sm:$0xff]
  %v175 = vld [vmem:[%s3 + $0xb0] sm:$0xff]
  %v176 = vld [vmem:[%s3 + $0xb8] sm:$0xff]
  %v177 = vld [vmem:[%s3 + $0xc0] sm:$0xff]
  %v178 = vld [vmem:[%s3 + $0xc8] sm:$0xff]
  %v179 = vld [vmem:[%s3 + $0xd0] sm:$0xff]
  %v180 = vld [vmem:[%s3 + $0xd8] sm:$0xff]
  %v181 = vld [vmem:[%s3 + $0xe0] sm:$0xff]
  %v182 = vld [vmem:[%s3 + $0xe8] sm:$0xff]
  %v183 = vld [vmem:[%s3 + $0xf0] sm:$0xff]
  %v184 = vld [vmem:[%s3 + $0xf8] sm:$0xff]
  %v185 = vld [vmem:[%s4] sm:$0x1]
  %v187 = vlaneseq
  %v188 = vshrl.u32 %v187, 7
  %v189 = vsub.s32 0, %v188
  %v190 = vrot.slane %v185, %v189
  %192 = vmatprep.subr.mxu0 0.0
  %193 = vmatpush1.msra.mxu0 %v168
  %194 = vmatprep.subr.mxu0 0.0
  %195 = vmatpush1.msra.mxu0 %v167
  %196 = vmatprep.subr.mxu0 0.0
  %197 = vmatpush1.msra.mxu0 %v166
  %198 = vmatprep.subr.mxu0 0.0
  %199 = vmatpush1.msra.mxu0 %v165
  %200 = vmatprep.subr.mxu0 0.0
  %201 = vmatpush1.msra.mxu0 %v164
  %202 = vmatprep.subr.mxu0 0.0
  %203 = vmatpush1.msra.mxu0 %v163
  %204 = vmatprep.subr.mxu0 0.0
  %205 = vmatpush1.msra.mxu0 %v162
  %206 = vmatprep.subr.mxu0 0.0
  %207 = vmatpush1.msra.mxu0 %v161
  %208 = vmatprep.subr.mxu0 0.0
  %209 = vmatpush1.msra.mxu0 %v160
  %210 = vmatprep.subr.mxu0 0.0
  %211 = vmatpush1.msra.mxu0 %v159
  %212 = vmatprep.subr.mxu0 0.0
  %213 = vmatpush1.msra.mxu0 %v158
  %214 = vmatprep.subr.mxu0 0.0
  %215 = vmatpush1.msra.mxu0 %v157
  %216 = vmatprep.subr.mxu0 0.0
  %217 = vmatpush1.msra.mxu0 %v156
  %218 = vmatprep.subr.mxu0 0.0
  %219 = vmatpush1.msra.mxu0 %v155
  %220 = vmatprep.subr.mxu0 0.0
  %221 = vmatpush1.msra.mxu0 %v154
  %222 = vmatprep.subr.mxu0 0.0
  %223 = vmatpush1.msra.mxu0 %v153
  %224 = vmatprep.subr.mxu0 0.0
  %225 = vmatpush2.msra.mxu0 %v184
  %226 = vmatprep.subr.mxu0 0.0
  %227 = vmatpush2.msra.mxu0 %v183
  %228 = vmatprep.subr.mxu0 0.0
  %229 = vmatpush2.msra.mxu0 %v182
  %230 = vmatprep.subr.mxu0 0.0
  %231 = vmatpush2.msra.mxu0 %v181
  %232 = vmatprep.subr.mxu0 0.0
  %233 = vmatpush2.msra.mxu0 %v180
  %234 = vmatprep.subr.mxu0 0.0
  %235 = vmatpush2.msra.mxu0 %v179
  %236 = vmatprep.subr.mxu0 0.0
  %237 = vmatpush2.msra.mxu0 %v178
  %238 = vmatprep.subr.mxu0 0.0
  %239 = vmatpush2.msra.mxu0 %v177
  %240 = vmatprep.subr.mxu0 0.0
  %241 = vmatpush2.msra.mxu0 %v176
  %242 = vmatprep.subr.mxu0 0.0
  %243 = vmatpush2.msra.mxu0 %v175
  %244 = vmatprep.subr.mxu0 0.0
  %245 = vmatpush2.msra.mxu0 %v174
  %246 = vmatprep.subr.mxu0 0.0
  %247 = vmatpush2.msra.mxu0 %v173
  %248 = vmatprep.subr.mxu0 0.0
  %249 = vmatpush2.msra.mxu0 %v172
  %250 = vmatprep.subr.mxu0 0.0
  %251 = vmatpush2.msra.mxu0 %v171
  %252 = vmatprep.subr.mxu0 0.0
  %253 = vmatpush2.msra.mxu0 %v170
  %254 = vmatprep.subr.mxu0 0.0
  %255 = vmatpush2.msra.mxu0 %v169
  %256 = vmatprep.mubr.f32.mxu0 %v150
  %257 = vmatmul.mubr.f32.gmra.mxu0 %v149
  %v258 = vpop.f32.mrf.mxu0
  %v259 = vadd.f32 %v190, %v258
  %v260 = vpop.f32.mrf.mxu0
  %261 = vmatprep.mubr.f32.mxu0 %v152
  %262 = vmatmul.mubr.f32.gmra.mxu0 %v151
  %v263 = vpop.f32.mrf.mxu0
  %v264 = vadd.f32 %v190, %v263
  %v265 = vpop.f32.mrf.mxu0
  %266 = vdwg.mxu0
  %v267 = vadd.f32 %v26, %v259
  %v268 = vadd.f32 %v27, %v264
  %v269 = vld [vmem:[%s5] sm:$0x1]
  %v270 = vld [vmem:[%s6] sm:$0x1]
  %271 = vadd.xlane.f32.xlu0 %v267
  %v272 = vpop.xlane.xlu0 %271
  %273 = vadd.xlane.f32.xlu0 %v268
  %v274 = vpop.xlane.xlu0 %273
  %v275 = vrcp.pop 128.0
  %v276 = vmul.f32 %v272, %v275
  %v277 = vmul.f32 %v274, %v275
  %v278 = vsub.f32 %v267, %v276
  %v279 = vsub.f32 %v268, %v277
  %v280 = vmul.f32 %v278, %v278
  %v281 = vmul.f32 %v279, %v279
  %282 = vadd.xlane.f32.xlu0 %v280
  %v283 = vpop.xlane.xlu0 %282
  %284 = vadd.xlane.f32.xlu0 %v281
  %v285 = vpop.xlane.xlu0 %284
  %v286 = vmul.f32 %v283, %v275
  %v287 = vmul.f32 %v285, %v275
  %v288 = vadd.f32 %v286, 1e-05
  %v289 = vadd.f32 %v287, 1e-05
  %v290 = vrsqrt.pop %v288
  %v291 = vrsqrt.pop %v289
  %v292 = vmul.f32 %v278, %v290
  %v293 = vmul.f32 %v279, %v291
  %v295 = vlaneseq
  %v296 = vshrl.u32 %v295, 7
  %v297 = vsub.s32 0, %v296
  %v298 = vrot.slane %v269, %v297
  %v300 = vmul.f32 %v292, %v298
  %v301 = vmul.f32 %v293, %v298
  %v303 = vlaneseq
  %v304 = vshrl.u32 %v303, 7
  %v305 = vsub.s32 0, %v304
  %v306 = vrot.slane %v270, %v305
  %v308 = vadd.f32 %v300, %v306
  %v309 = vadd.f32 %v301, %v306
  %310 = vst [vmem:[%s7] sm:$0xff] %v308
  %311 = vst [vmem:[%s7 + $0x8] sm:$0xff] %v309
  // Predicated region
  $region30: #{transformer_lm_forward.8} parent=0 // pred_check
    _
  $region31: #{transformer_lm_forward.8} parent=0 // pred_check_branch
    %313 = sbr.rel (0) target = $region33
  $region32: #{transformer_lm_forward.8} parent=0 // pred_region
    _
  $region33: #{transformer_lm_forward.8} parent=0 // pred_fallthru
    _
  // Predicated region
  $region34: #{transformer_lm_forward.8} parent=0 // pred_check
    _
  $region35: #{transformer_lm_forward.8} parent=0 // pred_check_branch
    %315 = sbr.rel (0) target = $region37
  $region36: #{transformer_lm_forward.8} parent=0 // pred_region
    _
  $region37: #{transformer_lm_forward.8} parent=0 // pred_fallthru
    _

// kernel: transformer_lm_forward.6
$region0: #{transformer_lm_forward.6}
  #allocation0 [shape = 'u32[]', space=smem, size = 0x4, offset = 0x4, fixed_abs, tag = 'smem constant byte address 0x4 - core index']
  #allocation1 [shape = 'u32[144,128]{1,0:T(1,128)}', space=vmem, size = 0x12000, scoped, tag = 'internal scratch']
  %s0 = inlined_call_operand.vmem [shape: s32[16,1], index: 0, kind: input, shape index: {}]
  %s1 = inlined_call_operand.hbm [shape: f32[128,128], index: 1, kind: input, shape index: {}]
  %s2 = inlined_call_operand.vmem [shape: f32[16,128], index: 2, kind: input, shape index: {}]
  %s3 = inlined_call_operand.vmem [shape: f32[16,128], index: 3, kind: output, shape index: {}]
  %s4 = sld [smem:[#allocation0]]
  $region26: #{transformer_lm_forward.6} parent=0
    _
  %s6 = ssub.s32 1, %s4
  %s7 = scalar_select 0, %s6, %s4
  $region1: #{transformer_lm_forward.6} parent=0
    #allocation2 [shape = 'u8[65536]{0}', space=vmem, size = 0x10000, scoped, tag = 'input window, operand 1, single buffered']
    #allocation3 [shape = 's32[1]{0}', space=sflag, size = 0x4, scoped, tag = 'scoped memory for transformer_lm_forward.6']
    %8 = vsyncpa [#allocation3], 0
    // Predicated region
    $region2: #{transformer_lm_forward.6} parent=1 // pred_check
      _
    $region3: #{transformer_lm_forward.6} parent=1 // pred_check_branch
      %10 = sbr.rel (0) target = $region5
    $region4: #{transformer_lm_forward.6} parent=1 // pred_region
      _
    $region5: #{transformer_lm_forward.6} parent=1 // pred_fallthru
      _
    // Predicated region
    $region6: #{transformer_lm_forward.6} parent=1 // pred_check
      _
    $region7: #{transformer_lm_forward.6} parent=1 // pred_check_branch
      %12 = sbr.rel (0) target = $region9
    $region8: #{transformer_lm_forward.6} parent=1 // pred_region
      %s14 = ssub.s32 2048, 2048
      %15 = vsyncadd [#allocation3], %s14
      %s16 = sshll.u32 [#allocation2], 4
      %s17 = int_to_ptr.vmem [resolvable:$true] %s16
      %22 = dma.hbm_to_vmem [thread:$0]  %s1, 2048, %s17, [#allocation3], 128, 128, 8
    $region9: #{transformer_lm_forward.6} parent=1 // pred_fallthru
      _
    // Predicated region
    $region10: #{transformer_lm_forward.6} parent=1 // pred_check
      _
    $region11: #{transformer_lm_forward.6} parent=1 // pred_check_branch
      %24 = sbr.rel (0) target = $region13
    $region12: #{transformer_lm_forward.6} parent=1 // pred_region
      _
    $region13: #{transformer_lm_forward.6} parent=1 // pred_fallthru
      _
    // Predicated region
    $region14: #{transformer_lm_forward.6} parent=1 // pred_check
      _
    $region15: #{transformer_lm_forward.6} parent=1 // pred_check_branch
      %26 = sbr.rel (0) target = $region17
    $region16: #{transformer_lm_forward.6} parent=1 // pred_region
      %27 = dma.done [#allocation3], 2048
    $region17: #{transformer_lm_forward.6} parent=1 // pred_fallthru
      _
    %v28 = vld [vmem:[%s0] sm:$0xff]
    %v29 = vld [vmem:[%s0 + $0x8] sm:$0xff]
    %v30 = vlaneseq
    %v31 = vand.u32 %v30, 127
    %32 = vset.pattern.permute.xlu0 0
    %33 = vperm.xlu0 %32, %v28
    %v34 = vpop.permute.xlu0 %33
    %35 = vset.pattern.permute.xlu0 0
    %36 = vperm.xlu0 %35, %v29
    %v37 = vpop.permute.xlu0 %36
    %vm38 = vcmp.eq.s32.totalorder %v31, %v34
    %vm39 = vcmp.eq.s32.totalorder %v31, %v37
    %v40 = vsel %vm38, 1, 0
    %v41 = vsel %vm39, 1, 0
    %v42 = vcvt.s32.f32 %v40
    %v43 = vcvt.s32.f32 %v41
    %v44 = vld [vmem:[#allocation2] sm:$0xff]
    %v45 = vld [vmem:[#allocation2 + $0x8] sm:$0xff]
    %v46 = vld [vmem:[#allocation2 + $0x10] sm:$0xff]
    %v47 = vld [vmem:[#allocation2 + $0x18] sm:$0xff]
    %v48 = vld [vmem:[#allocation2 + $0x20] sm:$0xff]
    %v49 = vld [vmem:[#allocation2 + $0x28] sm:$0xff]
    %v50 = vld [vmem:[#allocation2 + $0x30] sm:$0xff]
    %v51 = vld [vmem:[#allocation2 + $0x38] sm:$0xff]
    %v52 = vld [vmem:[#allocation2 + $0x40] sm:$0xff]
    %v53 = vld [vmem:[#allocation2 + $0x48] sm:$0xff]
    %v54 = vld [vmem:[#allocation2 + $0x50] sm:$0xff]
    %v55 = vld [vmem:[#allocation2 + $0x58] sm:$0xff]
    %v56 = vld [vmem:[#allocation2 + $0x60] sm:$0xff]
    %v57 = vld [vmem:[#allocation2 + $0x68] sm:$0xff]
    %v58 = vld [vmem:[#allocation2 + $0x70] sm:$0xff]
    %v59 = vld [vmem:[#allocation2 + $0x78] sm:$0xff]
    %60 = vmatprep.subr.mxu0 0.0
    %61 = vmatpush1.msra.mxu0 %v59
    %62 = vmatprep.subr.mxu0 0.0
    %63 = vmatpush1.msra.mxu0 %v58
    %64 = vmatprep.subr.mxu0 0.0
    %65 = vmatpush1.msra.mxu0 %v57
    %66 = vmatprep.subr.mxu0 0.0
    %67 = vmatpush1.msra.mxu0 %v56
    %68 = vmatprep.subr.mxu0 0.0
    %69 = vmatpush1.msra.mxu0 %v55
    %70 = vmatprep.subr.mxu0 0.0
    %71 = vmatpush1.msra.mxu0 %v54
    %72 = vmatprep.subr.mxu0 0.0
    %73 = vmatpush1.msra.mxu0 %v53
    %74 = vmatprep.subr.mxu0 0.0
    %75 = vmatpush1.msra.mxu0 %v52
    %76 = vmatprep.subr.mxu0 0.0
    %77 = vmatpush1.msra.mxu0 %v51
    %78 = vmatprep.subr.mxu0 0.0
    %79 = vmatpush1.msra.mxu0 %v50
    %80 = vmatprep.subr.mxu0 0.0
    %81 = vmatpush1.msra.mxu0 %v49
    %82 = vmatprep.subr.mxu0 0.0
    %83 = vmatpush1.msra.mxu0 %v48
    %84 = vmatprep.subr.mxu0 0.0
    %85 = vmatpush1.msra.mxu0 %v47
    %86 = vmatprep.subr.mxu0 0.0
    %87 = vmatpush1.msra.mxu0 %v46
    %88 = vmatprep.subr.mxu0 0.0
    %89 = vmatpush1.msra.mxu0 %v45
    %90 = vmatprep.subr.mxu0 0.0
    %91 = vmatpush1.msra.mxu0 %v44
    %92 = vmatprep.subr.mxu0 0.0
    %93 = vmatpush2.msra.mxu0 0.0
    %94 = vmatprep.subr.mxu0 0.0
    %95 = vmatpush2.msra.mxu0 0.0
    %96 = vmatprep.subr.mxu0 0.0
    %97 = vmatpush2.msra.mxu0 0.0
    %98 = vmatprep.subr.mxu0 0.0
    %99 = vmatpush2.msra.mxu0 0.0
    %100 = vmatprep.subr.mxu0 0.0
    %101 = vmatpush2.msra.mxu0 0.0
    %102 = vmatprep.subr.mxu0 0.0
    %103 = vmatpush2.msra.mxu0 0.0
    %104 = vmatprep.subr.mxu0 0.0
    %105 = vmatpush2.msra.mxu0 0.0
    %106 = vmatprep.subr.mxu0 0.0
    %107 = vmatpush2.msra.mxu0 0.0
    %108 = vmatprep.subr.mxu0 0.0
    %109 = vmatpush2.msra.mxu0 0.0
    %110 = vmatprep.subr.mxu0 0.0
    %111 = vmatpush2.msra.mxu0 0.0
    %112 = vmatprep.subr.mxu0 0.0
    %113 = vmatpush2.msra.mxu0 0.0
    %114 = vmatprep.subr.mxu0 0.0
    %115 = vmatpush2.msra.mxu0 0.0
    %116 = vmatprep.subr.mxu0 0.0
    %117 = vmatpush2.msra.mxu0 0.0
    %118 = vmatprep.subr.mxu0 0.0
    %119 = vmatpush2.msra.mxu0 0.0
    %120 = vmatprep.subr.mxu0 0.0
    %121 = vmatpush2.msra.mxu0 0.0
    %122 = vmatprep.subr.mxu0 0.0
    %123 = vmatpush2.msra.mxu0 0.0
    %124 = vmatprep.mubr.f32.mxu0 0.0
    %125 = vmatmul.mubr.f32.gmra.mxu0 %v42
    %v126 = vpop.f32.mrf.mxu0
    %v127 = vadd.f32 0.0, %v126
    %v128 = vpop.f32.mrf.mxu0
    %129 = vmatprep.mubr.f32.mxu0 0.0
    %130 = vmatmul.mubr.f32.gmra.mxu0 %v43
    %v131 = vpop.f32.mrf.mxu0
    %v132 = vadd.f32 0.0, %v131
    %v133 = vpop.f32.mrf.mxu0
    %134 = vdwg.mxu0
    %v135 = vmul.f32 %v127, 11.313708
    %v136 = vmul.f32 %v132, 11.313708
    %v137 = vld [vmem:[%s2] sm:$0xff]
    %v138 = vld [vmem:[%s2 + $0x8] sm:$0xff]
    %v139 = vadd.f32 %v135, %v137
    %v140 = vadd.f32 %v136, %v138
    %141 = vst [vmem:[%s3] sm:$0xff] %v139
    %142 = vst [vmem:[%s3 + $0x8] sm:$0xff] %v140
    // Predicated region
    $region18: #{transformer_lm_forward.6} parent=1 // pred_check
      _
    $region19: #{transformer_lm_forward.6} parent=1 // pred_check_branch
      %144 = sbr.rel (0) target = $region21
    $region20: #{transformer_lm_forward.6} parent=1 // pred_region
      _
    $region21: #{transformer_lm_forward.6} parent=1 // pred_fallthru
      _
    // Predicated region
    $region22: #{transformer_lm_forward.6} parent=1 // pred_check
      _
    $region23: #{transformer_lm_forward.6} parent=1 // pred_check_branch
      %146 = sbr.rel (0) target = $region25
    $region24: #{transformer_lm_forward.6} parent=1 // pred_region
      _
    $region25: #{transformer_lm_forward.6} parent=1 // pred_fallthru
      _
    %147 = vsyncpa [#allocation3], 1

// kernel: transformer_lm_forward.7
$region0: #{transformer_lm_forward.7}
  #allocation0 [shape = 'u32[]', space=smem, size = 0x4, offset = 0x4, fixed_abs, tag = 'smem constant byte address 0x4 - core index']
  #allocation1 [shape = 'u32[144,128]{1,0:T(1,128)}', space=vmem, size = 0x12000, scoped, tag = 'internal scratch']
  %s0 = inlined_call_operand.vmem [shape: f32[16,128], index: 0, kind: input, shape index: {}, may-alias: {0,8}]
  %s1 = inlined_call_operand.hbm [shape: f32[128,384], index: 1, kind: input, shape index: {}]
  %s2 = inlined_call_operand.vmem [shape: f32[1,384], index: 2, kind: input, shape index: {}]
  %s3 = inlined_call_operand.vmem [shape: f32[128,128], index: 3, kind: input, shape index: {}]
  %s4 = inlined_call_operand.vmem [shape: f32[1,128], index: 4, kind: input, shape index: {}]
  %s5 = inlined_call_operand.vmem [shape: f32[16,16], index: 5, kind: input, shape index: {}]
  %s6 = inlined_call_operand.vmem [shape: f32[1,128], index: 6, kind: input, shape index: {}]
  %s7 = inlined_call_operand.vmem [shape: f32[1,128], index: 7, kind: input, shape index: {}]
  %s8 = inlined_call_operand.vmem [shape: f32[16,128], index: 8, kind: output, shape index: {}, may-alias: {0,8}]
  %s9 = sld [smem:[#allocation0]]
  $region46: #{transformer_lm_forward.7} parent=0
    _
  %s11 = ssub.s32 1, %s9
  %s12 = scalar_select 0, %s11, %s9
  $region1: #{transformer_lm_forward.7} parent=0
    #allocation2 [shape = 'u8[196608]{0}', space=vmem, size = 0x30000, scoped, tag = 'input window, operand 1, single buffered']
    #allocation3 [shape = 's32[1]{0}', space=sflag, size = 0x4, scoped, tag = 'scoped memory for transformer_lm_forward.7']
    %13 = vsyncpa [#allocation3], 0
    // Predicated region
    $region2: #{transformer_lm_forward.7} parent=1 // pred_check
      _
    $region3: #{transformer_lm_forward.7} parent=1 // pred_check_branch
      %15 = sbr.rel (0) target = $region5
    $region4: #{transformer_lm_forward.7} parent=1 // pred_region
      _
    $region5: #{transformer_lm_forward.7} parent=1 // pred_fallthru
      _
    // Predicated region
    $region6: #{transformer_lm_forward.7} parent=1 // pred_check
      _
    $region7: #{transformer_lm_forward.7} parent=1 // pred_check_branch
      %17 = sbr.rel (0) target = $region9
    $region8: #{transformer_lm_forward.7} parent=1 // pred_region
      %s19 = ssub.s32 6144, 6144
      %20 = vsyncadd [#allocation3], %s19
      %s21 = sshll.u32 [#allocation2], 4
      %s22 = int_to_ptr.vmem [resolvable:$true] %s21
      %27 = dma.hbm_to_vmem [thread:$0]  %s1, 6144, %s22, [#allocation3], 384, 384, 24
    $region9: #{transformer_lm_forward.7} parent=1 // pred_fallthru
      _
    // Predicated region
    $region10: #{transformer_lm_forward.7} parent=1 // pred_check
      _
    $region11: #{transformer_lm_forward.7} parent=1 // pred_check_branch
      %29 = sbr.rel (0) target = $region13
    $region12: #{transformer_lm_forward.7} parent=1 // pred_region
      _
    $region13: #{transformer_lm_forward.7} parent=1 // pred_fallthru
      _
    // Predicated region
    $region14: #{transformer_lm_forward.7} parent=1 // pred_check
      _
    $region15: #{transformer_lm_forward.7} parent=1 // pred_check_branch
      %31 = sbr.rel (0) target = $region17
    $region16: #{transformer_lm_forward.7} parent=1 // pred_region
      _
    $region17: #{transformer_lm_forward.7} parent=1 // pred_fallthru
      _
    // Predicated region
    $region18: #{transformer_lm_forward.7} parent=1 // pred_check
      _
    $region19: #{transformer_lm_forward.7} parent=1 // pred_check_branch
      %33 = sbr.rel (0) target = $region21
    $region20: #{transformer_lm_forward.7} parent=1 // pred_region
      _
    $region21: #{transformer_lm_forward.7} parent=1 // pred_fallthru
      _
    // Predicated region
    $region22: #{transformer_lm_forward.7} parent=1 // pred_check
      _
    $region23: #{transformer_lm_forward.7} parent=1 // pred_check_branch
      %35 = sbr.rel (0) target = $region25
    $region24: #{transformer_lm_forward.7} parent=1 // pred_region
      _
    $region25: #{transformer_lm_forward.7} parent=1 // pred_fallthru
      _
    // Predicated region
    $region26: #{transformer_lm_forward.7} parent=1 // pred_check
      _
    $region27: #{transformer_lm_forward.7} parent=1 // pred_check_branch
      %37 = sbr.rel (0) target = $region29
    $region28: #{transformer_lm_forward.7} parent=1 // pred_region
      _
    $region29: #{transformer_lm_forward.7} parent=1 // pred_fallthru
      _
    // Predicated region
    $region30: #{transformer_lm_forward.7} parent=1 // pred_check
      _
    $region31: #{transformer_lm_forward.7} parent=1 // pred_check_branch
      %39 = sbr.rel (0) target = $region33
    $region32: #{transformer_lm_forward.7} parent=1 // pred_region
      _
    $region33: #{transformer_lm_forward.7} parent=1 // pred_fallthru
      _
    // Predicated region
    $region34: #{transformer_lm_forward.7} parent=1 // pred_check
      _
    $region35: #{transformer_lm_forward.7} parent=1 // pred_check_branch
      %41 = sbr.rel (0) target = $region37
    $region36: #{transformer_lm_forward.7} parent=1 // pred_region
      %42 = dma.done [#allocation3], 6144
    $region37: #{transformer_lm_forward.7} parent=1 // pred_fallthru
      _
    %v43 = vld [vmem:[%s0] sm:$0xff]
    %v44 = vld [vmem:[%s0 + $0x8] sm:$0xff]
    %v45 = vld [vmem:[#allocation2] sm:$0xff]
    %v46 = vld [vmem:[#allocation2 + $0x8] sm:$0xff]
    %v47 = vld [vmem:[#allocation2 + $0x10] sm:$0xff]
    %v48 = vld [vmem:[#allocation2 + $0x18] sm:$0xff]
    %v49 = vld [vmem:[#allocation2 + $0x20] sm:$0xff]
    %v50 = vld [vmem:[#allocation2 + $0x28] sm:$0xff]
    %v51 = vld [vmem:[#allocation2 + $0x30] sm:$0xff]
    %v52 = vld [vmem:[#allocation2 + $0x38] sm:$0xff]
    %v53 = vld [vmem:[#allocation2 + $0x40] sm:$0xff]
    %v54 = vld [vmem:[#allocation2 + $0x48] sm:$0xff]
    %v55 = vld [vmem:[#allocation2 + $0x50] sm:$0xff]
    %v56 = vld [vmem:[#allocation2 + $0x58] sm:$0xff]
    %v57 = vld [vmem:[#allocation2 + $0x60] sm:$0xff]
    %v58 = vld [vmem:[#allocation2 + $0x68] sm:$0xff]
    %v59 = vld [vmem:[#allocation2 + $0x70] sm:$0xff]
    %v60 = vld [vmem:[#allocation2 + $0x78] sm:$0xff]
    %v61 = vld [vmem:[#allocation2 + $0x80] sm:$0xff]
    %v62 = vld [vmem:[#allocation2 + $0x88] sm:$0xff]
    %v63 = vld [vmem:[#allocation2 + $0x90] sm:$0xff]
    %v64 = vld [vmem:[#allocation2 + $0x98] sm:$0xff]
    %v65 = vld [vmem:[#allocation2 + $0xa0] sm:$0xff]
    %v66 = vld [vmem:[#allocation2 + $0xa8] sm:$0xff]
    %v67 = vld [vmem:[#allocation2 + $0xb0] sm:$0xff]
    %v68 = vld [vmem:[#allocation2 + $0xb8] sm:$0xff]
    %v69 = vld [vmem:[#allocation2 + $0xc0] sm:$0xff]
    %v70 = vld [vmem:[#allocation2 + $0xc8] sm:$0xff]
    %v71 = vld [vmem:[#allocation2 + $0xd0] sm:$0xff]
    %v72 = vld [vmem:[#allocation2 + $0xd8] sm:$0xff]
    %v73 = vld [vmem:[#allocation2 + $0xe0] sm:$0xff]
    %v74 = vld [vmem:[#allocation2 + $0xe8] sm:$0xff]
    %v75 = vld [vmem:[#allocation2 + $0xf0] sm:$0xff]
    %v76 = vld [vmem:[#allocation2 + $0xf8] sm:$0xff]
    %v77 = vld [vmem:[#allocation2 + $0x100] sm:$0xff]
    %v78 = vld [vmem:[#allocation2 + $0x108] sm:$0xff]
    %v79 = vld [vmem:[#allocation2 + $0x110] sm:$0xff]
    %v80 = vld [vmem:[#allocation2 + $0x118] sm:$0xff]
    %v81 = vld [vmem:[#allocation2 + $0x120] sm:$0xff]
    %v82 = vld [vmem:[#allocation2 + $0x128] sm:$0xff]
    %v83 = vld [vmem:[#allocation2 + $0x130] sm:$0xff]
    %v84 = vld [vmem:[#allocation2 + $0x138] sm:$0xff]
    %v85 = vld [vmem:[#allocation2 + $0x140] sm:$0xff]
    %v86 = vld [vmem:[#allocation2 + $0x148] sm:$0xff]
    %v87 = vld [vmem:[#allocation2 + $0x150] sm:$0xff]
    %v88 = vld [vmem:[#allocation2 + $0x158] sm:$0xff]
    %v89 = vld [vmem:[#allocation2 + $0x160] sm:$0xff]
    %v90 = vld [vmem:[#allocation2 + $0x168] sm:$0xff]
    %v91 = vld [vmem:[#allocation2 + $0x170] sm:$0xff]
    %v92 = vld [vmem:[#allocation2 + $0x178] sm:$0xff]
    %v93 = vld [vmem:[%s2] sm:$0x7]
    %v95 = vlaneseq
    %v96 = vshrl.u32 %v95, 7
    %v97 = vsub.s32 0, %v96
    %v98 = vrot.slane %v93, %v97
    %v99 = vlaneseq
    %v100 = vshrl.u32 %v99, 7
    %v101 = vsub.s32 1, %v100
    %v102 = vrot.slane %v93, %v101
    %v103 = vlaneseq
    %v104 = vshrl.u32 %v103, 7
    %v105 = vsub.s32 2, %v104
    %v106 = vrot.slane %v93, %v105
    %110 = vmatprep.subr.mxu0 %v91
    %111 = vmatpush1.msra.mxu0 %v90
    %112 = vmatprep.subr.mxu0 %v88
    %113 = vmatpush1.msra.mxu0 %v87
    %114 = vmatprep.subr.mxu0 %v85
    %115 = vmatpush1.msra.mxu0 %v84
    %116 = vmatprep.subr.mxu0 %v82
    %117 = vmatpush1.msra.mxu0 %v81
    %118 = vmatprep.subr.mxu0 %v79
    %119 = vmatpush1.msra.mxu0 %v78
    %120 = vmatprep.subr.mxu0 %v76
    %121 = vmatpush1.msra.mxu0 %v75
    %122 = vmatprep.subr.mxu0 %v73
    %123 = vmatpush1.msra.mxu0 %v72
    %124 = vmatprep.subr.mxu0 %v70
    %125 = vmatpush1.msra.mxu0 %v69
    %126 = vmatprep.subr.mxu0 %v67
    %127 = vmatpush1.msra.mxu0 %v66
    %128 = vmatprep.subr.mxu0 %v64
    %129 = vmatpush1.msra.mxu0 %v63
    %130 = vmatprep.subr.mxu0 %v61
    %131 = vmatpush1.msra.mxu0 %v60
    %132 = vmatprep.subr.mxu0 %v58
    %133 = vmatpush1.msra.mxu0 %v57
    %134 = vmatprep.subr.mxu0 %v55
    %135 = vmatpush1.msra.mxu0 %v54
    %136 = vmatprep.subr.mxu0 %v52
    %137 = vmatpush1.msra.mxu0 %v51
    %138 = vmatprep.subr.mxu0 %v49
    %139 = vmatpush1.msra.mxu0 %v48
    %140 = vmatprep.subr.mxu0 %v46
    %141 = vmatpush1.msra.mxu0 %v45
    %142 = vmatprep.subr.mxu0 0.0
    %143 = vmatpush2.msra.mxu0 0.0
    %144 = vmatprep.subr.mxu0 0.0
    %145 = vmatpush2.msra.mxu0 0.0
    %146 = vmatprep.subr.mxu0 0.0
    %147 = vmatpush2.msra.mxu0 0.0
    %148 = vmatprep.subr.mxu0 0.0
    %149 = vmatpush2.msra.mxu0 0.0
    %150 = vmatprep.subr.mxu0 0.0
    %151 = vmatpush2.msra.mxu0 0.0
    %152 = vmatprep.subr.mxu0 0.0
    %153 = vmatpush2.msra.mxu0 0.0
    %154 = vmatprep.subr.mxu0 0.0
    %155 = vmatpush2.msra.mxu0 0.0
    %156 = vmatprep.subr.mxu0 0.0
    %157 = vmatpush2.msra.mxu0 0.0
    %158 = vmatprep.subr.mxu0 0.0
    %159 = vmatpush2.msra.mxu0 0.0
    %160 = vmatprep.subr.mxu0 0.0
    %161 = vmatpush2.msra.mxu0 0.0
    %162 = vmatprep.subr.mxu0 0.0
    %163 = vmatpush2.msra.mxu0 0.0
    %164 = vmatprep.subr.mxu0 0.0
    %165 = vmatpush2.msra.mxu0 0.0
    %166 = vmatprep.subr.mxu0 0.0
    %167 = vmatpush2.msra.mxu0 0.0
    %168 = vmatprep.subr.mxu0 0.0
    %169 = vmatpush2.msra.mxu0 0.0
    %170 = vmatprep.subr.mxu0 0.0
    %171 = vmatpush2.msra.mxu0 0.0
    %172 = vmatprep.subr.mxu0 0.0
    %173 = vmatpush2.msra.mxu0 0.0
    %174 = vmatprep.mubr.f32.mxu0 0.0
    %175 = vmatmul.mubr.f32.gmra.mxu0 %v43
    %v176 = vpop.f32.mrf.mxu0
    %v177 = vadd.f32 %v98, %v176
    %v178 = vpop.f32.mrf.mxu0
    %v179 = vadd.f32 %v102, %v178
    %180 = vmatprep.mubr.f32.mxu0 0.0
    %181 = vmatmul.mubr.f32.gmra.mxu0 %v44
    %v182 = vpop.f32.mrf.mxu0
    %v183 = vadd.f32 %v98, %v182
    %v184 = vpop.f32.mrf.mxu0
    %v185 = vadd.f32 %v102, %v184
    %186 = vdwg.mxu0
    %187 = vmatprep.subr.mxu0 0.0
    %188 = vmatpush1.msra.mxu0 %v92
    %189 = vmatprep.subr.mxu0 0.0
    %190 = vmatpush1.msra.mxu0 %v89
    %191 = vmatprep.subr.mxu0 0.0
    %192 = vmatpush1.msra.mxu0 %v86
    %193 = vmatprep.subr.mxu0 0.0
    %194 = vmatpush1.msra.mxu0 %v83
    %195 = vmatprep.subr.mxu0 0.0
    %196 = vmatpush1.msra.mxu0 %v80
    %197 = vmatprep.subr.mxu0 0.0
    %198 = vmatpush1.msra.mxu0 %v77
    %199 = vmatprep.subr.mxu0 0.0
    %200 = vmatpush1.msra.mxu0 %v74
    %201 = vmatprep.subr.mxu0 0.0
    %202 = vmatpush1.msra.mxu0 %v71
    %203 = vmatprep.subr.mxu0 0.0
    %204 = vmatpush1.msra.mxu0 %v68
    %205 = vmatprep.subr.mxu0 0.0
    %206 = vmatpush1.msra.mxu0 %v65
    %207 = vmatprep.subr.mxu0 0.0
    %208 = vmatpush1.msra.mxu0 %v62
    %209 = vmatprep.subr.mxu0 0.0
    %210 = vmatpush1.msra.mxu0 %v59
    %211 = vmatprep.subr.mxu0 0.0
    %212 = vmatpush1.msra.mxu0 %v56
    %213 = vmatprep.subr.mxu0 0.0
    %214 = vmatpush1.msra.mxu0 %v53
    %215 = vmatprep.subr.mxu0 0.0
    %216 = vmatpush1.msra.mxu0 %v50
    %217 = vmatprep.subr.mxu0 0.0
    %218 = vmatpush1.msra.mxu0 %v47
    %219 = vmatprep.subr.mxu0 0.0
    %220 = vmatpush2.msra.mxu0 0.0
    %221 = vmatprep.subr.mxu0 0.0
    %222 = vmatpush2.msra.mxu0 0.0
    %223 = vmatprep.subr.mxu0 0.0
    %224 = vmatpush2.msra.mxu0 0.0
    %225 = vmatprep.subr.mxu0 0.0
    %226 = vmatpush2.msra.mxu0 0.0
    %227 = vmatprep.subr.mxu0 0.0
    %228 = vmatpush2.msra.mxu0 0.0
    %229 = vmatprep.subr.mxu0 0.0
    %230 = vmatpush2.msra.mxu0 0.0
    %231 = vmatprep.subr.mxu0 0.0
    %232 = vmatpush2.msra.mxu0 0.0
    %233 = vmatprep.subr.mxu0 0.0
    %234 = vmatpush2.msra.mxu0 0.0
    %235 = vmatprep.subr.mxu0 0.0
    %236 = vmatpush2.msra.mxu0 0.0
    %237 = vmatprep.subr.mxu0 0.0
    %238 = vmatpush2.msra.mxu0 0.0
    %239 = vmatprep.subr.mxu0 0.0
    %240 = vmatpush2.msra.mxu0 0.0
    %241 = vmatprep.subr.mxu0 0.0
    %242 = vmatpush2.msra.mxu0 0.0
    %243 = vmatprep.subr.mxu0 0.0
    %244 = vmatpush2.msra.mxu0 0.0
    %245 = vmatprep.subr.mxu0 0.0
    %246 = vmatpush2.msra.mxu0 0.0
    %247 = vmatprep.subr.mxu0 0.0
    %248 = vmatpush2.msra.mxu0 0.0
    %249 = vmatprep.subr.mxu0 0.0
    %250 = vmatpush2.msra.mxu0 0.0
    %251 = vmatprep.mubr.f32.mxu0 0.0
    %252 = vmatmul.mubr.f32.gmra.mxu0 %v43
    %v253 = vpop.f32.mrf.mxu0
    %v254 = vadd.f32 %v106, %v253
    %v255 = vpop.f32.mrf.mxu0
    %256 = vmatprep.mubr.f32.mxu0 0.0
    %257 = vmatmul.mubr.f32.gmra.mxu0 %v44
    %v258 = vpop.f32.mrf.mxu0
    %v259 = vadd.f32 %v106, %v258
    %v260 = vpop.f32.mrf.mxu0
    %261 = vdwg.mxu0
    %v262 = vld [vmem:[%s5] sm:$0xff]
    %v263 = vld [vmem:[%s5 + $0x8] sm:$0xff]
    %vm264 = vcmask 261120
    %v266 = vsel %vm264, %v177, 0
    %v269 = vsel %vm264, %v183, 0
    %v272 = vsel %vm264, %v179, 0
    %v275 = vsel %vm264, %v185, 0
    %277 = vmatprep.subr.mxu0 0.0
    %278 = vmatpush1.xpose.msra.mxu0 0.0
    %279 = vmatprep.subr.mxu0 0.0
    %280 = vmatpush1.xpose.msra.mxu0 0.0
    %281 = vmatprep.subr.mxu0 0.0
    %282 = vmatpush1.xpose.msra.mxu0 0.0
    %283 = vmatprep.subr.mxu0 0.0
    %284 = vmatpush1.xpose.msra.mxu0 0.0
    %285 = vmatprep.subr.mxu0 0.0
    %286 = vmatpush1.xpose.msra.mxu0 0.0
    %287 = vmatprep.subr.mxu0 0.0
    %288 = vmatpush1.xpose.msra.mxu0 0.0
    %289 = vmatprep.subr.mxu0 0.0
    %290 = vmatpush1.xpose.msra.mxu0 0.0
    %291 = vmatprep.subr.mxu0 0.0
    %292 = vmatpush1.xpose.msra.mxu0 0.0
    %293 = vmatprep.subr.mxu0 0.0
    %294 = vmatpush1.xpose.msra.mxu0 0.0
    %295 = vmatprep.subr.mxu0 0.0
    %296 = vmatpush1.xpose.msra.mxu0 0.0
    %297 = vmatprep.subr.mxu0 0.0
    %298 = vmatpush1.xpose.msra.mxu0 0.0
    %299 = vmatprep.subr.mxu0 0.0
    %300 = vmatpush1.xpose.msra.mxu0 0.0
    %301 = vmatprep.subr.mxu0 0.0
    %302 = vmatpush1.xpose.msra.mxu0 0.0
    %303 = vmatprep.subr.mxu0 0.0
    %304 = vmatpush1.xpose.msra.mxu0 0.0
    %305 = vmatprep.subr.mxu0 0.0
    %306 = vmatpush1.xpose.msra.mxu0 %v275
    %307 = vmatprep.subr.mxu0 0.0
    %308 = vmatpush1.xpose.msra.mxu0 %v272
    %309 = vmatprep.subr.mxu0 0.0
    %310 = vmatpush2.xpose.msra.mxu0 0.0
    %311 = vmatprep.subr.mxu0 0.0
    %312 = vmatpush2.xpose.msra.mxu0 0.0
    %313 = vmatprep.subr.mxu0 0.0
    %314 = vmatpush2.xpose.msra.mxu0 0.0
    %315 = vmatprep.subr.mxu0 0.0
    %316 = vmatpush2.xpose.msra.mxu0 0.0
    %317 = vmatprep.subr.mxu0 0.0
    %318 = vmatpush2.xpose.msra.mxu0 0.0
    %319 = vmatprep.subr.mxu0 0.0
    %320 = vmatpush2.xpose.msra.mxu0 0.0
    %321 = vmatprep.subr.mxu0 0.0
    %322 = vmatpush2.xpose.msra.mxu0 0.0
    %323 = vmatprep.subr.mxu0 0.0
    %324 = vmatpush2.xpose.msra.mxu0 0.0
    %325 = vmatprep.subr.mxu0 0.0
    %326 = vmatpush2.xpose.msra.mxu0 0.0
    %327 = vmatprep.subr.mxu0 0.0
    %328 = vmatpush2.xpose.msra.mxu0 0.0
    %329 = vmatprep.subr.mxu0 0.0
    %330 = vmatpush2.xpose.msra.mxu0 0.0
    %331 = vmatprep.subr.mxu0 0.0
    %332 = vmatpush2.xpose.msra.mxu0 0.0
    %333 = vmatprep.subr.mxu0 0.0
    %334 = vmatpush2.xpose.msra.mxu0 0.0
    %335 = vmatprep.subr.mxu0 0.0
    %336 = vmatpush2.xpose.msra.mxu0 0.0
    %337 = vmatprep.subr.mxu0 0.0
    %338 = vmatpush2.xpose.msra.mxu0 0.0
    %339 = vmatprep.subr.mxu0 0.0
    %340 = vmatpush2.xpose.msra.mxu0 0.0
    %341 = vmatprep.mubr.f32.mxu0 0.0
    %342 = vmatmul.mubr.f32.gmra.mxu0 %v266
    %v343 = vpop.f32.mrf.mxu0
    %v344 = vadd.f32 0.0, %v343
    %v345 = vpop.f32.mrf.mxu0
    %346 = vmatprep.mubr.f32.mxu0 0.0
    %347 = vmatmul.mubr.f32.gmra.mxu0 %v269
    %v348 = vpop.f32.mrf.mxu0
    %v349 = vadd.f32 0.0, %v348
    %v350 = vpop.f32.mrf.mxu0
    %351 = vdwg.mxu0
    %v352 = vmul.f32 %v344, 0.17677669
    %v353 = vmul.f32 %v349, 0.17677669
    %v354 = vadd.f32 %v352, %v262
    %v355 = vadd.f32 %v353, %v263
    %vm356 = vcmask 130048
    %v357 = vsel %vm356, %v354, -inf
    %358 = vmax.xlane.f32.xlu0 %v357
    %v359 = vpop.xlane.xlu0 %358
    %v360 = vsel %vm356, %v355, -inf
    %361 = vmax.xlane.f32.xlu0 %v360
    %v362 = vpop.xlane.xlu0 %361
    %v363 = vsub.f32 %v354, %v359
    %v364 = vsub.f32 %v355, %v362
    %v365 = vmul.f32 %v363, 1.442695
    %v366 = vpow.pop %v365
    %v367 = vmul.f32 %v364, 1.442695
    %v368 = vpow.pop %v367
    %v369 = vsel %vm356, %v366, 0.0
    %370 = vadd.xlane.f32.xlu0 %v369
    %v371 = vpop.xlane.xlu0 %370
    %v372 = vsel %vm356, %v368, 0.0
    %373 = vadd.xlane.f32.xlu0 %v372
    %v374 = vpop.xlane.xlu0 %373
    %v375 = vrcp.pop %v371
    %v376 = vmul.f32 %v366, %v375
    %v377 = vrcp.pop %v374
    %v378 = vmul.f32 %v368, %v377
    %v380 = vsel %vm356, %v376, 0
    %v383 = vsel %vm356, %v378, 0
    %385 = vmatprep.subr.mxu0 0.0
    %386 = vmatpush1.msra.mxu0 0.0
    %387 = vmatprep.subr.mxu0 0.0
    %388 = vmatpush1.msra.mxu0 0.0
    %389 = vmatprep.subr.mxu0 0.0
    %390 = vmatpush1.msra.mxu0 0.0
    %391 = vmatprep.subr.mxu0 0.0
    %392 = vmatpush1.msra.mxu0 0.0
    %393 = vmatprep.subr.mxu0 0.0
    %394 = vmatpush1.msra.mxu0 0.0
    %395 = vmatprep.subr.mxu0 0.0
    %396 = vmatpush1.msra.mxu0 0.0
    %397 = vmatprep.subr.mxu0 0.0
    %398 = vmatpush1.msra.mxu0 0.0
    %399 = vmatprep.subr.mxu0 0.0
    %400 = vmatpush1.msra.mxu0 0.0
    %401 = vmatprep.subr.mxu0 0.0
    %402 = vmatpush1.msra.mxu0 0.0
    %403 = vmatprep.subr.mxu0 0.0
    %404 = vmatpush1.msra.mxu0 0.0
    %405 = vmatprep.subr.mxu0 0.0
    %406 = vmatpush1.msra.mxu0 0.0
    %407 = vmatprep.subr.mxu0 0.0
    %408 = vmatpush1.msra.mxu0 0.0
    %409 = vmatprep.subr.mxu0 0.0
    %410 = vmatpush1.msra.mxu0 0.0
    %411 = vmatprep.subr.mxu0 0.0
    %412 = vmatpush1.msra.mxu0 0.0
    %413 = vmatprep.subr.mxu0 0.0
    %414 = vmatpush1.msra.mxu0 %v259
    %415 = vmatprep.subr.mxu0 0.0
    %416 = vmatpush1.msra.mxu0 %v254
    %417 = vmatprep.subr.mxu0 0.0
    %418 = vmatpush2.msra.mxu0 0.0
    %419 = vmatprep.subr.mxu0 0.0
    %420 = vmatpush2.msra.mxu0 0.0
    %421 = vmatprep.subr.mxu0 0.0
    %422 = vmatpush2.msra.mxu0 0.0
    %423 = vmatprep.subr.mxu0 0.0
    %424 = vmatpush2.msra.mxu0 0.0
    %425 = vmatprep.subr.mxu0 0.0
    %426 = vmatpush2.msra.mxu0 0.0
    %427 = vmatprep.subr.mxu0 0.0
    %428 = vmatpush2.msra.mxu0 0.0
    %429 = vmatprep.subr.mxu0 0.0
    %430 = vmatpush2.msra.mxu0 0.0
    %431 = vmatprep.subr.mxu0 0.0
    %432 = vmatpush2.msra.mxu0 0.0
    %433 = vmatprep.subr.mxu0 0.0
    %434 = vmatpush2.msra.mxu0 0.0
    %435 = vmatprep.subr.mxu0 0.0
    %436 = vmatpush2.msra.mxu0 0.0
    %437 = vmatprep.subr.mxu0 0.0
    %438 = vmatpush2.msra.mxu0 0.0
    %439 = vmatprep.subr.mxu0 0.0
    %440 = vmatpush2.msra.mxu0 0.0
    %441 = vmatprep.subr.mxu0 0.0
    %442 = vmatpush2.msra.mxu0 0.0
    %443 = vmatprep.subr.mxu0 0.0
    %444 = vmatpush2.msra.mxu0 0.0
    %445 = vmatprep.subr.mxu0 0.0
    %446 = vmatpush2.msra.mxu0 0.0
    %447 = vmatprep.subr.mxu0 0.0
    %448 = vmatpush2.msra.mxu0 0.0
    %449 = vmatprep.mubr.f32.mxu0 0.0
    %450 = vmatmul.mubr.f32.gmra.mxu0 %v380
    %v451 = vpop.f32.mrf.mxu0
    %v452 = vadd.f32 0.0, %v451
    %v453 = vpop.f32.mrf.mxu0
    %454 = vmatprep.mubr.f32.mxu0 0.0
    %455 = vmatmul.mubr.f32.gmra.mxu0 %v383
    %v456 = vpop.f32.mrf.mxu0
    %v457 = vadd.f32 0.0, %v456
    %v458 = vpop.f32.mrf.mxu0
    %459 = vdwg.mxu0
    %v460 = vld [vmem:[%s3] sm:$0xff]
    %v461 = vld [vmem:[%s3 + $0x8] sm:$0xff]
    %v462 = vld [vmem:[%s3 + $0x10] sm:$0xff]
    %v463 = vld [vmem:[%s3 + $0x18] sm:$0xff]
    %464 = vrot.lane.b32.xlu0 %v177, 96
    %v465 = vpop.permute.xlu0 %464
    %466 = vrot.lane.b32.xlu0 %v183, 96
    %v467 = vpop.permute.xlu0 %466
    %468 = vrot.lane.b32.xlu0 %v179, 96
    %v469 = vpop.permute.xlu0 %468
    %470 = vrot.lane.b32.xlu0 %v185, 96
    %v471 = vpop.permute.xlu0 %470
    %v472 = vsel %vm264, %v465, 0
    %v474 = vsel %vm264, %v467, 0
    %v476 = vsel %vm264, %v469, 0
    %v478 = vsel %vm264, %v471, 0
    %480 = vmatprep.subr.mxu0 0.0
    %481 = vmatpush1.xpose.msra.mxu0 0.0
    %482 = vmatprep.subr.mxu0 0.0
    %483 = vmatpush1.xpose.msra.mxu0 0.0
    %484 = vmatprep.subr.mxu0 0.0
    %485 = vmatpush1.xpose.msra.mxu0 0.0
    %486 = vmatprep.subr.mxu0 0.0
    %487 = vmatpush1.xpose.msra.mxu0 0.0
    %488 = vmatprep.subr.mxu0 0.0
    %489 = vmatpush1.xpose.msra.mxu0 0.0
    %490 = vmatprep.subr.mxu0 0.0
    %491 = vmatpush1.xpose.msra.mxu0 0.0
    %492 = vmatprep.subr.mxu0 0.0
    %493 = vmatpush1.xpose.msra.mxu0 0.0
    %494 = vmatprep.subr.mxu0 0.0
    %495 = vmatpush1.xpose.msra.mxu0 0.0
    %496 = vmatprep.subr.mxu0 0.0
    %497 = vmatpush1.xpose.msra.mxu0 0.0
    %498 = vmatprep.subr.mxu0 0.0
    %499 = vmatpush1.xpose.msra.mxu0 0.0
    %500 = vmatprep.subr.mxu0 0.0
    %501 = vmatpush1.xpose.msra.mxu0 0.0
    %502 = vmatprep.subr.mxu0 0.0
    %503 = vmatpush1.xpose.msra.mxu0 0.0
    %504 = vmatprep.subr.mxu0 0.0
    %505 = vmatpush1.xpose.msra.mxu0 0.0
    %506 = vmatprep.subr.mxu0 0.0
    %507 = vmatpush1.xpose.msra.mxu0 0.0
    %508 = vmatprep.subr.mxu0 0.0
    %509 = vmatpush1.xpose.msra.mxu0 %v478
    %510 = vmatprep.subr.mxu0 0.0
    %511 = vmatpush1.xpose.msra.mxu0 %v476
    %512 = vmatprep.subr.mxu0 0.0
    %513 = vmatpush2.xpose.msra.mxu0 0.0
    %514 = vmatprep.subr.mxu0 0.0
    %515 = vmatpush2.xpose.msra.mxu0 0.0
    %516 = vmatprep.subr.mxu0 0.0
    %517 = vmatpush2.xpose.msra.mxu0 0.0
    %518 = vmatprep.subr.mxu0 0.0
    %519 = vmatpush2.xpose.msra.mxu0 0.0
    %520 = vmatprep.subr.mxu0 0.0
    %521 = vmatpush2.xpose.msra.mxu0 0.0
    %522 = vmatprep.subr.mxu0 0.0
    %523 = vmatpush2.xpose.msra.mxu0 0.0
    %524 = vmatprep.subr.mxu0 0.0
    %525 = vmatpush2.xpose.msra.mxu0 0.0
    %526 = vmatprep.subr.mxu0 0.0
    %527 = vmatpush2.xpose.msra.mxu0 0.0
    %528 = vmatprep.subr.mxu0 0.0
    %529 = vmatpush2.xpose.msra.mxu0 0.0
    %530 = vmatprep.subr.mxu0 0.0
    %531 = vmatpush2.xpose.msra.mxu0 0.0
    %532 = vmatprep.subr.mxu0 0.0
    %533 = vmatpush2.xpose.msra.mxu0 0.0
    %534 = vmatprep.subr.mxu0 0.0
    %535 = vmatpush2.xpose.msra.mxu0 0.0
    %536 = vmatprep.subr.mxu0 0.0
    %537 = vmatpush2.xpose.msra.mxu0 0.0
    %538 = vmatprep.subr.mxu0 0.0
    %539 = vmatpush2.xpose.msra.mxu0 0.0
    %540 = vmatprep.subr.mxu0 0.0
    %541 = vmatpush2.xpose.msra.mxu0 0.0
    %542 = vmatprep.subr.mxu0 0.0
    %543 = vmatpush2.xpose.msra.mxu0 0.0
    %544 = vmatprep.mubr.f32.mxu0 0.0
    %545 = vmatmul.mubr.f32.gmra.mxu0 %v472
    %v546 = vpop.f32.mrf.mxu0
    %v547 = vadd.f32 0.0, %v546
    %v548 = vpop.f32.mrf.mxu0
    %549 = vmatprep.mubr.f32.mxu0 0.0
    %550 = vmatmul.mubr.f32.gmra.mxu0 %v474
    %v551 = vpop.f32.mrf.mxu0
    %v552 = vadd.f32 0.0, %v551
    %v553 = vpop.f32.mrf.mxu0
    %554 = vdwg.mxu0
    %v555 = vmul.f32 %v547, 0.17677669
    %v556 = vmul.f32 %v552, 0.17677669
    %v557 = vadd.f32 %v555, %v262
    %v558 = vadd.f32 %v556, %v263
    %v559 = vsel %vm356, %v557, -inf
    %560 = vmax.xlane.f32.xlu0 %v559
    %v561 = vpop.xlane.xlu0 %560
    %v562 = vsel %vm356, %v558, -inf
    %563 = vmax.xlane.f32.xlu0 %v562
    %v564 = vpop.xlane.xlu0 %563
    %v565 = vsub.f32 %v557, %v561
    %v566 = vsub.f32 %v558, %v564
    %v567 = vmul.f32 %v565, 1.442695
    %v568 = vpow.pop %v567
    %v569 = vmul.f32 %v566, 1.442695
    %v570 = vpow.pop %v569
    %v571 = vsel %vm356, %v568, 0.0
    %572 = vadd.xlane.f32.xlu0 %v571
    %v573 = vpop.xlane.xlu0 %572
    %v574 = vsel %vm356, %v570, 0.0
    %575 = vadd.xlane.f32.xlu0 %v574
    %v576 = vpop.xlane.xlu0 %575
    %v577 = vrcp.pop %v573
    %v578 = vmul.f32 %v568, %v577
    %v579 = vrcp.pop %v576
    %v580 = vmul.f32 %v570, %v579
    %583 = vrot.lane.b32.xlu0 %v254, 96
    %v584 = vpop.permute.xlu0 %583
    %585 = vrot.lane.b32.xlu0 %v259, 96
    %v586 = vpop.permute.xlu0 %585
    %v590 = vsel %vm356, %v578, 0
    %v593 = vsel %vm356, %v580, 0
    %595 = vmatprep.subr.mxu0 0.0
    %596 = vmatpush1.msra.mxu0 0.0
    %597 = vmatprep.subr.mxu0 0.0
    %598 = vmatpush1.msra.mxu0 0.0
    %599 = vmatprep.subr.mxu0 0.0
    %600 = vmatpush1.msra.mxu0 0.0
    %601 = vmatprep.subr.mxu0 0.0
    %602 = vmatpush1.msra.mxu0 0.0
    %603 = vmatprep.subr.mxu0 0.0
    %604 = vmatpush1.msra.mxu0 0.0
    %605 = vmatprep.subr.mxu0 0.0
    %606 = vmatpush1.msra.mxu0 0.0
    %607 = vmatprep.subr.mxu0 0.0
    %608 = vmatpush1.msra.mxu0 0.0
    %609 = vmatprep.subr.mxu0 0.0
    %610 = vmatpush1.msra.mxu0 0.0
    %611 = vmatprep.subr.mxu0 0.0
    %612 = vmatpush1.msra.mxu0 0.0
    %613 = vmatprep.subr.mxu0 0.0
    %614 = vmatpush1.msra.mxu0 0.0
    %615 = vmatprep.subr.mxu0 0.0
    %616 = vmatpush1.msra.mxu0 0.0
    %617 = vmatprep.subr.mxu0 0.0
    %618 = vmatpush1.msra.mxu0 0.0
    %619 = vmatprep.subr.mxu0 0.0
    %620 = vmatpush1.msra.mxu0 0.0
    %621 = vmatprep.subr.mxu0 0.0
    %622 = vmatpush1.msra.mxu0 0.0
    %623 = vmatprep.subr.mxu0 0.0
    %624 = vmatpush1.msra.mxu0 %v586
    %625 = vmatprep.subr.mxu0 0.0
    %626 = vmatpush1.msra.mxu0 %v584
    %627 = vmatprep.subr.mxu0 0.0
    %628 = vmatpush2.msra.mxu0 0.0
    %629 = vmatprep.subr.mxu0 0.0
    %630 = vmatpush2.msra.mxu0 0.0
    %631 = vmatprep.subr.mxu0 0.0
    %632 = vmatpush2.msra.mxu0 0.0
    %633 = vmatprep.subr.mxu0 0.0
    %634 = vmatpush2.msra.mxu0 0.0
    %635 = vmatprep.subr.mxu0 0.0
    %636 = vmatpush2.msra.mxu0 0.0
    %637 = vmatprep.subr.mxu0 0.0
    %638 = vmatpush2.msra.mxu0 0.0
    %639 = vmatprep.subr.mxu0 0.0
    %640 = vmatpush2.msra.mxu0 0.0
    %641 = vmatprep.subr.mxu0 0.0
    %642 = vmatpush2.msra.mxu0 0.0
    %643 = vmatprep.subr.mxu0 0.0
    %644 = vmatpush2.msra.mxu0 0.0
    %645 = vmatprep.subr.mxu0 0.0
    %646 = vmatpush2.msra.mxu0 0.0
    %647 = vmatprep.subr.mxu0 0.0
    %648 = vmatpush2.msra.mxu0 0.0
    %649 = vmatprep.subr.mxu0 0.0
    %650 = vmatpush2.msra.mxu0 0.0
    %651 = vmatprep.subr.mxu0 0.0
    %652 = vmatpush2.msra.mxu0 0.0
    %653 = vmatprep.subr.mxu0 0.0
    %654 = vmatpush2.msra.mxu0 0.0
    %655 = vmatprep.subr.mxu0 0.0
    %656 = vmatpush2.msra.mxu0 0.0
    %657 = vmatprep.subr.mxu0 0.0
    %658 = vmatpush2.msra.mxu0 0.0
    %659 = vmatprep.mubr.f32.mxu0 0.0
    %660 = vmatmul.mubr.f32.gmra.mxu0 %v590
    %v661 = vpop.f32.mrf.mxu0
    %v662 = vadd.f32 0.0, %v661
    %v663 = vpop.f32.mrf.mxu0
    %664 = vmatprep.mubr.f32.mxu0 0.0
    %665 = vmatmul.mubr.f32.gmra.mxu0 %v593
    %v666 = vpop.f32.mrf.mxu0
    %v667 = vadd.f32 0.0, %v666
    %v668 = vpop.f32.mrf.mxu0
    %669 = vdwg.mxu0
    %v670 = vld [vmem:[%s3 + $0x20] sm:$0xff]
    %v671 = vld [vmem:[%s3 + $0x28] sm:$0xff]
    %v672 = vld [vmem:[%s3 + $0x30] sm:$0xff]
    %v673 = vld [vmem:[%s3 + $0x38] sm:$0xff]
    %v675 = vsel %vm264, %v662, 0
    %v678 = vsel %vm264, %v667, 0
    %680 = vmatprep.subr.mxu0 0.0
    %681 = vmatpush1.msra.mxu0 0.0
    %682 = vmatprep.subr.mxu0 0.0
    %683 = vmatpush1.msra.mxu0 0.0
    %684 = vmatprep.subr.mxu0 0.0
    %685 = vmatpush1.msra.mxu0 0.0
    %686 = vmatprep.subr.mxu0 0.0
    %687 = vmatpush1.msra.mxu0 0.0
    %688 = vmatprep.subr.mxu0 0.0
    %689 = vmatpush1.msra.mxu0 0.0
    %690 = vmatprep.subr.mxu0 0.0
    %691 = vmatpush1.msra.mxu0 0.0
    %692 = vmatprep.subr.mxu0 0.0
    %693 = vmatpush1.msra.mxu0 0.0
    %694 = vmatprep.subr.mxu0 0.0
    %695 = vmatpush1.msra.mxu0 0.0
    %696 = vmatprep.subr.mxu0 0.0
    %697 = vmatpush1.msra.mxu0 0.0
    %698 = vmatprep.subr.mxu0 0.0
    %699 = vmatpush1.msra.mxu0 0.0
    %700 = vmatprep.subr.mxu0 0.0
    %701 = vmatpush1.msra.mxu0 0.0
    %702 = vmatprep.subr.mxu0 0.0
    %703 = vmatpush1.msra.mxu0 0.0
    %704 = vmatprep.subr.mxu0 0.0
    %705 = vmatpush1.msra.mxu0 %v673
    %706 = vmatprep.subr.mxu0 0.0
    %707 = vmatpush1.msra.mxu0 %v672
    %708 = vmatprep.subr.mxu0 0.0
    %709 = vmatpush1.msra.mxu0 %v671
    %710 = vmatprep.subr.mxu0 0.0
    %711 = vmatpush1.msra.mxu0 %v670
    %712 = vmatprep.subr.mxu0 0.0
    %713 = vmatpush2.msra.mxu0 0.0
    %714 = vmatprep.subr.mxu0 0.0
    %715 = vmatpush2.msra.mxu0 0.0
    %716 = vmatprep.subr.mxu0 0.0
    %717 = vmatpush2.msra.mxu0 0.0
    %718 = vmatprep.subr.mxu0 0.0
    %719 = vmatpush2.msra.mxu0 0.0
    %720 = vmatprep.subr.mxu0 0.0
    %721 = vmatpush2.msra.mxu0 0.0
    %722 = vmatprep.subr.mxu0 0.0
    %723 = vmatpush2.msra.mxu0 0.0
    %724 = vmatprep.subr.mxu0 0.0
    %725 = vmatpush2.msra.mxu0 0.0
    %726 = vmatprep.subr.mxu0 0.0
    %727 = vmatpush2.msra.mxu0 0.0
    %728 = vmatprep.subr.mxu0 0.0
    %729 = vmatpush2.msra.mxu0 0.0
    %730 = vmatprep.subr.mxu0 0.0
    %731 = vmatpush2.msra.mxu0 0.0
    %732 = vmatprep.subr.mxu0 0.0
    %733 = vmatpush2.msra.mxu0 0.0
    %734 = vmatprep.subr.mxu0 0.0
    %735 = vmatpush2.msra.mxu0 0.0
    %736 = vmatprep.subr.mxu0 0.0
    %737 = vmatpush2.msra.mxu0 0.0
    %738 = vmatprep.subr.mxu0 0.0
    %739 = vmatpush2.msra.mxu0 0.0
    %740 = vmatprep.subr.mxu0 0.0
    %741 = vmatpush2.msra.mxu0 0.0
    %742 = vmatprep.subr.mxu0 0.0
    %743 = vmatpush2.msra.mxu0 0.0
    %744 = vmatprep.mubr.f32.mxu0 0.0
    %745 = vmatmul.mubr.f32.gmra.mxu0 %v675
    %v746 = vpop.f32.mrf.mxu0
    %v747 = vadd.f32 0.0, %v746
    %v748 = vpop.f32.mrf.mxu0
    %749 = vmatprep.mubr.f32.mxu0 0.0
    %750 = vmatmul.mubr.f32.gmra.mxu0 %v678
    %v751 = vpop.f32.mrf.mxu0
    %v752 = vadd.f32 0.0, %v751
    %v753 = vpop.f32.mrf.mxu0
    %754 = vdwg.mxu0
    %v756 = vsel %vm264, %v452, 0
    %v759 = vsel %vm264, %v457, 0
    %761 = vmatprep.subr.mxu0 0.0
    %762 = vmatpush1.msra.mxu0 0.0
    %763 = vmatprep.subr.mxu0 0.0
    %764 = vmatpush1.msra.mxu0 0.0
    %765 = vmatprep.subr.mxu0 0.0
    %766 = vmatpush1.msra.mxu0 0.0
    %767 = vmatprep.subr.mxu0 0.0
    %768 = vmatpush1.msra.mxu0 0.0
    %769 = vmatprep.subr.mxu0 0.0
    %770 = vmatpush1.msra.mxu0 0.0
    %771 = vmatprep.subr.mxu0 0.0
    %772 = vmatpush1.msra.mxu0 0.0
    %773 = vmatprep.subr.mxu0 0.0
    %774 = vmatpush1.msra.mxu0 0.0
    %775 = vmatprep.subr.mxu0 0.0
    %776 = vmatpush1.msra.mxu0 0.0
    %777 = vmatprep.subr.mxu0 0.0
    %778 = vmatpush1.msra.mxu0 0.0
    %779 = vmatprep.subr.mxu0 0.0
    %780 = vmatpush1.msra.mxu0 0.0
    %781 = vmatprep.subr.mxu0 0.0
    %782 = vmatpush1.msra.mxu0 0.0
    %783 = vmatprep.subr.mxu0 0.0
    %784 = vmatpush1.msra.mxu0 0.0
    %785 = vmatprep.subr.mxu0 0.0
    %786 = vmatpush1.msra.mxu0 %v463
    %787 = vmatprep.subr.mxu0 0.0
    %788 = vmatpush1.msra.mxu0 %v462
    %789 = vmatprep.subr.mxu0 0.0
    %790 = vmatpush1.msra.mxu0 %v461
    %791 = vmatprep.subr.mxu0 0.0
    %792 = vmatpush1.msra.mxu0 %v460
    %793 = vmatprep.subr.mxu0 0.0
    %794 = vmatpush2.msra.mxu0 0.0
    %795 = vmatprep.subr.mxu0 0.0
    %796 = vmatpush2.msra.mxu0 0.0
    %797 = vmatprep.subr.mxu0 0.0
    %798 = vmatpush2.msra.mxu0 0.0
    %799 = vmatprep.subr.mxu0 0.0
    %800 = vmatpush2.msra.mxu0 0.0
    %801 = vmatprep.subr.mxu0 0.0
    %802 = vmatpush2.msra.mxu0 0.0
    %803 = vmatprep.subr.mxu0 0.0
    %804 = vmatpush2.msra.mxu0 0.0
    %805 = vmatprep.subr.mxu0 0.0
    %806 = vmatpush2.msra.mxu0 0.0
    %807 = vmatprep.subr.mxu0 0.0
    %808 = vmatpush2.msra.mxu0 0.0
    %809 = vmatprep.subr.mxu0 0.0
    %810 = vmatpush2.msra.mxu0 0.0
    %811 = vmatprep.subr.mxu0 0.0
    %812 = vmatpush2.msra.mxu0 0.0
    %813 = vmatprep.subr.mxu0 0.0
    %814 = vmatpush2.msra.mxu0 0.0
    %815 = vmatprep.subr.mxu0 0.0
    %816 = vmatpush2.msra.mxu0 0.0
    %817 = vmatprep.subr.mxu0 0.0
    %818 = vmatpush2.msra.mxu0 0.0
    %819 = vmatprep.subr.mxu0 0.0
    %820 = vmatpush2.msra.mxu0 0.0
    %821 = vmatprep.subr.mxu0 0.0
    %822 = vmatpush2.msra.mxu0 0.0
    %823 = vmatprep.subr.mxu0 0.0
    %824 = vmatpush2.msra.mxu0 0.0
    %825 = vmatprep.mubr.f32.mxu0 0.0
    %826 = vmatmul.mubr.f32.gmra.mxu0 %v756
    %v827 = vpop.f32.mrf.mxu0
    %v828 = vadd.f32 %v747, %v827
    %v829 = vpop.f32.mrf.mxu0
    %830 = vmatprep.mubr.f32.mxu0 0.0
    %831 = vmatmul.mubr.f32.gmra.mxu0 %v759
    %v832 = vpop.f32.mrf.mxu0
    %v833 = vadd.f32 %v752, %v832
    %v834 = vpop.f32.mrf.mxu0
    %835 = vdwg.mxu0
    %836 = vrot.lane.b32.xlu0 %v177, 64
    %v837 = vpop.permute.xlu0 %836
    %838 = vrot.lane.b32.xlu0 %v183, 64
    %v839 = vpop.permute.xlu0 %838
    %840 = vrot.lane.b32.xlu0 %v179, 64
    %v841 = vpop.permute.xlu0 %840
    %842 = vrot.lane.b32.xlu0 %v185, 64
    %v843 = vpop.permute.xlu0 %842
    %v844 = vsel %vm264, %v837, 0
    %v846 = vsel %vm264, %v839, 0
    %v848 = vsel %vm264, %v841, 0
    %v850 = vsel %vm264, %v843, 0
    %852 = vmatprep.subr.mxu0 0.0
    %853 = vmatpush1.xpose.msra.mxu0 0.0
    %854 = vmatprep.subr.mxu0 0.0
    %855 = vmatpush1.xpose.msra.mxu0 0.0
    %856 = vmatprep.subr.mxu0 0.0
    %857 = vmatpush1.xpose.msra.mxu0 0.0
    %858 = vmatprep.subr.mxu0 0.0
    %859 = vmatpush1.xpose.msra.mxu0 0.0
    %860 = vmatprep.subr.mxu0 0.0
    %861 = vmatpush1.xpose.msra.mxu0 0.0
    %862 = vmatprep.subr.mxu0 0.0
    %863 = vmatpush1.xpose.msra.mxu0 0.0
    %864 = vmatprep.subr.mxu0 0.0
    %865 = vmatpush1.xpose.msra.mxu0 0.0
    %866 = vmatprep.subr.mxu0 0.0
    %867 = vmatpush1.xpose.msra.mxu0 0.0
    %868 = vmatprep.subr.mxu0 0.0
    %869 = vmatpush1.xpose.msra.mxu0 0.0
    %870 = vmatprep.subr.mxu0 0.0
    %871 = vmatpush1.xpose.msra.mxu0 0.0
    %872 = vmatprep.subr.mxu0 0.0
    %873 = vmatpush1.xpose.msra.mxu0 0.0
    %874 = vmatprep.subr.mxu0 0.0
    %875 = vmatpush1.xpose.msra.mxu0 0.0
    %876 = vmatprep.subr.mxu0 0.0
    %877 = vmatpush1.xpose.msra.mxu0 0.0
    %878 = vmatprep.subr.mxu0 0.0
    %879 = vmatpush1.xpose.msra.mxu0 0.0
    %880 = vmatprep.subr.mxu0 0.0
    %881 = vmatpush1.xpose.msra.mxu0 %v850
    %882 = vmatprep.subr.mxu0 0.0
    %883 = vmatpush1.xpose.msra.mxu0 %v848
    %884 = vmatprep.subr.mxu0 0.0
    %885 = vmatpush2.xpose.msra.mxu0 0.0
    %886 = vmatprep.subr.mxu0 0.0
    %887 = vmatpush2.xpose.msra.mxu0 0.0
    %888 = vmatprep.subr.mxu0 0.0
    %889 = vmatpush2.xpose.msra.mxu0 0.0
    %890 = vmatprep.subr.mxu0 0.0
    %891 = vmatpush2.xpose.msra.mxu0 0.0
    %892 = vmatprep.subr.mxu0 0.0
    %893 = vmatpush2.xpose.msra.mxu0 0.0
    %894 = vmatprep.subr.mxu0 0.0
    %895 = vmatpush2.xpose.msra.mxu0 0.0
    %896 = vmatprep.subr.mxu0 0.0
    %897 = vmatpush2.xpose.msra.mxu0 0.0
    %898 = vmatprep.subr.mxu0 0.0
    %899 = vmatpush2.xpose.msra.mxu0 0.0
    %900 = vmatprep.subr.mxu0 0.0
    %901 = vmatpush2.xpose.msra.mxu0 0.0
    %902 = vmatprep.subr.mxu0 0.0
    %903 = vmatpush2.xpose.msra.mxu0 0.0
    %904 = vmatprep.subr.mxu0 0.0
    %905 = vmatpush2.xpose.msra.mxu0 0.0
    %906 = vmatprep.subr.mxu0 0.0
    %907 = vmatpush2.xpose.msra.mxu0 0.0
    %908 = vmatprep.subr.mxu0 0.0
    %909 = vmatpush2.xpose.msra.mxu0 0.0
    %910 = vmatprep.subr.mxu0 0.0
    %911 = vmatpush2.xpose.msra.mxu0 0.0
    %912 = vmatprep.subr.mxu0 0.0
    %913 = vmatpush2.xpose.msra.mxu0 0.0
    %914 = vmatprep.subr.mxu0 0.0
    %915 = vmatpush2.xpose.msra.mxu0 0.0
    %916 = vmatprep.mubr.f32.mxu0 0.0
    %917 = vmatmul.mubr.f32.gmra.mxu0 %v844
    %v918 = vpop.f32.mrf.mxu0
    %v919 = vadd.f32 0.0, %v918
    %v920 = vpop.f32.mrf.mxu0
    %921 = vmatprep.mubr.f32.mxu0 0.0
    %922 = vmatmul.mubr.f32.gmra.mxu0 %v846
    %v923 = vpop.f32.mrf.mxu0
    %v924 = vadd.f32 0.0, %v923
    %v925 = vpop.f32.mrf.mxu0
    %926 = vdwg.mxu0
    %v927 = vmul.f32 %v919, 0.17677669
    %v928 = vmul.f32 %v924, 0.17677669
    %v929 = vadd.f32 %v927, %v262
    %v930 = vadd.f32 %v928, %v263
    %v931 = vsel %vm356, %v929, -inf
    %932 = vmax.xlane.f32.xlu0 %v931
    %v933 = vpop.xlane.xlu0 %932
    %v934 = vsel %vm356, %v930, -inf
    %935 = vmax.xlane.f32.xlu0 %v934
    %v936 = vpop.xlane.xlu0 %935
    %v937 = vsub.f32 %v929, %v933
    %v938 = vsub.f32 %v930, %v936
    %v939 = vmul.f32 %v937, 1.442695
    %v940 = vpow.pop %v939
    %v941 = vmul.f32 %v938, 1.442695
    %v942 = vpow.pop %v941
    %v943 = vsel %vm356, %v940, 0.0
    %944 = vadd.xlane.f32.xlu0 %v943
    %v945 = vpop.xlane.xlu0 %944
    %v946 = vsel %vm356, %v942, 0.0
    %947 = vadd.xlane.f32.xlu0 %v946
    %v948 = vpop.xlane.xlu0 %947
    %v949 = vrcp.pop %v945
    %v950 = vmul.f32 %v940, %v949
    %v951 = vrcp.pop %v948
    %v952 = vmul.f32 %v942, %v951
    %953 = vrot.lane.b32.xlu0 %v254, 64
    %v954 = vpop.permute.xlu0 %953
    %955 = vrot.lane.b32.xlu0 %v259, 64
    %v956 = vpop.permute.xlu0 %955
    %v960 = vsel %vm356, %v950, 0
    %v963 = vsel %vm356, %v952, 0
    %965 = vmatprep.subr.mxu0 0.0
    %966 = vmatpush1.msra.mxu0 0.0
    %967 = vmatprep.subr.mxu0 0.0
    %968 = vmatpush1.msra.mxu0 0.0
    %969 = vmatprep.subr.mxu0 0.0
    %970 = vmatpush1.msra.mxu0 0.0
    %971 = vmatprep.subr.mxu0 0.0
    %972 = vmatpush1.msra.mxu0 0.0
    %973 = vmatprep.subr.mxu0 0.0
    %974 = vmatpush1.msra.mxu0 0.0
    %975 = vmatprep.subr.mxu0 0.0
    %976 = vmatpush1.msra.mxu0 0.0
    %977 = vmatprep.subr.mxu0 0.0
    %978 = vmatpush1.msra.mxu0 0.0
    %979 = vmatprep.subr.mxu0 0.0
    %980 = vmatpush1.msra.mxu0 0.0
    %981 = vmatprep.subr.mxu0 0.0
    %982 = vmatpush1.msra.mxu0 0.0
    %983 = vmatprep.subr.mxu0 0.0
    %984 = vmatpush1.msra.mxu0 0.0
    %985 = vmatprep.subr.mxu0 0.0
    %986 = vmatpush1.msra.mxu0 0.0
    %987 = vmatprep.subr.mxu0 0.0
    %988 = vmatpush1.msra.mxu0 0.0
    %989 = vmatprep.subr.mxu0 0.0
    %990 = vmatpush1.msra.mxu0 0.0
    %991 = vmatprep.subr.mxu0 0.0
    %992 = vmatpush1.msra.mxu0 0.0
    %993 = vmatprep.subr.mxu0 0.0
    %994 = vmatpush1.msra.mxu0 %v956
    %995 = vmatprep.subr.mxu0 0.0
    %996 = vmatpush1.msra.mxu0 %v954
    %997 = vmatprep.subr.mxu0 0.0
    %998 = vmatpush2.msra.mxu0 0.0
    %999 = vmatprep.subr.mxu0 0.0
    %1000 = vmatpush2.msra.mxu0 0.0
    %1001 = vmatprep.subr.mxu0 0.0
    %1002 = vmatpush2.msra.mxu0 0.0
    %1003 = vmatprep.subr.mxu0 0.0
    %1004 = vmatpush2.msra.mxu0 0.0
    %1005 = vmatprep.subr.mxu0 0.0
    %1006 = vmatpush2.msra.mxu0 0.0
    %1007 = vmatprep.subr.mxu0 0.0
    %1008 = vmatpush2.msra.mxu0 0.0
    %1009 = vmatprep.subr.mxu0 0.0
    %1010 = vmatpush2.msra.mxu0 0.0
    %1011 = vmatprep.subr.mxu0 0.0
    %1012 = vmatpush2.msra.mxu0 0.0
    %1013 = vmatprep.subr.mxu0 0.0
    %1014 = vmatpush2.msra.mxu0 0.0
    %1015 = vmatprep.subr.mxu0 0.0
    %1016 = vmatpush2.msra.mxu0 0.0
    %1017 = vmatprep.subr.mxu0 0.0
    %1018 = vmatpush2.msra.mxu0 0.0
    %1019 = vmatprep.subr.mxu0 0.0
    %1020 = vmatpush2.msra.mxu0 0.0
    %1021 = vmatprep.subr.mxu0 0.0
    %1022 = vmatpush2.msra.mxu0 0.0
    %1023 = vmatprep.subr.mxu0 0.0
    %1024 = vmatpush2.msra.mxu0 0.0
    %1025 = vmatprep.subr.mxu0 0.0
    %1026 = vmatpush2.msra.mxu0 0.0
    %1027 = vmatprep.subr.mxu0 0.0
    %1028 = vmatpush2.msra.mxu0 0.0
    %1029 = vmatprep.mubr.f32.mxu0 0.0
    %1030 = vmatmul.mubr.f32.gmra.mxu0 %v960
    %v1031 = vpop.f32.mrf.mxu0
    %v1032 = vadd.f32 0.0, %v1031
    %v1033 = vpop.f32.mrf.mxu0
    %1034 = vmatprep.mubr.f32.mxu0 0.0
    %1035 = vmatmul.mubr.f32.gmra.mxu0 %v963
    %v1036 = vpop.f32.mrf.mxu0
    %v1037 = vadd.f32 0.0, %v1036
    %v1038 = vpop.f32.mrf.mxu0
    %1039 = vdwg.mxu0
    %v1040 = vld [vmem:[%s3 + $0x40] sm:$0xff]
    %v1041 = vld [vmem:[%s3 + $0x48] sm:$0xff]
    %v1042 = vld [vmem:[%s3 + $0x50] sm:$0xff]
    %v1043 = vld [vmem:[%s3 + $0x58] sm:$0xff]
    %v1045 = vsel %vm264, %v1032, 0
    %v1048 = vsel %vm264, %v1037, 0
    %1050 = vmatprep.subr.mxu0 0.0
    %1051 = vmatpush1.msra.mxu0 0.0
    %1052 = vmatprep.subr.mxu0 0.0
    %1053 = vmatpush1.msra.mxu0 0.0
    %1054 = vmatprep.subr.mxu0 0.0
    %1055 = vmatpush1.msra.mxu0 0.0
    %1056 = vmatprep.subr.mxu0 0.0
    %1057 = vmatpush1.msra.mxu0 0.0
    %1058 = vmatprep.subr.mxu0 0.0
    %1059 = vmatpush1.msra.mxu0 0.0
    %1060 = vmatprep.subr.mxu0 0.0
    %1061 = vmatpush1.msra.mxu0 0.0
    %1062 = vmatprep.subr.mxu0 0.0
    %1063 = vmatpush1.msra.mxu0 0.0
    %1064 = vmatprep.subr.mxu0 0.0
    %1065 = vmatpush1.msra.mxu0 0.0
    %1066 = vmatprep.subr.mxu0 0.0
    %1067 = vmatpush1.msra.mxu0 0.0
    %1068 = vmatprep.subr.mxu0 0.0
    %1069 = vmatpush1.msra.mxu0 0.0
    %1070 = vmatprep.subr.mxu0 0.0
    %1071 = vmatpush1.msra.mxu0 0.0
    %1072 = vmatprep.subr.mxu0 0.0
    %1073 = vmatpush1.msra.mxu0 0.0
    %1074 = vmatprep.subr.mxu0 0.0
    %1075 = vmatpush1.msra.mxu0 %v1043
    %1076 = vmatprep.subr.mxu0 0.0
    %1077 = vmatpush1.msra.mxu0 %v1042
    %1078 = vmatprep.subr.mxu0 0.0
    %1079 = vmatpush1.msra.mxu0 %v1041
    %1080 = vmatprep.subr.mxu0 0.0
    %1081 = vmatpush1.msra.mxu0 %v1040
    %1082 = vmatprep.subr.mxu0 0.0
    %1083 = vmatpush2.msra.mxu0 0.0
    %1084 = vmatprep.subr.mxu0 0.0
    %1085 = vmatpush2.msra.mxu0 0.0
    %1086 = vmatprep.subr.mxu0 0.0
    %1087 = vmatpush2.msra.mxu0 0.0
    %1088 = vmatprep.subr.mxu0 0.0
    %1089 = vmatpush2.msra.mxu0 0.0
    %1090 = vmatprep.subr.mxu0 0.0
    %1091 = vmatpush2.msra.mxu0 0.0
    %1092 = vmatprep.subr.mxu0 0.0
    %1093 = vmatpush2.msra.mxu0 0.0
    %1094 = vmatprep.subr.mxu0 0.0
    %1095 = vmatpush2.msra.mxu0 0.0
    %1096 = vmatprep.subr.mxu0 0.0
    %1097 = vmatpush2.msra.mxu0 0.0
    %1098 = vmatprep.subr.mxu0 0.0
    %1099 = vmatpush2.msra.mxu0 0.0
    %1100 = vmatprep.subr.mxu0 0.0
    %1101 = vmatpush2.msra.mxu0 0.0
    %1102 = vmatprep.subr.mxu0 0.0
    %1103 = vmatpush2.msra.mxu0 0.0
    %1104 = vmatprep.subr.mxu0 0.0
    %1105 = vmatpush2.msra.mxu0 0.0
    %1106 = vmatprep.subr.mxu0 0.0
    %1107 = vmatpush2.msra.mxu0 0.0
    %1108 = vmatprep.subr.mxu0 0.0
    %1109 = vmatpush2.msra.mxu0 0.0
    %1110 = vmatprep.subr.mxu0 0.0
    %1111 = vmatpush2.msra.mxu0 0.0
    %1112 = vmatprep.subr.mxu0 0.0
    %1113 = vmatpush2.msra.mxu0 0.0
    %1114 = vmatprep.mubr.f32.mxu0 0.0
    %1115 = vmatmul.mubr.f32.gmra.mxu0 %v1045
    %v1116 = vpop.f32.mrf.mxu0
    %v1117 = vadd.f32 0.0, %v1116
    %v1118 = vpop.f32.mrf.mxu0
    %1119 = vmatprep.mubr.f32.mxu0 0.0
    %1120 = vmatmul.mubr.f32.gmra.mxu0 %v1048
    %v1121 = vpop.f32.mrf.mxu0
    %v1122 = vadd.f32 0.0, %v1121
    %v1123 = vpop.f32.mrf.mxu0
    %1124 = vdwg.mxu0
    %v1125 = vadd.f32 %v828, %v1117
    %v1126 = vadd.f32 %v833, %v1122
    %1127 = vrot.lane.b32.xlu0 %v177, 32
    %v1128 = vpop.permute.xlu0 %1127
    %1129 = vrot.lane.b32.xlu0 %v183, 32
    %v1130 = vpop.permute.xlu0 %1129
    %1131 = vrot.lane.b32.xlu0 %v179, 32
    %v1132 = vpop.permute.xlu0 %1131
    %1133 = vrot.lane.b32.xlu0 %v185, 32
    %v1134 = vpop.permute.xlu0 %1133
    %v1135 = vsel %vm264, %v1128, 0
    %v1137 = vsel %vm264, %v1130, 0
    %v1139 = vsel %vm264, %v1132, 0
    %v1141 = vsel %vm264, %v1134, 0
    %1143 = vmatprep.subr.mxu0 0.0
    %1144 = vmatpush1.xpose.msra.mxu0 0.0
    %1145 = vmatprep.subr.mxu0 0.0
    %1146 = vmatpush1.xpose.msra.mxu0 0.0
    %1147 = vmatprep.subr.mxu0 0.0
    %1148 = vmatpush1.xpose.msra.mxu0 0.0
    %1149 = vmatprep.subr.mxu0 0.0
    %1150 = vmatpush1.xpose.msra.mxu0 0.0
    %1151 = vmatprep.subr.mxu0 0.0
    %1152 = vmatpush1.xpose.msra.mxu0 0.0
    %1153 = vmatprep.subr.mxu0 0.0
    %1154 = vmatpush1.xpose.msra.mxu0 0.0
    %1155 = vmatprep.subr.mxu0 0.0
    %1156 = vmatpush1.xpose.msra.mxu0 0.0
    %1157 = vmatprep.subr.mxu0 0.0
    %1158 = vmatpush1.xpose.msra.mxu0 0.0
    %1159 = vmatprep.subr.mxu0 0.0
    %1160 = vmatpush1.xpose.msra.mxu0 0.0
    %1161 = vmatprep.subr.mxu0 0.0
    %1162 = vmatpush1.xpose.msra.mxu0 0.0
    %1163 = vmatprep.subr.mxu0 0.0
    %1164 = vmatpush1.xpose.msra.mxu0 0.0
    %1165 = vmatprep.subr.mxu0 0.0
    %1166 = vmatpush1.xpose.msra.mxu0 0.0
    %1167 = vmatprep.subr.mxu0 0.0
    %1168 = vmatpush1.xpose.msra.mxu0 0.0
    %1169 = vmatprep.subr.mxu0 0.0
    %1170 = vmatpush1.xpose.msra.mxu0 0.0
    %1171 = vmatprep.subr.mxu0 0.0
    %1172 = vmatpush1.xpose.msra.mxu0 %v1141
    %1173 = vmatprep.subr.mxu0 0.0
    %1174 = vmatpush1.xpose.msra.mxu0 %v1139
    %1175 = vmatprep.subr.mxu0 0.0
    %1176 = vmatpush2.xpose.msra.mxu0 0.0
    %1177 = vmatprep.subr.mxu0 0.0
    %1178 = vmatpush2.xpose.msra.mxu0 0.0
    %1179 = vmatprep.subr.mxu0 0.0
    %1180 = vmatpush2.xpose.msra.mxu0 0.0
    %1181 = vmatprep.subr.mxu0 0.0
    %1182 = vmatpush2.xpose.msra.mxu0 0.0
    %1183 = vmatprep.subr.mxu0 0.0
    %1184 = vmatpush2.xpose.msra.mxu0 0.0
    %1185 = vmatprep.subr.mxu0 0.0
    %1186 = vmatpush2.xpose.msra.mxu0 0.0
    %1187 = vmatprep.subr.mxu0 0.0
    %1188 = vmatpush2.xpose.msra.mxu0 0.0
    %1189 = vmatprep.subr.mxu0 0.0
    %1190 = vmatpush2.xpose.msra.mxu0 0.0
    %1191 = vmatprep.subr.mxu0 0.0
    %1192 = vmatpush2.xpose.msra.mxu0 0.0
    %1193 = vmatprep.subr.mxu0 0.0
    %1194 = vmatpush2.xpose.msra.mxu0 0.0
    %1195 = vmatprep.subr.mxu0 0.0
    %1196 = vmatpush2.xpose.msra.mxu0 0.0
    %1197 = vmatprep.subr.mxu0 0.0
    %1198 = vmatpush2.xpose.msra.mxu0 0.0
    %1199 = vmatprep.subr.mxu0 0.0
    %1200 = vmatpush2.xpose.msra.mxu0 0.0
    %1201 = vmatprep.subr.mxu0 0.0
    %1202 = vmatpush2.xpose.msra.mxu0 0.0
    %1203 = vmatprep.subr.mxu0 0.0
    %1204 = vmatpush2.xpose.msra.mxu0 0.0
    %1205 = vmatprep.subr.mxu0 0.0
    %1206 = vmatpush2.xpose.msra.mxu0 0.0
    %1207 = vmatprep.mubr.f32.mxu0 0.0
    %1208 = vmatmul.mubr.f32.gmra.mxu0 %v1135
    %v1209 = vpop.f32.mrf.mxu0
    %v1210 = vadd.f32 0.0, %v1209
    %v1211 = vpop.f32.mrf.mxu0
    %1212 = vmatprep.mubr.f32.mxu0 0.0
    %1213 = vmatmul.mubr.f32.gmra.mxu0 %v1137
    %v1214 = vpop.f32.mrf.mxu0
    %v1215 = vadd.f32 0.0, %v1214
    %v1216 = vpop.f32.mrf.mxu0
    %1217 = vdwg.mxu0
    %v1218 = vmul.f32 %v1210, 0.17677669
    %v1219 = vmul.f32 %v1215, 0.17677669
    %v1220 = vadd.f32 %v1218, %v262
    %v1221 = vadd.f32 %v1219, %v263
    %v1222 = vsel %vm356, %v1220, -inf
    %1223 = vmax.xlane.f32.xlu0 %v1222
    %v1224 = vpop.xlane.xlu0 %1223
    %v1225 = vsel %vm356, %v1221, -inf
    %1226 = vmax.xlane.f32.xlu0 %v1225
    %v1227 = vpop.xlane.xlu0 %1226
    %v1228 = vsub.f32 %v1220, %v1224
    %v1229 = vsub.f32 %v1221, %v1227
    %v1230 = vmul.f32 %v1228, 1.442695
    %v1231 = vpow.pop %v1230
    %v1232 = vmul.f32 %v1229, 1.442695
    %v1233 = vpow.pop %v1232
    %v1234 = vsel %vm356, %v1231, 0.0
    %1235 = vadd.xlane.f32.xlu0 %v1234
    %v1236 = vpop.xlane.xlu0 %1235
    %v1237 = vsel %vm356, %v1233, 0.0
    %1238 = vadd.xlane.f32.xlu0 %v1237
    %v1239 = vpop.xlane.xlu0 %1238
    %v1240 = vrcp.pop %v1236
    %v1241 = vmul.f32 %v1231, %v1240
    %v1242 = vrcp.pop %v1239
    %v1243 = vmul.f32 %v1233, %v1242
    %1244 = vrot.lane.b32.xlu0 %v254, 32
    %v1245 = vpop.permute.xlu0 %1244
    %1246 = vrot.lane.b32.xlu0 %v259, 32
    %v1247 = vpop.permute.xlu0 %1246
    %v1251 = vsel %vm356, %v1241, 0
    %v1254 = vsel %vm356, %v1243, 0
    %1256 = vmatprep.subr.mxu0 0.0
    %1257 = vmatpush1.msra.mxu0 0.0
    %1258 = vmatprep.subr.mxu0 0.0
    %1259 = vmatpush1.msra.mxu0 0.0
    %1260 = vmatprep.subr.mxu0 0.0
    %1261 = vmatpush1.msra.mxu0 0.0
    %1262 = vmatprep.subr.mxu0 0.0
    %1263 = vmatpush1.msra.mxu0 0.0
    %1264 = vmatprep.subr.mxu0 0.0
    %1265 = vmatpush1.msra.mxu0 0.0
    %1266 = vmatprep.subr.mxu0 0.0
    %1267 = vmatpush1.msra.mxu0 0.0
    %1268 = vmatprep.subr.mxu0 0.0
    %1269 = vmatpush1.msra.mxu0 0.0
    %1270 = vmatprep.subr.mxu0 0.0
    %1271 = vmatpush1.msra.mxu0 0.0
    %1272 = vmatprep.subr.mxu0 0.0
    %1273 = vmatpush1.msra.mxu0 0.0
    %1274 = vmatprep.subr.mxu0 0.0
    %1275 = vmatpush1.msra.mxu0 0.0
    %1276 = vmatprep.subr.mxu0 0.0
    %1277 = vmatpush1.msra.mxu0 0.0
    %1278 = vmatprep.subr.mxu0 0.0
    %1279 = vmatpush1.msra.mxu0 0.0
    %1280 = vmatprep.subr.mxu0 0.0
    %1281 = vmatpush1.msra.mxu0 0.0
    %1282 = vmatprep.subr.mxu0 0.0
    %1283 = vmatpush1.msra.mxu0 0.0
    %1284 = vmatprep.subr.mxu0 0.0
    %1285 = vmatpush1.msra.mxu0 %v1247
    %1286 = vmatprep.subr.mxu0 0.0
    %1287 = vmatpush1.msra.mxu0 %v1245
    %1288 = vmatprep.subr.mxu0 0.0
    %1289 = vmatpush2.msra.mxu0 0.0
    %1290 = vmatprep.subr.mxu0 0.0
    %1291 = vmatpush2.msra.mxu0 0.0
    %1292 = vmatprep.subr.mxu0 0.0
    %1293 = vmatpush2.msra.mxu0 0.0
    %1294 = vmatprep.subr.mxu0 0.0
    %1295 = vmatpush2.msra.mxu0 0.0
    %1296 = vmatprep.subr.mxu0 0.0
    %1297 = vmatpush2.msra.mxu0 0.0
    %1298 = vmatprep.subr.mxu0 0.0
    %1299 = vmatpush2.msra.mxu0 0.0
    %1300 = vmatprep.subr.mxu0 0.0
    %1301 = vmatpush2.msra.mxu0 0.0
    %1302 = vmatprep.subr.mxu0 0.0
    %1303 = vmatpush2.msra.mxu0 0.0
    %1304 = vmatprep.subr.mxu0 0.0
    %1305 = vmatpush2.msra.mxu0 0.0
    %1306 = vmatprep.subr.mxu0 0.0
    %1307 = vmatpush2.msra.mxu0 0.0
    %1308 = vmatprep.subr.mxu0 0.0
    %1309 = vmatpush2.msra.mxu0 0.0
    %1310 = vmatprep.subr.mxu0 0.0
    %1311 = vmatpush2.msra.mxu0 0.0
    %1312 = vmatprep.subr.mxu0 0.0
    %1313 = vmatpush2.msra.mxu0 0.0
    %1314 = vmatprep.subr.mxu0 0.0
    %1315 = vmatpush2.msra.mxu0 0.0
    %1316 = vmatprep.subr.mxu0 0.0
    %1317 = vmatpush2.msra.mxu0 0.0
    %1318 = vmatprep.subr.mxu0 0.0
    %1319 = vmatpush2.msra.mxu0 0.0
    %1320 = vmatprep.mubr.f32.mxu0 0.0
    %1321 = vmatmul.mubr.f32.gmra.mxu0 %v1251
    %v1322 = vpop.f32.mrf.mxu0
    %v1323 = vadd.f32 0.0, %v1322
    %v1324 = vpop.f32.mrf.mxu0
    %1325 = vmatprep.mubr.f32.mxu0 0.0
    %1326 = vmatmul.mubr.f32.gmra.mxu0 %v1254
    %v1327 = vpop.f32.mrf.mxu0
    %v1328 = vadd.f32 0.0, %v1327
    %v1329 = vpop.f32.mrf.mxu0
    %1330 = vdwg.mxu0
    %v1331 = vld [vmem:[%s3 + $0x60] sm:$0xff]
    %v1332 = vld [vmem:[%s3 + $0x68] sm:$0xff]
    %v1333 = vld [vmem:[%s3 + $0x70] sm:$0xff]
    %v1334 = vld [vmem:[%s3 + $0x78] sm:$0xff]
    %v1336 = vsel %vm264, %v1323, 0
    %v1339 = vsel %vm264, %v1328, 0
    %1341 = vmatprep.subr.mxu0 0.0
    %1342 = vmatpush1.msra.mxu0 0.0
    %1343 = vmatprep.subr.mxu0 0.0
    %1344 = vmatpush1.msra.mxu0 0.0
    %1345 = vmatprep.subr.mxu0 0.0
    %1346 = vmatpush1.msra.mxu0 0.0
    %1347 = vmatprep.subr.mxu0 0.0
    %1348 = vmatpush1.msra.mxu0 0.0
    %1349 = vmatprep.subr.mxu0 0.0
    %1350 = vmatpush1.msra.mxu0 0.0
    %1351 = vmatprep.subr.mxu0 0.0
    %1352 = vmatpush1.msra.mxu0 0.0
    %1353 = vmatprep.subr.mxu0 0.0
    %1354 = vmatpush1.msra.mxu0 0.0
    %1355 = vmatprep.subr.mxu0 0.0
    %1356 = vmatpush1.msra.mxu0 0.0
    %1357 = vmatprep.subr.mxu0 0.0
    %1358 = vmatpush1.msra.mxu0 0.0
    %1359 = vmatprep.subr.mxu0 0.0
    %1360 = vmatpush1.msra.mxu0 0.0
    %1361 = vmatprep.subr.mxu0 0.0
    %1362 = vmatpush1.msra.mxu0 0.0
    %1363 = vmatprep.subr.mxu0 0.0
    %1364 = vmatpush1.msra.mxu0 0.0
    %1365 = vmatprep.subr.mxu0 0.0
    %1366 = vmatpush1.msra.mxu0 %v1334
    %1367 = vmatprep.subr.mxu0 0.0
    %1368 = vmatpush1.msra.mxu0 %v1333
    %1369 = vmatprep.subr.mxu0 0.0
    %1370 = vmatpush1.msra.mxu0 %v1332
    %1371 = vmatprep.subr.mxu0 0.0
    %1372 = vmatpush1.msra.mxu0 %v1331
    %1373 = vmatprep.subr.mxu0 0.0
    %1374 = vmatpush2.msra.mxu0 0.0
    %1375 = vmatprep.subr.mxu0 0.0
    %1376 = vmatpush2.msra.mxu0 0.0
    %1377 = vmatprep.subr.mxu0 0.0
    %1378 = vmatpush2.msra.mxu0 0.0
    %1379 = vmatprep.subr.mxu0 0.0
    %1380 = vmatpush2.msra.mxu0 0.0
    %1381 = vmatprep.subr.mxu0 0.0
    %1382 = vmatpush2.msra.mxu0 0.0
    %1383 = vmatprep.subr.mxu0 0.0
    %1384 = vmatpush2.msra.mxu0 0.0
    %1385 = vmatprep.subr.mxu0 0.0
    %1386 = vmatpush2.msra.mxu0 0.0
    %1387 = vmatprep.subr.mxu0 0.0
    %1388 = vmatpush2.msra.mxu0 0.0
    %1389 = vmatprep.subr.mxu0 0.0
    %1390 = vmatpush2.msra.mxu0 0.0
    %1391 = vmatprep.subr.mxu0 0.0
    %1392 = vmatpush2.msra.mxu0 0.0
    %1393 = vmatprep.subr.mxu0 0.0
    %1394 = vmatpush2.msra.mxu0 0.0
    %1395 = vmatprep.subr.mxu0 0.0
    %1396 = vmatpush2.msra.mxu0 0.0
    %1397 = vmatprep.subr.mxu0 0.0
    %1398 = vmatpush2.msra.mxu0 0.0
    %1399 = vmatprep.subr.mxu0 0.0
    %1400 = vmatpush2.msra.mxu0 0.0
    %1401 = vmatprep.subr.mxu0 0.0
    %1402 = vmatpush2.msra.mxu0 0.0
    %1403 = vmatprep.subr.mxu0 0.0
    %1404 = vmatpush2.msra.mxu0 0.0
    %1405 = vmatprep.mubr.f32.mxu0 0.0
    %1406 = vmatmul.mubr.f32.gmra.mxu0 %v1336
    %v1407 = vpop.f32.mrf.mxu0
    %v1408 = vadd.f32 0.0, %v1407
    %v1409 = vpop.f32.mrf.mxu0
    %1410 = vmatprep.mubr.f32.mxu0 0.0
    %1411 = vmatmul.mubr.f32.gmra.mxu0 %v1339
    %v1412 = vpop.f32.mrf.mxu0
    %v1413 = vadd.f32 0.0, %v1412
    %v1414 = vpop.f32.mrf.mxu0
    %1415 = vdwg.mxu0
    %v1416 = vadd.f32 %v1125, %v1408
    %v1417 = vadd.f32 %v1126, %v1413
    %v1418 = vld [vmem:[%s4] sm:$0x1]
    %v1420 = vlaneseq
    %v1421 = vshrl.u32 %v1420, 7
    %v1422 = vsub.s32 0, %v1421
    %v1423 = vrot.slane %v1418, %v1422
    %v1425 = vadd.f32 %v1416, %v1423
    %v1426 = vadd.f32 %v1417, %v1423
    %v1427 = vadd.f32 %v43, %v1425
    %v1428 = vadd.f32 %v44, %v1426
    %v1429 = vld [vmem:[%s6] sm:$0x1]
    %v1430 = vld [vmem:[%s7] sm:$0x1]
    %1431 = vadd.xlane.f32.xlu0 %v1427
    %v1432 = vpop.xlane.xlu0 %1431
    %1433 = vadd.xlane.f32.xlu0 %v1428
    %v1434 = vpop.xlane.xlu0 %1433
    %v1435 = vrcp.pop 128.0
    %v1436 = vmul.f32 %v1432, %v1435
    %v1437 = vmul.f32 %v1434, %v1435
    %v1438 = vsub.f32 %v1427, %v1436
    %v1439 = vsub.f32 %v1428, %v1437
    %v1440 = vmul.f32 %v1438, %v1438
    %v1441 = vmul.f32 %v1439, %v1439
    %1442 = vadd.xlane.f32.xlu0 %v1440
    %v1443 = vpop.xlane.xlu0 %1442
    %1444 = vadd.xlane.f32.xlu0 %v1441
    %v1445 = vpop.xlane.xlu0 %1444
    %v1446 = vmul.f32 %v1443, %v1435
    %v1447 = vmul.f32 %v1445, %v1435
    %v1448 = vadd.f32 %v1446, 1e-05
    %v1449 = vadd.f32 %v1447, 1e-05
    %v1450 = vrsqrt.pop %v1448
    %v1451 = vrsqrt.pop %v1449
    %v1452 = vmul.f32 %v1438, %v1450
    %v1453 = vmul.f32 %v1439, %v1451
    %v1455 = vlaneseq
    %v1456 = vshrl.u32 %v1455, 7
    %v1457 = vsub.s32 0, %v1456
    %v1458 = vrot.slane %v1429, %v1457
    %v1460 = vmul.f32 %v1452, %v1458
    %v1461 = vmul.f32 %v1453, %v1458
    %v1463 = vlaneseq
    %v1464 = vshrl.u32 %v1463, 7
    %v1465 = vsub.s32 0, %v1464
    %v1466 = vrot.slane %v1430, %v1465
    %v1468 = vadd.f32 %v1460, %v1466
    %v1469 = vadd.f32 %v1461, %v1466
    %1470 = vst [vmem:[%s8] sm:$0xff] %v1468
    %1471 = vst [vmem:[%s8 + $0x8] sm:$0xff] %v1469
    // Predicated region
    $region38: #{transformer_lm_forward.7} parent=1 // pred_check
      _
    $region39: #{transformer_lm_forward.7} parent=1 // pred_check_branch
      %1473 = sbr.rel (0) target = $region41
    $region40: #{transformer_lm_forward.7} parent=1 // pred_region
      _
    $region41: #{transformer_lm_forward.7} parent=1 // pred_fallthru
      _
    // Predicated region
    $region42: #{transformer_lm_forward.7} parent=1 // pred_check
      _
    $region43: #{transformer_lm_forward.7} parent=1 // pred_check_branch
      %1475 = sbr.rel (0) target = $region45
    $region44: #{transformer_lm_forward.7} parent=1 // pred_region
      _
    $region45: #{transformer_lm_forward.7} parent=1 // pred_fallthru
      _
    %1476 = vsyncpa [#allocation3], 1

// kernel: transformer_lm_forward.11
$region0: #{transformer_lm_forward.11}
  #allocation0 [shape = 'u32[]', space=smem, size = 0x4, offset = 0x4, fixed_abs, tag = 'smem constant byte address 0x4 - core index']
  #allocation1 [shape = 'u32[144,128]{1,0:T(1,128)}', space=vmem, size = 0x12000, scoped, tag = 'internal scratch']
  %s0 = inlined_call_operand.vmem [shape: f32[16,128], index: 0, kind: input, shape index: {}]
  %s1 = inlined_call_operand.vmem [shape: f32[128,128], index: 1, kind: input, shape index: {}]
  %s2 = inlined_call_operand.vmem [shape: f32[1,128], index: 2, kind: input, shape index: {}]
  %s3 = inlined_call_operand.hbm [shape: f32[16,128], index: 3, kind: output, shape index: {}]
  %s4 = sld [smem:[#allocation0]]
  $region22: #{transformer_lm_forward.11} parent=0
    _
  %s6 = ssub.s32 1, %s4
  %s7 = scalar_select 0, %s6, %s4
  $region1: #{transformer_lm_forward.11} parent=0
    #allocation2 [shape = 'u8[8192]{0}', space=vmem, size = 0x2000, scoped, tag = 'output window, operand 0, single buffered']
    #allocation3 [shape = 's32[1]{0}', space=sflag, size = 0x4, scoped, tag = 'scoped memory for transformer_lm_forward.11']
    %8 = vsyncpa [#allocation3], 0
    // Predicated region
    $region2: #{transformer_lm_forward.11} parent=1 // pred_check
      _
    $region3: #{transformer_lm_forward.11} parent=1 // pred_check_branch
      %10 = sbr.rel (0) target = $region5
    $region4: #{transformer_lm_forward.11} parent=1 // pred_region
      _
    $region5: #{transformer_lm_forward.11} parent=1 // pred_fallthru
      _
    // Predicated region
    $region6: #{transformer_lm_forward.11} parent=1 // pred_check
      _
    $region7: #{transformer_lm_forward.11} parent=1 // pred_check_branch
      %12 = sbr.rel (0) target = $region9
    $region8: #{transformer_lm_forward.11} parent=1 // pred_region
      _
    $region9: #{transformer_lm_forward.11} parent=1 // pred_fallthru
      _
    // Predicated region
    $region10: #{transformer_lm_forward.11} parent=1 // pred_check
      _
    $region11: #{transformer_lm_forward.11} parent=1 // pred_check_branch
      %14 = sbr.rel (0) target = $region13
    $region12: #{transformer_lm_forward.11} parent=1 // pred_region
      _
    $region13: #{transformer_lm_forward.11} parent=1 // pred_fallthru
      _
    %v15 = vld [vmem:[%s0] sm:$0xff]
    %v16 = vld [vmem:[%s0 + $0x8] sm:$0xff]
    %v17 = vld [vmem:[%s1] sm:$0xff]
    %v18 = vld [vmem:[%s1 + $0x8] sm:$0xff]
    %v19 = vld [vmem:[%s1 + $0x10] sm:$0xff]
    %v20 = vld [vmem:[%s1 + $0x18] sm:$0xff]
    %v21 = vld [vmem:[%s1 + $0x20] sm:$0xff]
    %v22 = vld [vmem:[%s1 + $0x28] sm:$0xff]
    %v23 = vld [vmem:[%s1 + $0x30] sm:$0xff]
    %v24 = vld [vmem:[%s1 + $0x38] sm:$0xff]
    %v25 = vld [vmem:[%s1 + $0x40] sm:$0xff]
    %v26 = vld [vmem:[%s1 + $0x48] sm:$0xff]
    %v27 = vld [vmem:[%s1 + $0x50] sm:$0xff]
    %v28 = vld [vmem:[%s1 + $0x58] sm:$0xff]
    %v29 = vld [vmem:[%s1 + $0x60] sm:$0xff]
    %v30 = vld [vmem:[%s1 + $0x68] sm:$0xff]
    %v31 = vld [vmem:[%s1 + $0x70] sm:$0xff]
    %v32 = vld [vmem:[%s1 + $0x78] sm:$0xff]
    %v33 = vld [vmem:[%s2] sm:$0x1]
    %v35 = vlaneseq
    %v36 = vshrl.u32 %v35, 7
    %v37 = vsub.s32 0, %v36
    %v38 = vrot.slane %v33, %v37
    %40 = vmatprep.subr.mxu0 0.0
    %41 = vmatpush1.msra.mxu0 %v32
    %42 = vmatprep.subr.mxu0 0.0
    %43 = vmatpush1.msra.mxu0 %v31
    %44 = vmatprep.subr.mxu0 0.0
    %45 = vmatpush1.msra.mxu0 %v30
    %46 = vmatprep.subr.mxu0 0.0
    %47 = vmatpush1.msra.mxu0 %v29
    %48 = vmatprep.subr.mxu0 0.0
    %49 = vmatpush1.msra.mxu0 %v28
    %50 = vmatprep.subr.mxu0 0.0
    %51 = vmatpush1.msra.mxu0 %v27
    %52 = vmatprep.subr.mxu0 0.0
    %53 = vmatpush1.msra.mxu0 %v26
    %54 = vmatprep.subr.mxu0 0.0
    %55 = vmatpush1.msra.mxu0 %v25
    %56 = vmatprep.subr.mxu0 0.0
    %57 = vmatpush1.msra.mxu0 %v24
    %58 = vmatprep.subr.mxu0 0.0
    %59 = vmatpush1.msra.mxu0 %v23
    %60 = vmatprep.subr.mxu0 0.0
    %61 = vmatpush1.msra.mxu0 %v22
    %62 = vmatprep.subr.mxu0 0.0
    %63 = vmatpush1.msra.mxu0 %v21
    %64 = vmatprep.subr.mxu0 0.0
    %65 = vmatpush1.msra.mxu0 %v20
    %66 = vmatprep.subr.mxu0 0.0
    %67 = vmatpush1.msra.mxu0 %v19
    %68 = vmatprep.subr.mxu0 0.0
    %69 = vmatpush1.msra.mxu0 %v18
    %70 = vmatprep.subr.mxu0 0.0
    %71 = vmatpush1.msra.mxu0 %v17
    %72 = vmatprep.subr.mxu0 0.0
    %73 = vmatpush2.msra.mxu0 0.0
    %74 = vmatprep.subr.mxu0 0.0
    %75 = vmatpush2.msra.mxu0 0.0
    %76 = vmatprep.subr.mxu0 0.0
    %77 = vmatpush2.msra.mxu0 0.0
    %78 = vmatprep.subr.mxu0 0.0
    %79 = vmatpush2.msra.mxu0 0.0
    %80 = vmatprep.subr.mxu0 0.0
    %81 = vmatpush2.msra.mxu0 0.0
    %82 = vmatprep.subr.mxu0 0.0
    %83 = vmatpush2.msra.mxu0 0.0
    %84 = vmatprep.subr.mxu0 0.0
    %85 = vmatpush2.msra.mxu0 0.0
    %86 = vmatprep.subr.mxu0 0.0
    %87 = vmatpush2.msra.mxu0 0.0
    %88 = vmatprep.subr.mxu0 0.0
    %89 = vmatpush2.msra.mxu0 0.0
    %90 = vmatprep.subr.mxu0 0.0
    %91 = vmatpush2.msra.mxu0 0.0
    %92 = vmatprep.subr.mxu0 0.0
    %93 = vmatpush2.msra.mxu0 0.0
    %94 = vmatprep.subr.mxu0 0.0
    %95 = vmatpush2.msra.mxu0 0.0
    %96 = vmatprep.subr.mxu0 0.0
    %97 = vmatpush2.msra.mxu0 0.0
    %98 = vmatprep.subr.mxu0 0.0
    %99 = vmatpush2.msra.mxu0 0.0
    %100 = vmatprep.subr.mxu0 0.0
    %101 = vmatpush2.msra.mxu0 0.0
    %102 = vmatprep.subr.mxu0 0.0
    %103 = vmatpush2.msra.mxu0 0.0
    %104 = vmatprep.mubr.f32.mxu0 0.0
    %105 = vmatmul.mubr.f32.gmra.mxu0 %v15
    %v106 = vpop.f32.mrf.mxu0
    %v107 = vadd.f32 %v38, %v106
    %v108 = vpop.f32.mrf.mxu0
    %109 = vmatprep.mubr.f32.mxu0 0.0
    %110 = vmatmul.mubr.f32.gmra.mxu0 %v16
    %v111 = vpop.f32.mrf.mxu0
    %v112 = vadd.f32 %v38, %v111
    %v113 = vpop.f32.mrf.mxu0
    %114 = vdwg.mxu0
    %115 = vmax.xlane.f32.xlu0 %v107
    %v116 = vpop.xlane.xlu0 %115
    %117 = vmax.xlane.f32.xlu0 %v112
    %v118 = vpop.xlane.xlu0 %117
    %v119 = vsub.f32 %v107, %v116
    %v120 = vsub.f32 %v112, %v118
    %v121 = vmul.f32 %v119, 1.442695
    %v122 = vpow.pop %v121
    %v123 = vmul.f32 %v120, 1.442695
    %v124 = vpow.pop %v123
    %125 = vadd.xlane.f32.xlu0 %v122
    %v126 = vpop.xlane.xlu0 %125
    %127 = vadd.xlane.f32.xlu0 %v124
    %v128 = vpop.xlane.xlu0 %127
    %v129 = vlog2.pop %v126
    %v130 = vmul.f32 %v129, 0.6931472
    %v131 = vlog2.pop %v128
    %v132 = vmul.f32 %v131, 0.6931472
    %v133 = vsub.f32 %v119, %v130
    %v134 = vsub.f32 %v120, %v132
    %135 = vst [vmem:[#allocation2] sm:$0xff] %v133
    %136 = vst [vmem:[#allocation2 + $0x8] sm:$0xff] %v134
    // Predicated region
    $region14: #{transformer_lm_forward.11} parent=1 // pred_check
      _
    $region15: #{transformer_lm_forward.11} parent=1 // pred_check_branch
      %138 = sbr.rel (0) target = $region17
    $region16: #{transformer_lm_forward.11} parent=1 // pred_region
      %s140 = ssub.s32 256, 256
      %141 = vsyncadd [#allocation3], %s140
      %s142 = sshll.u32 [#allocation2], 4
      %s143 = int_to_ptr.vmem [resolvable:$true] %s142
      %148 = dma.vmem_to_hbm [thread:$0]  %s143, 256, %s3, [#allocation3], 128, 128, 8
    $region17: #{transformer_lm_forward.11} parent=1 // pred_fallthru
      _
    // Predicated region
    $region18: #{transformer_lm_forward.11} parent=1 // pred_check
      _
    $region19: #{transformer_lm_forward.11} parent=1 // pred_check_branch
      %150 = sbr.rel (0) target = $region21
    $region20: #{transformer_lm_forward.11} parent=1 // pred_region
      %151 = dma.done [#allocation3], 256
    $region21: #{transformer_lm_forward.11} parent=1 // pred_fallthru
      _
    %152 = vsyncpa [#allocation3], 1

// kernel: transformer_lm_forward.9
$region0: #{transformer_lm_forward.9}
  #allocation0 [shape = 'u32[]', space=smem, size = 0x4, offset = 0x4, fixed_abs, tag = 'smem constant byte address 0x4 - core index']
  #allocation1 [shape = 'u32[144,128]{1,0:T(1,128)}', space=vmem, size = 0x12000, scoped, tag = 'internal scratch']
  %s0 = inlined_call_operand.vmem [shape: f32[16,128], index: 0, kind: input, shape index: {}, may-alias: {0,8}]
  %s1 = inlined_call_operand.vmem [shape: f32[128,384], index: 1, kind: input, shape index: {}]
  %s2 = inlined_call_operand.vmem [shape: f32[1,384], index: 2, kind: input, shape index: {}]
  %s3 = inlined_call_operand.vmem [shape: f32[128,128], index: 3, kind: input, shape index: {}]
  %s4 = inlined_call_operand.vmem [shape: f32[1,128], index: 4, kind: input, shape index: {}]
  %s5 = inlined_call_operand.vmem [shape: f32[16,16], index: 5, kind: input, shape index: {}]
  %s6 = inlined_call_operand.vmem [shape: f32[1,128], index: 6, kind: input, shape index: {}]
  %s7 = inlined_call_operand.vmem [shape: f32[1,128], index: 7, kind: input, shape index: {}]
  %s8 = inlined_call_operand.vmem [shape: f32[16,128], index: 8, kind: output, shape index: {}, may-alias: {0,8}]
  %s9 = sld [smem:[#allocation0]]
  $region42: #{transformer_lm_forward.9} parent=0
    _
  %s11 = ssub.s32 1, %s9
  %s12 = scalar_select 0, %s11, %s9
  // Predicated region
  $region2: #{transformer_lm_forward.9} parent=0 // pred_check
    _
  $region3: #{transformer_lm_forward.9} parent=0 // pred_check_branch
    %14 = sbr.rel (0) target = $region5
  $region4: #{transformer_lm_forward.9} parent=0 // pred_region
    _
  $region5: #{transformer_lm_forward.9} parent=0 // pred_fallthru
    _
  // Predicated region
  $region6: #{transformer_lm_forward.9} parent=0 // pred_check
    _
  $region7: #{transformer_lm_forward.9} parent=0 // pred_check_branch
    %16 = sbr.rel (0) target = $region9
  $region8: #{transformer_lm_forward.9} parent=0 // pred_region
    _
  $region9: #{transformer_lm_forward.9} parent=0 // pred_fallthru
    _
  // Predicated region
  $region10: #{transformer_lm_forward.9} parent=0 // pred_check
    _
  $region11: #{transformer_lm_forward.9} parent=0 // pred_check_branch
    %18 = sbr.rel (0) target = $region13
  $region12: #{transformer_lm_forward.9} parent=0 // pred_region
    _
  $region13: #{transformer_lm_forward.9} parent=0 // pred_fallthru
    _
  // Predicated region
  $region14: #{transformer_lm_forward.9} parent=0 // pred_check
    _
  $region15: #{transformer_lm_forward.9} parent=0 // pred_check_branch
    %20 = sbr.rel (0) target = $region17
  $region16: #{transformer_lm_forward.9} parent=0 // pred_region
    _
  $region17: #{transformer_lm_forward.9} parent=0 // pred_fallthru
    _
  // Predicated region
  $region18: #{transformer_lm_forward.9} parent=0 // pred_check
    _
  $region19: #{transformer_lm_forward.9} parent=0 // pred_check_branch
    %22 = sbr.rel (0) target = $region21
  $region20: #{transformer_lm_forward.9} parent=0 // pred_region
    _
  $region21: #{transformer_lm_forward.9} parent=0 // pred_fallthru
    _
  // Predicated region
  $region22: #{transformer_lm_forward.9} parent=0 // pred_check
    _
  $region23: #{transformer_lm_forward.9} parent=0 // pred_check_branch
    %24 = sbr.rel (0) target = $region25
  $region24: #{transformer_lm_forward.9} parent=0 // pred_region
    _
  $region25: #{transformer_lm_forward.9} parent=0 // pred_fallthru
    _
  // Predicated region
  $region26: #{transformer_lm_forward.9} parent=0 // pred_check
    _
  $region27: #{transformer_lm_forward.9} parent=0 // pred_check_branch
    %26 = sbr.rel (0) target = $region29
  $region28: #{transformer_lm_forward.9} parent=0 // pred_region
    _
  $region29: #{transformer_lm_forward.9} parent=0 // pred_fallthru
    _
  // Predicated region
  $region30: #{transformer_lm_forward.9} parent=0 // pred_check
    _
  $region31: #{transformer_lm_forward.9} parent=0 // pred_check_branch
    %28 = sbr.rel (0) target = $region33
  $region32: #{transformer_lm_forward.9} parent=0 // pred_region
    _
  $region33: #{transformer_lm_forward.9} parent=0 // pred_fallthru
    _
  %v29 = vld [vmem:[%s0] sm:$0xff]
  %v30 = vld [vmem:[%s0 + $0x8] sm:$0xff]
  %v31 = vld [vmem:[%s1] sm:$0xff]
  %v32 = vld [vmem:[%s1 + $0x8] sm:$0xff]
  %v33 = vld [vmem:[%s1 + $0x10] sm:$0xff]
  %v34 = vld [vmem:[%s1 + $0x18] sm:$0xff]
  %v35 = vld [vmem:[%s1 + $0x20] sm:$0xff]
  %v36 = vld [vmem:[%s1 + $0x28] sm:$0xff]
  %v37 = vld [vmem:[%s1 + $0x30] sm:$0xff]
  %v38 = vld [vmem:[%s1 + $0x38] sm:$0xff]
  %v39 = vld [vmem:[%s1 + $0x40] sm:$0xff]
  %v40 = vld [vmem:[%s1 + $0x48] sm:$0xff]
  %v41 = vld [vmem:[%s1 + $0x50] sm:$0xff]
  %v42 = vld [vmem:[%s1 + $0x58] sm:$0xff]
  %v43 = vld [vmem:[%s1 + $0x60] sm:$0xff]
  %v44 = vld [vmem:[%s1 + $0x68] sm:$0xff]
  %v45 = vld [vmem:[%s1 + $0x70] sm:$0xff]
  %v46 = vld [vmem:[%s1 + $0x78] sm:$0xff]
  %v47 = vld [vmem:[%s1 + $0x80] sm:$0xff]
  %v48 = vld [vmem:[%s1 + $0x88] sm:$0xff]
  %v49 = vld [vmem:[%s1 + $0x90] sm:$0xff]
  %v50 = vld [vmem:[%s1 + $0x98] sm:$0xff]
  %v51 = vld [vmem:[%s1 + $0xa0] sm:$0xff]
  %v52 = vld [vmem:[%s1 + $0xa8] sm:$0xff]
  %v53 = vld [vmem:[%s1 + $0xb0] sm:$0xff]
  %v54 = vld [vmem:[%s1 + $0xb8] sm:$0xff]
  %v55 = vld [vmem:[%s1 + $0xc0] sm:$0xff]
  %v56 = vld [vmem:[%s1 + $0xc8] sm:$0xff]
  %v57 = vld [vmem:[%s1 + $0xd0] sm:$0xff]
  %v58 = vld [vmem:[%s1 + $0xd8] sm:$0xff]
  %v59 = vld [vmem:[%s1 + $0xe0] sm:$0xff]
  %v60 = vld [vmem:[%s1 + $0xe8] sm:$0xff]
  %v61 = vld [vmem:[%s1 + $0xf0] sm:$0xff]
  %v62 = vld [vmem:[%s1 + $0xf8] sm:$0xff]
  %v63 = vld [vmem:[%s1 + $0x100] sm:$0xff]
  %v64 = vld [vmem:[%s1 + $0x108] sm:$0xff]
  %v65 = vld [vmem:[%s1 + $0x110] sm:$0xff]
  %v66 = vld [vmem:[%s1 + $0x118] sm:$0xff]
  %v67 = vld [vmem:[%s1 + $0x120] sm:$0xff]
  %v68 = vld [vmem:[%s1 + $0x128] sm:$0xff]
  %v69 = vld [vmem:[%s1 + $0x130] sm:$0xff]
  %v70 = vld [vmem:[%s1 + $0x138] sm:$0xff]
  %v71 = vld [vmem:[%s1 + $0x140] sm:$0xff]
  %v72 = vld [vmem:[%s1 + $0x148] sm:$0xff]
  %v73 = vld [vmem:[%s1 + $0x150] sm:$0xff]
  %v74 = vld [vmem:[%s1 + $0x158] sm:$0xff]
  %v75 = vld [vmem:[%s1 + $0x160] sm:$0xff]
  %v76 = vld [vmem:[%s1 + $0x168] sm:$0xff]
  %v77 = vld [vmem:[%s1 + $0x170] sm:$0xff]
  %v78 = vld [vmem:[%s1 + $0x178] sm:$0xff]
  %v79 = vld [vmem:[%s2] sm:$0x7]
  %v81 = vlaneseq
  %v82 = vshrl.u32 %v81, 7
  %v83 = vsub.s32 0, %v82
  %v84 = vrot.slane %v79, %v83
  %v85 = vlaneseq
  %v86 = vshrl.u32 %v85, 7
  %v87 = vsub.s32 1, %v86
  %v88 = vrot.slane %v79, %v87
  %v89 = vlaneseq
  %v90 = vshrl.u32 %v89, 7
  %v91 = vsub.s32 2, %v90
  %v92 = vrot.slane %v79, %v91
  %96 = vmatprep.subr.mxu0 %v77
  %97 = vmatpush1.msra.mxu0 %v76
  %98 = vmatprep.subr.mxu0 %v74
  %99 = vmatpush1.msra.mxu0 %v73
  %100 = vmatprep.subr.mxu0 %v71
  %101 = vmatpush1.msra.mxu0 %v70
  %102 = vmatprep.subr.mxu0 %v68
  %103 = vmatpush1.msra.mxu0 %v67
  %104 = vmatprep.subr.mxu0 %v65
  %105 = vmatpush1.msra.mxu0 %v64
  %106 = vmatprep.subr.mxu0 %v62
  %107 = vmatpush1.msra.mxu0 %v61
  %108 = vmatprep.subr.mxu0 %v59
  %109 = vmatpush1.msra.mxu0 %v58
  %110 = vmatprep.subr.mxu0 %v56
  %111 = vmatpush1.msra.mxu0 %v55
  %112 = vmatprep.subr.mxu0 %v53
  %113 = vmatpush1.msra.mxu0 %v52
  %114 = vmatprep.subr.mxu0 %v50
  %115 = vmatpush1.msra.mxu0 %v49
  %116 = vmatprep.subr.mxu0 %v47
  %117 = vmatpush1.msra.mxu0 %v46
  %118 = vmatprep.subr.mxu0 %v44
  %119 = vmatpush1.msra.mxu0 %v43
  %120 = vmatprep.subr.mxu0 %v41
  %121 = vmatpush1.msra.mxu0 %v40
  %122 = vmatprep.subr.mxu0 %v38
  %123 = vmatpush1.msra.mxu0 %v37
  %124 = vmatprep.subr.mxu0 %v35
  %125 = vmatpush1.msra.mxu0 %v34
  %126 = vmatprep.subr.mxu0 %v32
  %127 = vmatpush1.msra.mxu0 %v31
  %128 = vmatprep.subr.mxu0 0.0
  %129 = vmatpush2.msra.mxu0 0.0
  %130 = vmatprep.subr.mxu0 0.0
  %131 = vmatpush2.msra.mxu0 0.0
  %132 = vmatprep.subr.mxu0 0.0
  %133 = vmatpush2.msra.mxu0 0.0
  %134 = vmatprep.subr.mxu0 0.0
  %135 = vmatpush2.msra.mxu0 0.0
  %136 = vmatprep.subr.mxu0 0.0
  %137 = vmatpush2.msra.mxu0 0.0
  %138 = vmatprep.subr.mxu0 0.0
  %139 = vmatpush2.msra.mxu0 0.0
  %140 = vmatprep.subr.mxu0 0.0
  %141 = vmatpush2.msra.mxu0 0.0
  %142 = vmatprep.subr.mxu0 0.0
  %143 = vmatpush2.msra.mxu0 0.0
  %144 = vmatprep.subr.mxu0 0.0
  %145 = vmatpush2.msra.mxu0 0.0
  %146 = vmatprep.subr.mxu0 0.0
  %147 = vmatpush2.msra.mxu0 0.0
  %148 = vmatprep.subr.mxu0 0.0
  %149 = vmatpush2.msra.mxu0 0.0
  %150 = vmatprep.subr.mxu0 0.0
  %151 = vmatpush2.msra.mxu0 0.0
  %152 = vmatprep.subr.mxu0 0.0
  %153 = vmatpush2.msra.mxu0 0.0
  %154 = vmatprep.subr.mxu0 0.0
  %155 = vmatpush2.msra.mxu0 0.0
  %156 = vmatprep.subr.mxu0 0.0
  %157 = vmatpush2.msra.mxu0 0.0
  %158 = vmatprep.subr.mxu0 0.0
  %159 = vmatpush2.msra.mxu0 0.0
  %160 = vmatprep.mubr.f32.mxu0 0.0
  %161 = vmatmul.mubr.f32.gmra.mxu0 %v29
  %v162 = vpop.f32.mrf.mxu0
  %v163 = vadd.f32 %v84, %v162
  %v164 = vpop.f32.mrf.mxu0
  %v165 = vadd.f32 %v88, %v164
  %166 = vmatprep.mubr.f32.mxu0 0.0
  %167 = vmatmul.mubr.f32.gmra.mxu0 %v30
  %v168 = vpop.f32.mrf.mxu0
  %v169 = vadd.f32 %v84, %v168
  %v170 = vpop.f32.mrf.mxu0
  %v171 = vadd.f32 %v88, %v170
  %172 = vdwg.mxu0
  %173 = vmatprep.subr.mxu0 0.0
  %174 = vmatpush1.msra.mxu0 %v78
  %175 = vmatprep.subr.mxu0 0.0
  %176 = vmatpush1.msra.mxu0 %v75
  %177 = vmatprep.subr.mxu0 0.0
  %178 = vmatpush1.msra.mxu0 %v72
  %179 = vmatprep.subr.mxu0 0.0
  %180 = vmatpush1.msra.mxu0 %v69
  %181 = vmatprep.subr.mxu0 0.0
  %182 = vmatpush1.msra.mxu0 %v66
  %183 = vmatprep.subr.mxu0 0.0
  %184 = vmatpush1.msra.mxu0 %v63
  %185 = vmatprep.subr.mxu0 0.0
  %186 = vmatpush1.msra.mxu0 %v60
  %187 = vmatprep.subr.mxu0 0.0
  %188 = vmatpush1.msra.mxu0 %v57
  %189 = vmatprep.subr.mxu0 0.0
  %190 = vmatpush1.msra.mxu0 %v54
  %191 = vmatprep.subr.mxu0 0.0
  %192 = vmatpush1.msra.mxu0 %v51
  %193 = vmatprep.subr.mxu0 0.0
  %194 = vmatpush1.msra.mxu0 %v48
  %195 = vmatprep.subr.mxu0 0.0
  %196 = vmatpush1.msra.mxu0 %v45
  %197 = vmatprep.subr.mxu0 0.0
  %198 = vmatpush1.msra.mxu0 %v42
  %199 = vmatprep.subr.mxu0 0.0
  %200 = vmatpush1.msra.mxu0 %v39
  %201 = vmatprep.subr.mxu0 0.0
  %202 = vmatpush1.msra.mxu0 %v36
  %203 = vmatprep.subr.mxu0 0.0
  %204 = vmatpush1.msra.mxu0 %v33
  %205 = vmatprep.subr.mxu0 0.0
  %206 = vmatpush2.msra.mxu0 0.0
  %207 = vmatprep.subr.mxu0 0.0
  %208 = vmatpush2.msra.mxu0 0.0
  %209 = vmatprep.subr.mxu0 0.0
  %210 = vmatpush2.msra.mxu0 0.0
  %211 = vmatprep.subr.mxu0 0.0
  %212 = vmatpush2.msra.mxu0 0.0
  %213 = vmatprep.subr.mxu0 0.0
  %214 = vmatpush2.msra.mxu0 0.0
  %215 = vmatprep.subr.mxu0 0.0
  %216 = vmatpush2.msra.mxu0 0.0
  %217 = vmatprep.subr.mxu0 0.0
  %218 = vmatpush2.msra.mxu0 0.0
  %219 = vmatprep.subr.mxu0 0.0
  %220 = vmatpush2.msra.mxu0 0.0
  %221 = vmatprep.subr.mxu0 0.0
  %222 = vmatpush2.msra.mxu0 0.0
  %223 = vmatprep.subr.mxu0 0.0
  %224 = vmatpush2.msra.mxu0 0.0
  %225 = vmatprep.subr.mxu0 0.0
  %226 = vmatpush2.msra.mxu0 0.0
  %227 = vmatprep.subr.mxu0 0.0
  %228 = vmatpush2.msra.mxu0 0.0
  %229 = vmatprep.subr.mxu0 0.0
  %230 = vmatpush2.msra.mxu0 0.0
  %231 = vmatprep.subr.mxu0 0.0
  %232 = vmatpush2.msra.mxu0 0.0
  %233 = vmatprep.subr.mxu0 0.0
  %234 = vmatpush2.msra.mxu0 0.0
  %235 = vmatprep.subr.mxu0 0.0
  %236 = vmatpush2.msra.mxu0 0.0
  %237 = vmatprep.mubr.f32.mxu0 0.0
  %238 = vmatmul.mubr.f32.gmra.mxu0 %v29
  %v239 = vpop.f32.mrf.mxu0
  %v240 = vadd.f32 %v92, %v239
  %v241 = vpop.f32.mrf.mxu0
  %242 = vmatprep.mubr.f32.mxu0 0.0
  %243 = vmatmul.mubr.f32.gmra.mxu0 %v30
  %v244 = vpop.f32.mrf.mxu0
  %v245 = vadd.f32 %v92, %v244
  %v246 = vpop.f32.mrf.mxu0
  %247 = vdwg.mxu0
  %v248 = vld [vmem:[%s5] sm:$0xff]
  %v249 = vld [vmem:[%s5 + $0x8] sm:$0xff]
  %vm250 = vcmask 261120
  %v252 = vsel %vm250, %v163, 0
  %v255 = vsel %vm250, %v169, 0
  %v258 = vsel %vm250, %v165, 0
  %v261 = vsel %vm250, %v171, 0
  %263 = vmatprep.subr.mxu0 0.0
  %264 = vmatpush1.xpose.msra.mxu0 0.0
  %265 = vmatprep.subr.mxu0 0.0
  %266 = vmatpush1.xpose.msra.mxu0 0.0
  %267 = vmatprep.subr.mxu0 0.0
  %268 = vmatpush1.xpose.msra.mxu0 0.0
  %269 = vmatprep.subr.mxu0 0.0
  %270 = vmatpush1.xpose.msra.mxu0 0.0
  %271 = vmatprep.subr.mxu0 0.0
  %272 = vmatpush1.xpose.msra.mxu0 0.0
  %273 = vmatprep.subr.mxu0 0.0
  %274 = vmatpush1.xpose.msra.mxu0 0.0
  %275 = vmatprep.subr.mxu0 0.0
  %276 = vmatpush1.xpose.msra.mxu0 0.0
  %277 = vmatprep.subr.mxu0 0.0
  %278 = vmatpush1.xpose.msra.mxu0 0.0
  %279 = vmatprep.subr.mxu0 0.0
  %280 = vmatpush1.xpose.msra.mxu0 0.0
  %281 = vmatprep.subr.mxu0 0.0
  %282 = vmatpush1.xpose.msra.mxu0 0.0
  %283 = vmatprep.subr.mxu0 0.0
  %284 = vmatpush1.xpose.msra.mxu0 0.0
  %285 = vmatprep.subr.mxu0 0.0
  %286 = vmatpush1.xpose.msra.mxu0 0.0
  %287 = vmatprep.subr.mxu0 0.0
  %288 = vmatpush1.xpose.msra.mxu0 0.0
  %289 = vmatprep.subr.mxu0 0.0
  %290 = vmatpush1.xpose.msra.mxu0 0.0
  %291 = vmatprep.subr.mxu0 0.0
  %292 = vmatpush1.xpose.msra.mxu0 %v261
  %293 = vmatprep.subr.mxu0 0.0
  %294 = vmatpush1.xpose.msra.mxu0 %v258
  %295 = vmatprep.subr.mxu0 0.0
  %296 = vmatpush2.xpose.msra.mxu0 0.0
  %297 = vmatprep.subr.mxu0 0.0
  %298 = vmatpush2.xpose.msra.mxu0 0.0
  %299 = vmatprep.subr.mxu0 0.0
  %300 = vmatpush2.xpose.msra.mxu0 0.0
  %301 = vmatprep.subr.mxu0 0.0
  %302 = vmatpush2.xpose.msra.mxu0 0.0
  %303 = vmatprep.subr.mxu0 0.0
  %304 = vmatpush2.xpose.msra.mxu0 0.0
  %305 = vmatprep.subr.mxu0 0.0
  %306 = vmatpush2.xpose.msra.mxu0 0.0
  %307 = vmatprep.subr.mxu0 0.0
  %308 = vmatpush2.xpose.msra.mxu0 0.0
  %309 = vmatprep.subr.mxu0 0.0
  %310 = vmatpush2.xpose.msra.mxu0 0.0
  %311 = vmatprep.subr.mxu0 0.0
  %312 = vmatpush2.xpose.msra.mxu0 0.0
  %313 = vmatprep.subr.mxu0 0.0
  %314 = vmatpush2.xpose.msra.mxu0 0.0
  %315 = vmatprep.subr.mxu0 0.0
  %316 = vmatpush2.xpose.msra.mxu0 0.0
  %317 = vmatprep.subr.mxu0 0.0
  %318 = vmatpush2.xpose.msra.mxu0 0.0
  %319 = vmatprep.subr.mxu0 0.0
  %320 = vmatpush2.xpose.msra.mxu0 0.0
  %321 = vmatprep.subr.mxu0 0.0
  %322 = vmatpush2.xpose.msra.mxu0 0.0
  %323 = vmatprep.subr.mxu0 0.0
  %324 = vmatpush2.xpose.msra.mxu0 0.0
  %325 = vmatprep.subr.mxu0 0.0
  %326 = vmatpush2.xpose.msra.mxu0 0.0
  %327 = vmatprep.mubr.f32.mxu0 0.0
  %328 = vmatmul.mubr.f32.gmra.mxu0 %v252
  %v329 = vpop.f32.mrf.mxu0
  %v330 = vadd.f32 0.0, %v329
  %v331 = vpop.f32.mrf.mxu0
  %332 = vmatprep.mubr.f32.mxu0 0.0
  %333 = vmatmul.mubr.f32.gmra.mxu0 %v255
  %v334 = vpop.f32.mrf.mxu0
  %v335 = vadd.f32 0.0, %v334
  %v336 = vpop.f32.mrf.mxu0
  %337 = vdwg.mxu0
  %v338 = vmul.f32 %v330, 0.17677669
  %v339 = vmul.f32 %v335, 0.17677669
  %v340 = vadd.f32 %v338, %v248
  %v341 = vadd.f32 %v339, %v249
  %vm342 = vcmask 130048
  %v343 = vsel %vm342, %v340, -inf
  %344 = vmax.xlane.f32.xlu0 %v343
  %v345 = vpop.xlane.xlu0 %344
  %v346 = vsel %vm342, %v341, -inf
  %347 = vmax.xlane.f32.xlu0 %v346
  %v348 = vpop.xlane.xlu0 %347
  %v349 = vsub.f32 %v340, %v345
  %v350 = vsub.f32 %v341, %v348
  %v351 = vmul.f32 %v349, 1.442695
  %v352 = vpow.pop %v351
  %v353 = vmul.f32 %v350, 1.442695
  %v354 = vpow.pop %v353
  %v355 = vsel %vm342, %v352, 0.0
  %356 = vadd.xlane.f32.xlu0 %v355
  %v357 = vpop.xlane.xlu0 %356
  %v358 = vsel %vm342, %v354, 0.0
  %359 = vadd.xlane.f32.xlu0 %v358
  %v360 = vpop.xlane.xlu0 %359
  %v361 = vrcp.pop %v357
  %v362 = vmul.f32 %v352, %v361
  %v363 = vrcp.pop %v360
  %v364 = vmul.f32 %v354, %v363
  %v366 = vsel %vm342, %v362, 0
  %v369 = vsel %vm342, %v364, 0
  %371 = vmatprep.subr.mxu0 0.0
  %372 = vmatpush1.msra.mxu0 0.0
  %373 = vmatprep.subr.mxu0 0.0
  %374 = vmatpush1.msra.mxu0 0.0
  %375 = vmatprep.subr.mxu0 0.0
  %376 = vmatpush1.msra.mxu0 0.0
  %377 = vmatprep.subr.mxu0 0.0
  %378 = vmatpush1.msra.mxu0 0.0
  %379 = vmatprep.subr.mxu0 0.0
  %380 = vmatpush1.msra.mxu0 0.0
  %381 = vmatprep.subr.mxu0 0.0
  %382 = vmatpush1.msra.mxu0 0.0
  %383 = vmatprep.subr.mxu0 0.0
  %384 = vmatpush1.msra.mxu0 0.0
  %385 = vmatprep.subr.mxu0 0.0
  %386 = vmatpush1.msra.mxu0 0.0
  %387 = vmatprep.subr.mxu0 0.0
  %388 = vmatpush1.msra.mxu0 0.0
  %389 = vmatprep.subr.mxu0 0.0
  %390 = vmatpush1.msra.mxu0 0.0
  %391 = vmatprep.subr.mxu0 0.0
  %392 = vmatpush1.msra.mxu0 0.0
  %393 = vmatprep.subr.mxu0 0.0
  %394 = vmatpush1.msra.mxu0 0.0
  %395 = vmatprep.subr.mxu0 0.0
  %396 = vmatpush1.msra.mxu0 0.0
  %397 = vmatprep.subr.mxu0 0.0
  %398 = vmatpush1.msra.mxu0 0.0
  %399 = vmatprep.subr.mxu0 0.0
  %400 = vmatpush1.msra.mxu0 %v245
  %401 = vmatprep.subr.mxu0 0.0
  %402 = vmatpush1.msra.mxu0 %v240
  %403 = vmatprep.subr.mxu0 0.0
  %404 = vmatpush2.msra.mxu0 0.0
  %405 = vmatprep.subr.mxu0 0.0
  %406 = vmatpush2.msra.mxu0 0.0
  %407 = vmatprep.subr.mxu0 0.0
  %408 = vmatpush2.msra.mxu0 0.0
  %409 = vmatprep.subr.mxu0 0.0
  %410 = vmatpush2.msra.mxu0 0.0
  %411 = vmatprep.subr.mxu0 0.0
  %412 = vmatpush2.msra.mxu0 0.0
  %413 = vmatprep.subr.mxu0 0.0
  %414 = vmatpush2.msra.mxu0 0.0
  %415 = vmatprep.subr.mxu0 0.0
  %416 = vmatpush2.msra.mxu0 0.0
  %417 = vmatprep.subr.mxu0 0.0
  %418 = vmatpush2.msra.mxu0 0.0
  %419 = vmatprep.subr.mxu0 0.0
  %420 = vmatpush2.msra.mxu0 0.0
  %421 = vmatprep.subr.mxu0 0.0
  %422 = vmatpush2.msra.mxu0 0.0
  %423 = vmatprep.subr.mxu0 0.0
  %424 = vmatpush2.msra.mxu0 0.0
  %425 = vmatprep.subr.mxu0 0.0
  %426 = vmatpush2.msra.mxu0 0.0
  %427 = vmatprep.subr.mxu0 0.0
  %428 = vmatpush2.msra.mxu0 0.0
  %429 = vmatprep.subr.mxu0 0.0
  %430 = vmatpush2.msra.mxu0 0.0
  %431 = vmatprep.subr.mxu0 0.0
  %432 = vmatpush2.msra.mxu0 0.0
  %433 = vmatprep.subr.mxu0 0.0
  %434 = vmatpush2.msra.mxu0 0.0
  %435 = vmatprep.mubr.f32.mxu0 0.0
  %436 = vmatmul.mubr.f32.gmra.mxu0 %v366
  %v437 = vpop.f32.mrf.mxu0
  %v438 = vadd.f32 0.0, %v437
  %v439 = vpop.f32.mrf.mxu0
  %440 = vmatprep.mubr.f32.mxu0 0.0
  %441 = vmatmul.mubr.f32.gmra.mxu0 %v369
  %v442 = vpop.f32.mrf.mxu0
  %v443 = vadd.f32 0.0, %v442
  %v444 = vpop.f32.mrf.mxu0
  %445 = vdwg.mxu0
  %v446 = vld [vmem:[%s3] sm:$0xff]
  %v447 = vld [vmem:[%s3 + $0x8] sm:$0xff]
  %v448 = vld [vmem:[%s3 + $0x10] sm:$0xff]
  %v449 = vld [vmem:[%s3 + $0x18] sm:$0xff]
  %450 = vrot.lane.b32.xlu0 %v163, 96
  %v451 = vpop.permute.xlu0 %450
  %452 = vrot.lane.b32.xlu0 %v169, 96
  %v453 = vpop.permute.xlu0 %452
  %454 = vrot.lane.b32.xlu0 %v165, 96
  %v455 = vpop.permute.xlu0 %454
  %456 = vrot.lane.b32.xlu0 %v171, 96
  %v457 = vpop.permute.xlu0 %456
  %v458 = vsel %vm250, %v451, 0
  %v460 = vsel %vm250, %v453, 0
  %v462 = vsel %vm250, %v455, 0
  %v464 = vsel %vm250, %v457, 0
  %466 = vmatprep.subr.mxu0 0.0
  %467 = vmatpush1.xpose.msra.mxu0 0.0
  %468 = vmatprep.subr.mxu0 0.0
  %469 = vmatpush1.xpose.msra.mxu0 0.0
  %470 = vmatprep.subr.mxu0 0.0
  %471 = vmatpush1.xpose.msra.mxu0 0.0
  %472 = vmatprep.subr.mxu0 0.0
  %473 = vmatpush1.xpose.msra.mxu0 0.0
  %474 = vmatprep.subr.mxu0 0.0
  %475 = vmatpush1.xpose.msra.mxu0 0.0
  %476 = vmatprep.subr.mxu0 0.0
  %477 = vmatpush1.xpose.msra.mxu0 0.0
  %478 = vmatprep.subr.mxu0 0.0
  %479 = vmatpush1.xpose.msra.mxu0 0.0
  %480 = vmatprep.subr.mxu0 0.0
  %481 = vmatpush1.xpose.msra.mxu0 0.0
  %482 = vmatprep.subr.mxu0 0.0
  %483 = vmatpush1.xpose.msra.mxu0 0.0
  %484 = vmatprep.subr.mxu0 0.0
  %485 = vmatpush1.xpose.msra.mxu0 0.0
  %486 = vmatprep.subr.mxu0 0.0
  %487 = vmatpush1.xpose.msra.mxu0 0.0
  %488 = vmatprep.subr.mxu0 0.0
  %489 = vmatpush1.xpose.msra.mxu0 0.0
  %490 = vmatprep.subr.mxu0 0.0
  %491 = vmatpush1.xpose.msra.mxu0 0.0
  %492 = vmatprep.subr.mxu0 0.0
  %493 = vmatpush1.xpose.msra.mxu0 0.0
  %494 = vmatprep.subr.mxu0 0.0
  %495 = vmatpush1.xpose.msra.mxu0 %v464
  %496 = vmatprep.subr.mxu0 0.0
  %497 = vmatpush1.xpose.msra.mxu0 %v462
  %498 = vmatprep.subr.mxu0 0.0
  %499 = vmatpush2.xpose.msra.mxu0 0.0
  %500 = vmatprep.subr.mxu0 0.0
  %501 = vmatpush2.xpose.msra.mxu0 0.0
  %502 = vmatprep.subr.mxu0 0.0
  %503 = vmatpush2.xpose.msra.mxu0 0.0
  %504 = vmatprep.subr.mxu0 0.0
  %505 = vmatpush2.xpose.msra.mxu0 0.0
  %506 = vmatprep.subr.mxu0 0.0
  %507 = vmatpush2.xpose.msra.mxu0 0.0
  %508 = vmatprep.subr.mxu0 0.0
  %509 = vmatpush2.xpose.msra.mxu0 0.0
  %510 = vmatprep.subr.mxu0 0.0
  %511 = vmatpush2.xpose.msra.mxu0 0.0
  %512 = vmatprep.subr.mxu0 0.0
  %513 = vmatpush2.xpose.msra.mxu0 0.0
  %514 = vmatprep.subr.mxu0 0.0
  %515 = vmatpush2.xpose.msra.mxu0 0.0
  %516 = vmatprep.subr.mxu0 0.0
  %517 = vmatpush2.xpose.msra.mxu0 0.0
  %518 = vmatprep.subr.mxu0 0.0
  %519 = vmatpush2.xpose.msra.mxu0 0.0
  %520 = vmatprep.subr.mxu0 0.0
  %521 = vmatpush2.xpose.msra.mxu0 0.0
  %522 = vmatprep.subr.mxu0 0.0
  %523 = vmatpush2.xpose.msra.mxu0 0.0
  %524 = vmatprep.subr.mxu0 0.0
  %525 = vmatpush2.xpose.msra.mxu0 0.0
  %526 = vmatprep.subr.mxu0 0.0
  %527 = vmatpush2.xpose.msra.mxu0 0.0
  %528 = vmatprep.subr.mxu0 0.0
  %529 = vmatpush2.xpose.msra.mxu0 0.0
  %530 = vmatprep.mubr.f32.mxu0 0.0
  %531 = vmatmul.mubr.f32.gmra.mxu0 %v458
  %v532 = vpop.f32.mrf.mxu0
  %v533 = vadd.f32 0.0, %v532
  %v534 = vpop.f32.mrf.mxu0
  %535 = vmatprep.mubr.f32.mxu0 0.0
  %536 = vmatmul.mubr.f32.gmra.mxu0 %v460
  %v537 = vpop.f32.mrf.mxu0
  %v538 = vadd.f32 0.0, %v537
  %v539 = vpop.f32.mrf.mxu0
  %540 = vdwg.mxu0
  %v541 = vmul.f32 %v533, 0.17677669
  %v542 = vmul.f32 %v538, 0.17677669
  %v543 = vadd.f32 %v541, %v248
  %v544 = vadd.f32 %v542, %v249
  %v545 = vsel %vm342, %v543, -inf
  %546 = vmax.xlane.f32.xlu0 %v545
  %v547 = vpop.xlane.xlu0 %546
  %v548 = vsel %vm342, %v544, -inf
  %549 = vmax.xlane.f32.xlu0 %v548
  %v550 = vpop.xlane.xlu0 %549
  %v551 = vsub.f32 %v543, %v547
  %v552 = vsub.f32 %v544, %v550
  %v553 = vmul.f32 %v551, 1.442695
  %v554 = vpow.pop %v553
  %v555 = vmul.f32 %v552, 1.442695
  %v556 = vpow.pop %v555
  %v557 = vsel %vm342, %v554, 0.0
  %558 = vadd.xlane.f32.xlu0 %v557
  %v559 = vpop.xlane.xlu0 %558
  %v560 = vsel %vm342, %v556, 0.0
  %561 = vadd.xlane.f32.xlu0 %v560
  %v562 = vpop.xlane.xlu0 %561
  %v563 = vrcp.pop %v559
  %v564 = vmul.f32 %v554, %v563
  %v565 = vrcp.pop %v562
  %v566 = vmul.f32 %v556, %v565
  %569 = vrot.lane.b32.xlu0 %v240, 96
  %v570 = vpop.permute.xlu0 %569
  %571 = vrot.lane.b32.xlu0 %v245, 96
  %v572 = vpop.permute.xlu0 %571
  %v576 = vsel %vm342, %v564, 0
  %v579 = vsel %vm342, %v566, 0
  %581 = vmatprep.subr.mxu0 0.0
  %582 = vmatpush1.msra.mxu0 0.0
  %583 = vmatprep.subr.mxu0 0.0
  %584 = vmatpush1.msra.mxu0 0.0
  %585 = vmatprep.subr.mxu0 0.0
  %586 = vmatpush1.msra.mxu0 0.0
  %587 = vmatprep.subr.mxu0 0.0
  %588 = vmatpush1.msra.mxu0 0.0
  %589 = vmatprep.subr.mxu0 0.0
  %590 = vmatpush1.msra.mxu0 0.0
  %591 = vmatprep.subr.mxu0 0.0
  %592 = vmatpush1.msra.mxu0 0.0
  %593 = vmatprep.subr.mxu0 0.0
  %594 = vmatpush1.msra.mxu0 0.0
  %595 = vmatprep.subr.mxu0 0.0
  %596 = vmatpush1.msra.mxu0 0.0
  %597 = vmatprep.subr.mxu0 0.0
  %598 = vmatpush1.msra.mxu0 0.0
  %599 = vmatprep.subr.mxu0 0.0
  %600 = vmatpush1.msra.mxu0 0.0
  %601 = vmatprep.subr.mxu0 0.0
  %602 = vmatpush1.msra.mxu0 0.0
  %603 = vmatprep.subr.mxu0 0.0
  %604 = vmatpush1.msra.mxu0 0.0
  %605 = vmatprep.subr.mxu0 0.0
  %606 = vmatpush1.msra.mxu0 0.0
  %607 = vmatprep.subr.mxu0 0.0
  %608 = vmatpush1.msra.mxu0 0.0
  %609 = vmatprep.subr.mxu0 0.0
  %610 = vmatpush1.msra.mxu0 %v572
  %611 = vmatprep.subr.mxu0 0.0
  %612 = vmatpush1.msra.mxu0 %v570
  %613 = vmatprep.subr.mxu0 0.0
  %614 = vmatpush2.msra.mxu0 0.0
  %615 = vmatprep.subr.mxu0 0.0
  %616 = vmatpush2.msra.mxu0 0.0
  %617 = vmatprep.subr.mxu0 0.0
  %618 = vmatpush2.msra.mxu0 0.0
  %619 = vmatprep.subr.mxu0 0.0
  %620 = vmatpush2.msra.mxu0 0.0
  %621 = vmatprep.subr.mxu0 0.0
  %622 = vmatpush2.msra.mxu0 0.0
  %623 = vmatprep.subr.mxu0 0.0
  %624 = vmatpush2.msra.mxu0 0.0
  %625 = vmatprep.subr.mxu0 0.0
  %626 = vmatpush2.msra.mxu0 0.0
  %627 = vmatprep.subr.mxu0 0.0
  %628 = vmatpush2.msra.mxu0 0.0
  %629 = vmatprep.subr.mxu0 0.0
  %630 = vmatpush2.msra.mxu0 0.0
  %631 = vmatprep.subr.mxu0 0.0
  %632 = vmatpush2.msra.mxu0 0.0
  %633 = vmatprep.subr.mxu0 0.0
  %634 = vmatpush2.msra.mxu0 0.0
  %635 = vmatprep.subr.mxu0 0.0
  %636 = vmatpush2.msra.mxu0 0.0
  %637 = vmatprep.subr.mxu0 0.0
  %638 = vmatpush2.msra.mxu0 0.0
  %639 = vmatprep.subr.mxu0 0.0
  %640 = vmatpush2.msra.mxu0 0.0
  %641 = vmatprep.subr.mxu0 0.0
  %642 = vmatpush2.msra.mxu0 0.0
  %643 = vmatprep.subr.mxu0 0.0
  %644 = vmatpush2.msra.mxu0 0.0
  %645 = vmatprep.mubr.f32.mxu0 0.0
  %646 = vmatmul.mubr.f32.gmra.mxu0 %v576
  %v647 = vpop.f32.mrf.mxu0
  %v648 = vadd.f32 0.0, %v647
  %v649 = vpop.f32.mrf.mxu0
  %650 = vmatprep.mubr.f32.mxu0 0.0
  %651 = vmatmul.mubr.f32.gmra.mxu0 %v579
  %v652 = vpop.f32.mrf.mxu0
  %v653 = vadd.f32 0.0, %v652
  %v654 = vpop.f32.mrf.mxu0
  %655 = vdwg.mxu0
  %v656 = vld [vmem:[%s3 + $0x20] sm:$0xff]
  %v657 = vld [vmem:[%s3 + $0x28] sm:$0xff]
  %v658 = vld [vmem:[%s3 + $0x30] sm:$0xff]
  %v659 = vld [vmem:[%s3 + $0x38] sm:$0xff]
  %v661 = vsel %vm250, %v648, 0
  %v664 = vsel %vm250, %v653, 0
  %666 = vmatprep.subr.mxu0 0.0
  %667 = vmatpush1.msra.mxu0 0.0
  %668 = vmatprep.subr.mxu0 0.0
  %669 = vmatpush1.msra.mxu0 0.0
  %670 = vmatprep.subr.mxu0 0.0
  %671 = vmatpush1.msra.mxu0 0.0
  %672 = vmatprep.subr.mxu0 0.0
  %673 = vmatpush1.msra.mxu0 0.0
  %674 = vmatprep.subr.mxu0 0.0
  %675 = vmatpush1.msra.mxu0 0.0
  %676 = vmatprep.subr.mxu0 0.0
  %677 = vmatpush1.msra.mxu0 0.0
  %678 = vmatprep.subr.mxu0 0.0
  %679 = vmatpush1.msra.mxu0 0.0
  %680 = vmatprep.subr.mxu0 0.0
  %681 = vmatpush1.msra.mxu0 0.0
  %682 = vmatprep.subr.mxu0 0.0
  %683 = vmatpush1.msra.mxu0 0.0
  %684 = vmatprep.subr.mxu0 0.0
  %685 = vmatpush1.msra.mxu0 0.0
  %686 = vmatprep.subr.mxu0 0.0
  %687 = vmatpush1.msra.mxu0 0.0
  %688 = vmatprep.subr.mxu0 0.0
  %689 = vmatpush1.msra.mxu0 0.0
  %690 = vmatprep.subr.mxu0 0.0
  %691 = vmatpush1.msra.mxu0 %v659
  %692 = vmatprep.subr.mxu0 0.0
  %693 = vmatpush1.msra.mxu0 %v658
  %694 = vmatprep.subr.mxu0 0.0
  %695 = vmatpush1.msra.mxu0 %v657
  %696 = vmatprep.subr.mxu0 0.0
  %697 = vmatpush1.msra.mxu0 %v656
  %698 = vmatprep.subr.mxu0 0.0
  %699 = vmatpush2.msra.mxu0 0.0
  %700 = vmatprep.subr.mxu0 0.0
  %701 = vmatpush2.msra.mxu0 0.0
  %702 = vmatprep.subr.mxu0 0.0
  %703 = vmatpush2.msra.mxu0 0.0
  %704 = vmatprep.subr.mxu0 0.0
  %705 = vmatpush2.msra.mxu0 0.0
  %706 = vmatprep.subr.mxu0 0.0
  %707 = vmatpush2.msra.mxu0 0.0
  %708 = vmatprep.subr.mxu0 0.0
  %709 = vmatpush2.msra.mxu0 0.0
  %710 = vmatprep.subr.mxu0 0.0
  %711 = vmatpush2.msra.mxu0 0.0
  %712 = vmatprep.subr.mxu0 0.0
  %713 = vmatpush2.msra.mxu0 0.0
  %714 = vmatprep.subr.mxu0 0.0
  %715 = vmatpush2.msra.mxu0 0.0
  %716 = vmatprep.subr.mxu0 0.0
  %717 = vmatpush2.msra.mxu0 0.0
  %718 = vmatprep.subr.mxu0 0.0
  %719 = vmatpush2.msra.mxu0 0.0
  %720 = vmatprep.subr.mxu0 0.0
  %721 = vmatpush2.msra.mxu0 0.0
  %722 = vmatprep.subr.mxu0 0.0
  %723 = vmatpush2.msra.mxu0 0.0
  %724 = vmatprep.subr.mxu0 0.0
  %725 = vmatpush2.msra.mxu0 0.0
  %726 = vmatprep.subr.mxu0 0.0
  %727 = vmatpush2.msra.mxu0 0.0
  %728 = vmatprep.subr.mxu0 0.0
  %729 = vmatpush2.msra.mxu0 0.0
  %730 = vmatprep.mubr.f32.mxu0 0.0
  %731 = vmatmul.mubr.f32.gmra.mxu0 %v661
  %v732 = vpop.f32.mrf.mxu0
  %v733 = vadd.f32 0.0, %v732
  %v734 = vpop.f32.mrf.mxu0
  %735 = vmatprep.mubr.f32.mxu0 0.0
  %736 = vmatmul.mubr.f32.gmra.mxu0 %v664
  %v737 = vpop.f32.mrf.mxu0
  %v738 = vadd.f32 0.0, %v737
  %v739 = vpop.f32.mrf.mxu0
  %740 = vdwg.mxu0
  %v742 = vsel %vm250, %v438, 0
  %v745 = vsel %vm250, %v443, 0
  %747 = vmatprep.subr.mxu0 0.0
  %748 = vmatpush1.msra.mxu0 0.0
  %749 = vmatprep.subr.mxu0 0.0
  %750 = vmatpush1.msra.mxu0 0.0
  %751 = vmatprep.subr.mxu0 0.0
  %752 = vmatpush1.msra.mxu0 0.0
  %753 = vmatprep.subr.mxu0 0.0
  %754 = vmatpush1.msra.mxu0 0.0
  %755 = vmatprep.subr.mxu0 0.0
  %756 = vmatpush1.msra.mxu0 0.0
  %757 = vmatprep.subr.mxu0 0.0
  %758 = vmatpush1.msra.mxu0 0.0
  %759 = vmatprep.subr.mxu0 0.0
  %760 = vmatpush1.msra.mxu0 0.0
  %761 = vmatprep.subr.mxu0 0.0
  %762 = vmatpush1.msra.mxu0 0.0
  %763 = vmatprep.subr.mxu0 0.0
  %764 = vmatpush1.msra.mxu0 0.0
  %765 = vmatprep.subr.mxu0 0.0
  %766 = vmatpush1.msra.mxu0 0.0
  %767 = vmatprep.subr.mxu0 0.0
  %768 = vmatpush1.msra.mxu0 0.0
  %769 = vmatprep.subr.mxu0 0.0
  %770 = vmatpush1.msra.mxu0 0.0
  %771 = vmatprep.subr.mxu0 0.0
  %772 = vmatpush1.msra.mxu0 %v449
  %773 = vmatprep.subr.mxu0 0.0
  %774 = vmatpush1.msra.mxu0 %v448
  %775 = vmatprep.subr.mxu0 0.0
  %776 = vmatpush1.msra.mxu0 %v447
  %777 = vmatprep.subr.mxu0 0.0
  %778 = vmatpush1.msra.mxu0 %v446
  %779 = vmatprep.subr.mxu0 0.0
  %780 = vmatpush2.msra.mxu0 0.0
  %781 = vmatprep.subr.mxu0 0.0
  %782 = vmatpush2.msra.mxu0 0.0
  %783 = vmatprep.subr.mxu0 0.0
  %784 = vmatpush2.msra.mxu0 0.0
  %785 = vmatprep.subr.mxu0 0.0
  %786 = vmatpush2.msra.mxu0 0.0
  %787 = vmatprep.subr.mxu0 0.0
  %788 = vmatpush2.msra.mxu0 0.0
  %789 = vmatprep.subr.mxu0 0.0
  %790 = vmatpush2.msra.mxu0 0.0
  %791 = vmatprep.subr.mxu0 0.0
  %792 = vmatpush2.msra.mxu0 0.0
  %793 = vmatprep.subr.mxu0 0.0
  %794 = vmatpush2.msra.mxu0 0.0
  %795 = vmatprep.subr.mxu0 0.0
  %796 = vmatpush2.msra.mxu0 0.0
  %797 = vmatprep.subr.mxu0 0.0
  %798 = vmatpush2.msra.mxu0 0.0
  %799 = vmatprep.subr.mxu0 0.0
  %800 = vmatpush2.msra.mxu0 0.0
  %801 = vmatprep.subr.mxu0 0.0
  %802 = vmatpush2.msra.mxu0 0.0
  %803 = vmatprep.subr.mxu0 0.0
  %804 = vmatpush2.msra.mxu0 0.0
  %805 = vmatprep.subr.mxu0 0.0
  %806 = vmatpush2.msra.mxu0 0.0
  %807 = vmatprep.subr.mxu0 0.0
  %808 = vmatpush2.msra.mxu0 0.0
  %809 = vmatprep.subr.mxu0 0.0
  %810 = vmatpush2.msra.mxu0 0.0
  %811 = vmatprep.mubr.f32.mxu0 0.0
  %812 = vmatmul.mubr.f32.gmra.mxu0 %v742
  %v813 = vpop.f32.mrf.mxu0
  %v814 = vadd.f32 %v733, %v813
  %v815 = vpop.f32.mrf.mxu0
  %816 = vmatprep.mubr.f32.mxu0 0.0
  %817 = vmatmul.mubr.f32.gmra.mxu0 %v745
  %v818 = vpop.f32.mrf.mxu0
  %v819 = vadd.f32 %v738, %v818
  %v820 = vpop.f32.mrf.mxu0
  %821 = vdwg.mxu0
  %822 = vrot.lane.b32.xlu0 %v163, 64
  %v823 = vpop.permute.xlu0 %822
  %824 = vrot.lane.b32.xlu0 %v169, 64
  %v825 = vpop.permute.xlu0 %824
  %826 = vrot.lane.b32.xlu0 %v165, 64
  %v827 = vpop.permute.xlu0 %826
  %828 = vrot.lane.b32.xlu0 %v171, 64
  %v829 = vpop.permute.xlu0 %828
  %v830 = vsel %vm250, %v823, 0
  %v832 = vsel %vm250, %v825, 0
  %v834 = vsel %vm250, %v827, 0
  %v836 = vsel %vm250, %v829, 0
  %838 = vmatprep.subr.mxu0 0.0
  %839 = vmatpush1.xpose.msra.mxu0 0.0
  %840 = vmatprep.subr.mxu0 0.0
  %841 = vmatpush1.xpose.msra.mxu0 0.0
  %842 = vmatprep.subr.mxu0 0.0
  %843 = vmatpush1.xpose.msra.mxu0 0.0
  %844 = vmatprep.subr.mxu0 0.0
  %845 = vmatpush1.xpose.msra.mxu0 0.0
  %846 = vmatprep.subr.mxu0 0.0
  %847 = vmatpush1.xpose.msra.mxu0 0.0
  %848 = vmatprep.subr.mxu0 0.0
  %849 = vmatpush1.xpose.msra.mxu0 0.0
  %850 = vmatprep.subr.mxu0 0.0
  %851 = vmatpush1.xpose.msra.mxu0 0.0
  %852 = vmatprep.subr.mxu0 0.0
  %853 = vmatpush1.xpose.msra.mxu0 0.0
  %854 = vmatprep.subr.mxu0 0.0
  %855 = vmatpush1.xpose.msra.mxu0 0.0
  %856 = vmatprep.subr.mxu0 0.0
  %857 = vmatpush1.xpose.msra.mxu0 0.0
  %858 = vmatprep.subr.mxu0 0.0
  %859 = vmatpush1.xpose.msra.mxu0 0.0
  %860 = vmatprep.subr.mxu0 0.0
  %861 = vmatpush1.xpose.msra.mxu0 0.0
  %862 = vmatprep.subr.mxu0 0.0
  %863 = vmatpush1.xpose.msra.mxu0 0.0
  %864 = vmatprep.subr.mxu0 0.0
  %865 = vmatpush1.xpose.msra.mxu0 0.0
  %866 = vmatprep.subr.mxu0 0.0
  %867 = vmatpush1.xpose.msra.mxu0 %v836
  %868 = vmatprep.subr.mxu0 0.0
  %869 = vmatpush1.xpose.msra.mxu0 %v834
  %870 = vmatprep.subr.mxu0 0.0
  %871 = vmatpush2.xpose.msra.mxu0 0.0
  %872 = vmatprep.subr.mxu0 0.0
  %873 = vmatpush2.xpose.msra.mxu0 0.0
  %874 = vmatprep.subr.mxu0 0.0
  %875 = vmatpush2.xpose.msra.mxu0 0.0
  %876 = vmatprep.subr.mxu0 0.0
  %877 = vmatpush2.xpose.msra.mxu0 0.0
  %878 = vmatprep.subr.mxu0 0.0
  %879 = vmatpush2.xpose.msra.mxu0 0.0
  %880 = vmatprep.subr.mxu0 0.0
  %881 = vmatpush2.xpose.msra.mxu0 0.0
  %882 = vmatprep.subr.mxu0 0.0
  %883 = vmatpush2.xpose.msra.mxu0 0.0
  %884 = vmatprep.subr.mxu0 0.0
  %885 = vmatpush2.xpose.msra.mxu0 0.0
  %886 = vmatprep.subr.mxu0 0.0
  %887 = vmatpush2.xpose.msra.mxu0 0.0
  %888 = vmatprep.subr.mxu0 0.0
  %889 = vmatpush2.xpose.msra.mxu0 0.0
  %890 = vmatprep.subr.mxu0 0.0
  %891 = vmatpush2.xpose.msra.mxu0 0.0
  %892 = vmatprep.subr.mxu0 0.0
  %893 = vmatpush2.xpose.msra.mxu0 0.0
  %894 = vmatprep.subr.mxu0 0.0
  %895 = vmatpush2.xpose.msra.mxu0 0.0
  %896 = vmatprep.subr.mxu0 0.0
  %897 = vmatpush2.xpose.msra.mxu0 0.0
  %898 = vmatprep.subr.mxu0 0.0
  %899 = vmatpush2.xpose.msra.mxu0 0.0
  %900 = vmatprep.subr.mxu0 0.0
  %901 = vmatpush2.xpose.msra.mxu0 0.0
  %902 = vmatprep.mubr.f32.mxu0 0.0
  %903 = vmatmul.mubr.f32.gmra.mxu0 %v830
  %v904 = vpop.f32.mrf.mxu0
  %v905 = vadd.f32 0.0, %v904
  %v906 = vpop.f32.mrf.mxu0
  %907 = vmatprep.mubr.f32.mxu0 0.0
  %908 = vmatmul.mubr.f32.gmra.mxu0 %v832
  %v909 = vpop.f32.mrf.mxu0
  %v910 = vadd.f32 0.0, %v909
  %v911 = vpop.f32.mrf.mxu0
  %912 = vdwg.mxu0
  %v913 = vmul.f32 %v905, 0.17677669
  %v914 = vmul.f32 %v910, 0.17677669
  %v915 = vadd.f32 %v913, %v248
  %v916 = vadd.f32 %v914, %v249
  %v917 = vsel %vm342, %v915, -inf
  %918 = vmax.xlane.f32.xlu0 %v917
  %v919 = vpop.xlane.xlu0 %918
  %v920 = vsel %vm342, %v916, -inf
  %921 = vmax.xlane.f32.xlu0 %v920
  %v922 = vpop.xlane.xlu0 %921
  %v923 = vsub.f32 %v915, %v919
  %v924 = vsub.f32 %v916, %v922
  %v925 = vmul.f32 %v923, 1.442695
  %v926 = vpow.pop %v925
  %v927 = vmul.f32 %v924, 1.442695
  %v928 = vpow.pop %v927
  %v929 = vsel %vm342, %v926, 0.0
  %930 = vadd.xlane.f32.xlu0 %v929
  %v931 = vpop.xlane.xlu0 %930
  %v932 = vsel %vm342, %v928, 0.0
  %933 = vadd.xlane.f32.xlu0 %v932
  %v934 = vpop.xlane.xlu0 %933
  %v935 = vrcp.pop %v931
  %v936 = vmul.f32 %v926, %v935
  %v937 = vrcp.pop %v934
  %v938 = vmul.f32 %v928, %v937
  %939 = vrot.lane.b32.xlu0 %v240, 64
  %v940 = vpop.permute.xlu0 %939
  %941 = vrot.lane.b32.xlu0 %v245, 64
  %v942 = vpop.permute.xlu0 %941
  %v946 = vsel %vm342, %v936, 0
  %v949 = vsel %vm342, %v938, 0
  %951 = vmatprep.subr.mxu0 0.0
  %952 = vmatpush1.msra.mxu0 0.0
  %953 = vmatprep.subr.mxu0 0.0
  %954 = vmatpush1.msra.mxu0 0.0
  %955 = vmatprep.subr.mxu0 0.0
  %956 = vmatpush1.msra.mxu0 0.0
  %957 = vmatprep.subr.mxu0 0.0
  %958 = vmatpush1.msra.mxu0 0.0
  %959 = vmatprep.subr.mxu0 0.0
  %960 = vmatpush1.msra.mxu0 0.0
  %961 = vmatprep.subr.mxu0 0.0
  %962 = vmatpush1.msra.mxu0 0.0
  %963 = vmatprep.subr.mxu0 0.0
  %964 = vmatpush1.msra.mxu0 0.0
  %965 = vmatprep.subr.mxu0 0.0
  %966 = vmatpush1.msra.mxu0 0.0
  %967 = vmatprep.subr.mxu0 0.0
  %968 = vmatpush1.msra.mxu0 0.0
  %969 = vmatprep.subr.mxu0 0.0
  %970 = vmatpush1.msra.mxu0 0.0
  %971 = vmatprep.subr.mxu0 0.0
  %972 = vmatpush1.msra.mxu0 0.0
  %973 = vmatprep.subr.mxu0 0.0
  %974 = vmatpush1.msra.mxu0 0.0
  %975 = vmatprep.subr.mxu0 0.0
  %976 = vmatpush1.msra.mxu0 0.0
  %977 = vmatprep.subr.mxu0 0.0
  %978 = vmatpush1.msra.mxu0 0.0
  %979 = vmatprep.subr.mxu0 0.0
  %980 = vmatpush1.msra.mxu0 %v942
  %981 = vmatprep.subr.mxu0 0.0
  %982 = vmatpush1.msra.mxu0 %v940
  %983 = vmatprep.subr.mxu0 0.0
  %984 = vmatpush2.msra.mxu0 0.0
  %985 = vmatprep.subr.mxu0 0.0
  %986 = vmatpush2.msra.mxu0 0.0
  %987 = vmatprep.subr.mxu0 0.0
  %988 = vmatpush2.msra.mxu0 0.0
  %989 = vmatprep.subr.mxu0 0.0
  %990 = vmatpush2.msra.mxu0 0.0
  %991 = vmatprep.subr.mxu0 0.0
  %992 = vmatpush2.msra.mxu0 0.0
  %993 = vmatprep.subr.mxu0 0.0
  %994 = vmatpush2.msra.mxu0 0.0
  %995 = vmatprep.subr.mxu0 0.0
  %996 = vmatpush2.msra.mxu0 0.0
  %997 = vmatprep.subr.mxu0 0.0
  %998 = vmatpush2.msra.mxu0 0.0
  %999 = vmatprep.subr.mxu0 0.0
  %1000 = vmatpush2.msra.mxu0 0.0
  %1001 = vmatprep.subr.mxu0 0.0
  %1002 = vmatpush2.msra.mxu0 0.0
  %1003 = vmatprep.subr.mxu0 0.0
  %1004 = vmatpush2.msra.mxu0 0.0
  %1005 = vmatprep.subr.mxu0 0.0
  %1006 = vmatpush2.msra.mxu0 0.0
  %1007 = vmatprep.subr.mxu0 0.0
  %1008 = vmatpush2.msra.mxu0 0.0
  %1009 = vmatprep.subr.mxu0 0.0
  %1010 = vmatpush2.msra.mxu0 0.0
  %1011 = vmatprep.subr.mxu0 0.0
  %1012 = vmatpush2.msra.mxu0 0.0
  %1013 = vmatprep.subr.mxu0 0.0
  %1014 = vmatpush2.msra.mxu0 0.0
  %1015 = vmatprep.mubr.f32.mxu0 0.0
  %1016 = vmatmul.mubr.f32.gmra.mxu0 %v946
  %v1017 = vpop.f32.mrf.mxu0
  %v1018 = vadd.f32 0.0, %v1017
  %v1019 = vpop.f32.mrf.mxu0
  %1020 = vmatprep.mubr.f32.mxu0 0.0
  %1021 = vmatmul.mubr.f32.gmra.mxu0 %v949
  %v1022 = vpop.f32.mrf.mxu0
  %v1023 = vadd.f32 0.0, %v1022
  %v1024 = vpop.f32.mrf.mxu0
  %1025 = vdwg.mxu0
  %v1026 = vld [vmem:[%s3 + $0x40] sm:$0xff]
  %v1027 = vld [vmem:[%s3 + $0x48] sm:$0xff]
  %v1028 = vld [vmem:[%s3 + $0x50] sm:$0xff]
  %v1029 = vld [vmem:[%s3 + $0x58] sm:$0xff]
  %v1031 = vsel %vm250, %v1018, 0
  %v1034 = vsel %vm250, %v1023, 0
  %1036 = vmatprep.subr.mxu0 0.0
  %1037 = vmatpush1.msra.mxu0 0.0
  %1038 = vmatprep.subr.mxu0 0.0
  %1039 = vmatpush1.msra.mxu0 0.0
  %1040 = vmatprep.subr.mxu0 0.0
  %1041 = vmatpush1.msra.mxu0 0.0
  %1042 = vmatprep.subr.mxu0 0.0
  %1043 = vmatpush1.msra.mxu0 0.0
  %1044 = vmatprep.subr.mxu0 0.0
  %1045 = vmatpush1.msra.mxu0 0.0
  %1046 = vmatprep.subr.mxu0 0.0
  %1047 = vmatpush1.msra.mxu0 0.0
  %1048 = vmatprep.subr.mxu0 0.0
  %1049 = vmatpush1.msra.mxu0 0.0
  %1050 = vmatprep.subr.mxu0 0.0
  %1051 = vmatpush1.msra.mxu0 0.0
  %1052 = vmatprep.subr.mxu0 0.0
  %1053 = vmatpush1.msra.mxu0 0.0
  %1054 = vmatprep.subr.mxu0 0.0
  %1055 = vmatpush1.msra.mxu0 0.0
  %1056 = vmatprep.subr.mxu0 0.0
  %1057 = vmatpush1.msra.mxu0 0.0
  %1058 = vmatprep.subr.mxu0 0.0
  %1059 = vmatpush1.msra.mxu0 0.0
  %1060 = vmatprep.subr.mxu0 0.0
  %1061 = vmatpush1.msra.mxu0 %v1029
  %1062 = vmatprep.subr.mxu0 0.0
  %1063 = vmatpush1.msra.mxu0 %v1028
  %1064 = vmatprep.subr.mxu0 0.0
  %1065 = vmatpush1.msra.mxu0 %v1027
  %1066 = vmatprep.subr.mxu0 0.0
  %1067 = vmatpush1.msra.mxu0 %v1026
  %1068 = vmatprep.subr.mxu0 0.0
  %1069 = vmatpush2.msra.mxu0 0.0
  %1070 = vmatprep.subr.mxu0 0.0
  %1071 = vmatpush2.msra.mxu0 0.0
  %1072 = vmatprep.subr.mxu0 0.0
  %1073 = vmatpush2.msra.mxu0 0.0
  %1074 = vmatprep.subr.mxu0 0.0
  %1075 = vmatpush2.msra.mxu0 0.0
  %1076 = vmatprep.subr.mxu0 0.0
  %1077 = vmatpush2.msra.mxu0 0.0
  %1078 = vmatprep.subr.mxu0 0.0
  %1079 = vmatpush2.msra.mxu0 0.0
  %1080 = vmatprep.subr.mxu0 0.0
  %1081 = vmatpush2.msra.mxu0 0.0
  %1082 = vmatprep.subr.mxu0 0.0
  %1083 = vmatpush2.msra.mxu0 0.0
  %1084 = vmatprep.subr.mxu0 0.0
  %1085 = vmatpush2.msra.mxu0 0.0
  %1086 = vmatprep.subr.mxu0 0.0
  %1087 = vmatpush2.msra.mxu0 0.0
  %1088 = vmatprep.subr.mxu0 0.0
  %1089 = vmatpush2.msra.mxu0 0.0
  %1090 = vmatprep.subr.mxu0 0.0
  %1091 = vmatpush2.msra.mxu0 0.0
  %1092 = vmatprep.subr.mxu0 0.0
  %1093 = vmatpush2.msra.mxu0 0.0
  %1094 = vmatprep.subr.mxu0 0.0
  %1095 = vmatpush2.msra.mxu0 0.0
  %1096 = vmatprep.subr.mxu0 0.0
  %1097 = vmatpush2.msra.mxu0 0.0
  %1098 = vmatprep.subr.mxu0 0.0
  %1099 = vmatpush2.msra.mxu0 0.0
  %1100 = vmatprep.mubr.f32.mxu0 0.0
  %1101 = vmatmul.mubr.f32.gmra.mxu0 %v1031
  %v1102 = vpop.f32.mrf.mxu0
  %v1103 = vadd.f32 0.0, %v1102
  %v1104 = vpop.f32.mrf.mxu0
  %1105 = vmatprep.mubr.f32.mxu0 0.0
  %1106 = vmatmul.mubr.f32.gmra.mxu0 %v1034
  %v1107 = vpop.f32.mrf.mxu0
  %v1108 = vadd.f32 0.0, %v1107
  %v1109 = vpop.f32.mrf.mxu0
  %1110 = vdwg.mxu0
  %v1111 = vadd.f32 %v814, %v1103
  %v1112 = vadd.f32 %v819, %v1108
  %1113 = vrot.lane.b32.xlu0 %v163, 32
  %v1114 = vpop.permute.xlu0 %1113
  %1115 = vrot.lane.b32.xlu0 %v169, 32
  %v1116 = vpop.permute.xlu0 %1115
  %1117 = vrot.lane.b32.xlu0 %v165, 32
  %v1118 = vpop.permute.xlu0 %1117
  %1119 = vrot.lane.b32.xlu0 %v171, 32
  %v1120 = vpop.permute.xlu0 %1119
  %v1121 = vsel %vm250, %v1114, 0
  %v1123 = vsel %vm250, %v1116, 0
  %v1125 = vsel %vm250, %v1118, 0
  %v1127 = vsel %vm250, %v1120, 0
  %1129 = vmatprep.subr.mxu0 0.0
  %1130 = vmatpush1.xpose.msra.mxu0 0.0
  %1131 = vmatprep.subr.mxu0 0.0
  %1132 = vmatpush1.xpose.msra.mxu0 0.0
  %1133 = vmatprep.subr.mxu0 0.0
  %1134 = vmatpush1.xpose.msra.mxu0 0.0
  %1135 = vmatprep.subr.mxu0 0.0
  %1136 = vmatpush1.xpose.msra.mxu0 0.0
  %1137 = vmatprep.subr.mxu0 0.0
  %1138 = vmatpush1.xpose.msra.mxu0 0.0
  %1139 = vmatprep.subr.mxu0 0.0
  %1140 = vmatpush1.xpose.msra.mxu0 0.0
  %1141 = vmatprep.subr.mxu0 0.0
  %1142 = vmatpush1.xpose.msra.mxu0 0.0
  %1143 = vmatprep.subr.mxu0 0.0
  %1144 = vmatpush1.xpose.msra.mxu0 0.0
  %1145 = vmatprep.subr.mxu0 0.0
  %1146 = vmatpush1.xpose.msra.mxu0 0.0
  %1147 = vmatprep.subr.mxu0 0.0
  %1148 = vmatpush1.xpose.msra.mxu0 0.0
  %1149 = vmatprep.subr.mxu0 0.0
  %1150 = vmatpush1.xpose.msra.mxu0 0.0
  %1151 = vmatprep.subr.mxu0 0.0
  %1152 = vmatpush1.xpose.msra.mxu0 0.0
  %1153 = vmatprep.subr.mxu0 0.0
  %1154 = vmatpush1.xpose.msra.mxu0 0.0
  %1155 = vmatprep.subr.mxu0 0.0
  %1156 = vmatpush1.xpose.msra.mxu0 0.0
  %1157 = vmatprep.subr.mxu0 0.0
  %1158 = vmatpush1.xpose.msra.mxu0 %v1127
  %1159 = vmatprep.subr.mxu0 0.0
  %1160 = vmatpush1.xpose.msra.mxu0 %v1125
  %1161 = vmatprep.subr.mxu0 0.0
  %1162 = vmatpush2.xpose.msra.mxu0 0.0
  %1163 = vmatprep.subr.mxu0 0.0
  %1164 = vmatpush2.xpose.msra.mxu0 0.0
  %1165 = vmatprep.subr.mxu0 0.0
  %1166 = vmatpush2.xpose.msra.mxu0 0.0
  %1167 = vmatprep.subr.mxu0 0.0
  %1168 = vmatpush2.xpose.msra.mxu0 0.0
  %1169 = vmatprep.subr.mxu0 0.0
  %1170 = vmatpush2.xpose.msra.mxu0 0.0
  %1171 = vmatprep.subr.mxu0 0.0
  %1172 = vmatpush2.xpose.msra.mxu0 0.0
  %1173 = vmatprep.subr.mxu0 0.0
  %1174 = vmatpush2.xpose.msra.mxu0 0.0
  %1175 = vmatprep.subr.mxu0 0.0
  %1176 = vmatpush2.xpose.msra.mxu0 0.0
  %1177 = vmatprep.subr.mxu0 0.0
  %1178 = vmatpush2.xpose.msra.mxu0 0.0
  %1179 = vmatprep.subr.mxu0 0.0
  %1180 = vmatpush2.xpose.msra.mxu0 0.0
  %1181 = vmatprep.subr.mxu0 0.0
  %1182 = vmatpush2.xpose.msra.mxu0 0.0
  %1183 = vmatprep.subr.mxu0 0.0
  %1184 = vmatpush2.xpose.msra.mxu0 0.0
  %1185 = vmatprep.subr.mxu0 0.0
  %1186 = vmatpush2.xpose.msra.mxu0 0.0
  %1187 = vmatprep.subr.mxu0 0.0
  %1188 = vmatpush2.xpose.msra.mxu0 0.0
  %1189 = vmatprep.subr.mxu0 0.0
  %1190 = vmatpush2.xpose.msra.mxu0 0.0
  %1191 = vmatprep.subr.mxu0 0.0
  %1192 = vmatpush2.xpose.msra.mxu0 0.0
  %1193 = vmatprep.mubr.f32.mxu0 0.0
  %1194 = vmatmul.mubr.f32.gmra.mxu0 %v1121
  %v1195 = vpop.f32.mrf.mxu0
  %v1196 = vadd.f32 0.0, %v1195
  %v1197 = vpop.f32.mrf.mxu0
  %1198 = vmatprep.mubr.f32.mxu0 0.0
  %1199 = vmatmul.mubr.f32.gmra.mxu0 %v1123
  %v1200 = vpop.f32.mrf.mxu0
  %v1201 = vadd.f32 0.0, %v1200
  %v1202 = vpop.f32.mrf.mxu0
  %1203 = vdwg.mxu0
  %v1204 = vmul.f32 %v1196, 0.17677669
  %v1205 = vmul.f32 %v1201, 0.17677669
  %v1206 = vadd.f32 %v1204, %v248
  %v1207 = vadd.f32 %v1205, %v249
  %v1208 = vsel %vm342, %v1206, -inf
  %1209 = vmax.xlane.f32.xlu0 %v1208
  %v1210 = vpop.xlane.xlu0 %1209
  %v1211 = vsel %vm342, %v1207, -inf
  %1212 = vmax.xlane.f32.xlu0 %v1211
  %v1213 = vpop.xlane.xlu0 %1212
  %v1214 = vsub.f32 %v1206, %v1210
  %v1215 = vsub.f32 %v1207, %v1213
  %v1216 = vmul.f32 %v1214, 1.442695
  %v1217 = vpow.pop %v1216
  %v1218 = vmul.f32 %v1215, 1.442695
  %v1219 = vpow.pop %v1218
  %v1220 = vsel %vm342, %v1217, 0.0
  %1221 = vadd.xlane.f32.xlu0 %v1220
  %v1222 = vpop.xlane.xlu0 %1221
  %v1223 = vsel %vm342, %v1219, 0.0
  %1224 = vadd.xlane.f32.xlu0 %v1223
  %v1225 = vpop.xlane.xlu0 %1224
  %v1226 = vrcp.pop %v1222
  %v1227 = vmul.f32 %v1217, %v1226
  %v1228 = vrcp.pop %v1225
  %v1229 = vmul.f32 %v1219, %v1228
  %1230 = vrot.lane.b32.xlu0 %v240, 32
  %v1231 = vpop.permute.xlu0 %1230
  %1232 = vrot.lane.b32.xlu0 %v245, 32
  %v1233 = vpop.permute.xlu0 %1232
  %v1237 = vsel %vm342, %v1227, 0
  %v1240 = vsel %vm342, %v1229, 0
  %1242 = vmatprep.subr.mxu0 0.0
  %1243 = vmatpush1.msra.mxu0 0.0
  %1244 = vmatprep.subr.mxu0 0.0
  %1245 = vmatpush1.msra.mxu0 0.0
  %1246 = vmatprep.subr.mxu0 0.0
  %1247 = vmatpush1.msra.mxu0 0.0
  %1248 = vmatprep.subr.mxu0 0.0
  %1249 = vmatpush1.msra.mxu0 0.0
  %1250 = vmatprep.subr.mxu0 0.0
  %1251 = vmatpush1.msra.mxu0 0.0
  %1252 = vmatprep.subr.mxu0 0.0
  %1253 = vmatpush1.msra.mxu0 0.0
  %1254 = vmatprep.subr.mxu0 0.0
  %1255 = vmatpush1.msra.mxu0 0.0
  %1256 = vmatprep.subr.mxu0 0.0
  %1257 = vmatpush1.msra.mxu0 0.0
  %1258 = vmatprep.subr.mxu0 0.0
  %1259 = vmatpush1.msra.mxu0 0.0
  %1260 = vmatprep.subr.mxu0 0.0
  %1261 = vmatpush1.msra.mxu0 0.0
  %1262 = vmatprep.subr.mxu0 0.0
  %1263 = vmatpush1.msra.mxu0 0.0
  %1264 = vmatprep.subr.mxu0 0.0
  %1265 = vmatpush1.msra.mxu0 0.0
  %1266 = vmatprep.subr.mxu0 0.0
  %1267 = vmatpush1.msra.mxu0 0.0
  %1268 = vmatprep.subr.mxu0 0.0
  %1269 = vmatpush1.msra.mxu0 0.0
  %1270 = vmatprep.subr.mxu0 0.0
  %1271 = vmatpush1.msra.mxu0 %v1233
  %1272 = vmatprep.subr.mxu0 0.0
  %1273 = vmatpush1.msra.mxu0 %v1231
  %1274 = vmatprep.subr.mxu0 0.0
  %1275 = vmatpush2.msra.mxu0 0.0
  %1276 = vmatprep.subr.mxu0 0.0
  %1277 = vmatpush2.msra.mxu0 0.0
  %1278 = vmatprep.subr.mxu0 0.0
  %1279 = vmatpush2.msra.mxu0 0.0
  %1280 = vmatprep.subr.mxu0 0.0
  %1281 = vmatpush2.msra.mxu0 0.0
  %1282 = vmatprep.subr.mxu0 0.0
  %1283 = vmatpush2.msra.mxu0 0.0
  %1284 = vmatprep.subr.mxu0 0.0
  %1285 = vmatpush2.msra.mxu0 0.0
  %1286 = vmatprep.subr.mxu0 0.0
  %1287 = vmatpush2.msra.mxu0 0.0
  %1288 = vmatprep.subr.mxu0 0.0
  %1289 = vmatpush2.msra.mxu0 0.0
  %1290 = vmatprep.subr.mxu0 0.0
  %1291 = vmatpush2.msra.mxu0 0.0
  %1292 = vmatprep.subr.mxu0 0.0
  %1293 = vmatpush2.msra.mxu0 0.0
  %1294 = vmatprep.subr.mxu0 0.0
  %1295 = vmatpush2.msra.mxu0 0.0
  %1296 = vmatprep.subr.mxu0 0.0
  %1297 = vmatpush2.msra.mxu0 0.0
  %1298 = vmatprep.subr.mxu0 0.0
  %1299 = vmatpush2.msra.mxu0 0.0
  %1300 = vmatprep.subr.mxu0 0.0
  %1301 = vmatpush2.msra.mxu0 0.0
  %1302 = vmatprep.subr.mxu0 0.0
  %1303 = vmatpush2.msra.mxu0 0.0
  %1304 = vmatprep.subr.mxu0 0.0
  %1305 = vmatpush2.msra.mxu0 0.0
  %1306 = vmatprep.mubr.f32.mxu0 0.0
  %1307 = vmatmul.mubr.f32.gmra.mxu0 %v1237
  %v1308 = vpop.f32.mrf.mxu0
  %v1309 = vadd.f32 0.0, %v1308
  %v1310 = vpop.f32.mrf.mxu0
  %1311 = vmatprep.mubr.f32.mxu0 0.0
  %1312 = vmatmul.mubr.f32.gmra.mxu0 %v1240
  %v1313 = vpop.f32.mrf.mxu0
  %v1314 = vadd.f32 0.0, %v1313
  %v1315 = vpop.f32.mrf.mxu0
  %1316 = vdwg.mxu0
  %v1317 = vld [vmem:[%s3 + $0x60] sm:$0xff]
  %v1318 = vld [vmem:[%s3 + $0x68] sm:$0xff]
  %v1319 = vld [vmem:[%s3 + $0x70] sm:$0xff]
  %v1320 = vld [vmem:[%s3 + $0x78] sm:$0xff]
  %v1322 = vsel %vm250, %v1309, 0
  %v1325 = vsel %vm250, %v1314, 0
  %1327 = vmatprep.subr.mxu0 0.0
  %1328 = vmatpush1.msra.mxu0 0.0
  %1329 = vmatprep.subr.mxu0 0.0
  %1330 = vmatpush1.msra.mxu0 0.0
  %1331 = vmatprep.subr.mxu0 0.0
  %1332 = vmatpush1.msra.mxu0 0.0
  %1333 = vmatprep.subr.mxu0 0.0
  %1334 = vmatpush1.msra.mxu0 0.0
  %1335 = vmatprep.subr.mxu0 0.0
  %1336 = vmatpush1.msra.mxu0 0.0
  %1337 = vmatprep.subr.mxu0 0.0
  %1338 = vmatpush1.msra.mxu0 0.0
  %1339 = vmatprep.subr.mxu0 0.0
  %1340 = vmatpush1.msra.mxu0 0.0
  %1341 = vmatprep.subr.mxu0 0.0
  %1342 = vmatpush1.msra.mxu0 0.0
  %1343 = vmatprep.subr.mxu0 0.0
  %1344 = vmatpush1.msra.mxu0 0.0
  %1345 = vmatprep.subr.mxu0 0.0
  %1346 = vmatpush1.msra.mxu0 0.0
  %1347 = vmatprep.subr.mxu0 0.0
  %1348 = vmatpush1.msra.mxu0 0.0
  %1349 = vmatprep.subr.mxu0 0.0
  %1350 = vmatpush1.msra.mxu0 0.0
  %1351 = vmatprep.subr.mxu0 0.0
  %1352 = vmatpush1.msra.mxu0 %v1320
  %1353 = vmatprep.subr.mxu0 0.0
  %1354 = vmatpush1.msra.mxu0 %v1319
  %1355 = vmatprep.subr.mxu0 0.0
  %1356 = vmatpush1.msra.mxu0 %v1318
  %1357 = vmatprep.subr.mxu0 0.0
  %1358 = vmatpush1.msra.mxu0 %v1317
  %1359 = vmatprep.subr.mxu0 0.0
  %1360 = vmatpush2.msra.mxu0 0.0
  %1361 = vmatprep.subr.mxu0 0.0
  %1362 = vmatpush2.msra.mxu0 0.0
  %1363 = vmatprep.subr.mxu0 0.0
  %1364 = vmatpush2.msra.mxu0 0.0
  %1365 = vmatprep.subr.mxu0 0.0
  %1366 = vmatpush2.msra.mxu0 0.0
  %1367 = vmatprep.subr.mxu0 0.0
  %1368 = vmatpush2.msra.mxu0 0.0
  %1369 = vmatprep.subr.mxu0 0.0
  %1370 = vmatpush2.msra.mxu0 0.0
  %1371 = vmatprep.subr.mxu0 0.0
  %1372 = vmatpush2.msra.mxu0 0.0
  %1373 = vmatprep.subr.mxu0 0.0
  %1374 = vmatpush2.msra.mxu0 0.0
  %1375 = vmatprep.subr.mxu0 0.0
  %1376 = vmatpush2.msra.mxu0 0.0
  %1377 = vmatprep.subr.mxu0 0.0
  %1378 = vmatpush2.msra.mxu0 0.0
  %1379 = vmatprep.subr.mxu0 0.0
  %1380 = vmatpush2.msra.mxu0 0.0
  %1381 = vmatprep.subr.mxu0 0.0
  %1382 = vmatpush2.msra.mxu0 0.0
  %1383 = vmatprep.subr.mxu0 0.0
  %1384 = vmatpush2.msra.mxu0 0.0
  %1385 = vmatprep.subr.mxu0 0.0
  %1386 = vmatpush2.msra.mxu0 0.0
  %1387 = vmatprep.subr.mxu0 0.0
  %1388 = vmatpush2.msra.mxu0 0.0
  %1389 = vmatprep.subr.mxu0 0.0
  %1390 = vmatpush2.msra.mxu0 0.0
  %1391 = vmatprep.mubr.f32.mxu0 0.0
  %1392 = vmatmul.mubr.f32.gmra.mxu0 %v1322
  %v1393 = vpop.f32.mrf.mxu0
  %v1394 = vadd.f32 0.0, %v1393
  %v1395 = vpop.f32.mrf.mxu0
  %1396 = vmatprep.mubr.f32.mxu0 0.0
  %1397 = vmatmul.mubr.f32.gmra.mxu0 %v1325
  %v1398 = vpop.f32.mrf.mxu0
  %v1399 = vadd.f32 0.0, %v1398
  %v1400 = vpop.f32.mrf.mxu0
  %1401 = vdwg.mxu0
  %v1402 = vadd.f32 %v1111, %v1394
  %v1403 = vadd.f32 %v1112, %v1399
  %v1404 = vld [vmem:[%s4] sm:$0x1]
  %v1406 = vlaneseq
  %v1407 = vshrl.u32 %v1406, 7
  %v1408 = vsub.s32 0, %v1407
  %v1409 = vrot.slane %v1404, %v1408
  %v1411 = vadd.f32 %v1402, %v1409
  %v1412 = vadd.f32 %v1403, %v1409
  %v1413 = vadd.f32 %v29, %v1411
  %v1414 = vadd.f32 %v30, %v1412
  %v1415 = vld [vmem:[%s6] sm:$0x1]
  %v1416 = vld [vmem:[%s7] sm:$0x1]
  %1417 = vadd.xlane.f32.xlu0 %v1413
  %v1418 = vpop.xlane.xlu0 %1417
  %1419 = vadd.xlane.f32.xlu0 %v1414
  %v1420 = vpop.xlane.xlu0 %1419
  %v1421 = vrcp.pop 128.0
  %v1422 = vmul.f32 %v1418, %v1421
  %v1423 = vmul.f32 %v1420, %v1421
  %v1424 = vsub.f32 %v1413, %v1422
  %v1425 = vsub.f32 %v1414, %v1423
  %v1426 = vmul.f32 %v1424, %v1424
  %v1427 = vmul.f32 %v1425, %v1425
  %1428 = vadd.xlane.f32.xlu0 %v1426
  %v1429 = vpop.xlane.xlu0 %1428
  %1430 = vadd.xlane.f32.xlu0 %v1427
  %v1431 = vpop.xlane.xlu0 %1430
  %v1432 = vmul.f32 %v1429, %v1421
  %v1433 = vmul.f32 %v1431, %v1421
  %v1434 = vadd.f32 %v1432, 1e-05
  %v1435 = vadd.f32 %v1433, 1e-05
  %v1436 = vrsqrt.pop %v1434
  %v1437 = vrsqrt.pop %v1435
  %v1438 = vmul.f32 %v1424, %v1436
  %v1439 = vmul.f32 %v1425, %v1437
  %v1441 = vlaneseq
  %v1442 = vshrl.u32 %v1441, 7
  %v1443 = vsub.s32 0, %v1442
  %v1444 = vrot.slane %v1415, %v1443
  %v1446 = vmul.f32 %v1438, %v1444
  %v1447 = vmul.f32 %v1439, %v1444
  %v1449 = vlaneseq
  %v1450 = vshrl.u32 %v1449, 7
  %v1451 = vsub.s32 0, %v1450
  %v1452 = vrot.slane %v1416, %v1451
  %v1454 = vadd.f32 %v1446, %v1452
  %v1455 = vadd.f32 %v1447, %v1452
  %1456 = vst [vmem:[%s8] sm:$0xff] %v1454
  %1457 = vst [vmem:[%s8 + $0x8] sm:$0xff] %v1455
  // Predicated region
  $region34: #{transformer_lm_forward.9} parent=0 // pred_check
    _
  $region35: #{transformer_lm_forward.9} parent=0 // pred_check_branch
    %1459 = sbr.rel (0) target = $region37
  $region36: #{transformer_lm_forward.9} parent=0 // pred_region
    _
  $region37: #{transformer_lm_forward.9} parent=0 // pred_fallthru
    _
  // Predicated region
  $region38: #{transformer_lm_forward.9} parent=0 // pred_check
    _
  $region39: #{transformer_lm_forward.9} parent=0 // pred_check_branch
    %1461 = sbr.rel (0) target = $region41
  $region40: #{transformer_lm_forward.9} parent=0 // pred_region
    _
  $region41: #{transformer_lm_forward.9} parent=0 // pred_fallthru
    _

</llo_original>
